<compile_context>
chip_gen: v5e
topology: v5e:2x2
jax: 0.10.0
libtpu: 0.0.40
codegen_flags: <defaults>
</compile_context>

<pallas_src>
import functools

import jax
import jax.numpy as jnp
from jax import lax
from jax.experimental import pallas as pl
from jax.experimental.pallas import tpu as pltpu

# ----------------------------- configuration -------------------------------
DIM = 32          # D
DEPTH = 2         # number of (attn, ff) layers (module default is 6; small here)
DIM_HEAD = 8
HEADS = 4
NUM_LATENTS = 8   # n2
FF_MULT = 4
EPS = 1e-5


def _layernorm(x, g, b):
    # x: (rows, D); g, b: (1, D)
    mu = jnp.mean(x, axis=-1, keepdims=True)
    var = jnp.mean((x - mu) ** 2, axis=-1, keepdims=True)
    return (x - mu) * lax.rsqrt(var + EPS) * g + b


def _gelu_exact(x):
    # torch.nn.GELU() default = exact erf formulation
    return 0.5 * x * (1.0 + lax.erf(x / jnp.sqrt(2.0).astype(x.dtype)))


# ------------------------------- kernel ------------------------------------
def resampler_kernel(
    x_ref,        # (TB*n1, D)    image features for TB (b,t) slices
    lat_ref,      # (n2, D)       learned latents (shared across b, t)
    nm_g_ref,     # (depth, 1, D) norm_media gamma
    nm_b_ref,     # (depth, 1, D) norm_media beta
    nl_g_ref,     # (depth, 1, D) norm_latents gamma
    nl_b_ref,     # (depth, 1, D) norm_latents beta
    wqkv_ref,     # (depth, D, 3*inner)  fused [wq | wkv]
    wkv_ref,      # (depth, D, 2*inner)
    wo_ref,       # (depth, inner, D)
    ffg_ref,      # (depth, 1, D) ff layernorm gamma
    ffb_ref,      # (depth, 1, D) ff layernorm beta
    w1_ref,       # (depth, D, ff_mult*D)
    w2_ref,       # (depth, ff_mult*D, D)
    fng_ref,      # (1, D) final norm gamma
    fnb_ref,      # (1, D) final norm beta
    out_ref,      # (TB*n2, D)
    *,
    depth: int,
    heads: int,
    dim_head: int,
    tb: int,
    n1: int,
    n2: int,
):
    inner = heads * dim_head
    scale = dim_head ** -0.5

    x2 = x_ref[...]                                # (tb*n1, D)
    lat = jnp.tile(lat_ref[...], (tb, 1))          # (tb*n2, D)

    # depth=2 here: static unroll is fine.  For depth=6+ switch to a depth
    # grid axis / lax.fori_loop(unroll=True) to bound vreg live ranges.
    for l in range(depth):
        # ------------------ PerceiverAttention ------------------
        xm = _layernorm(x2, nm_g_ref[l], nm_b_ref[l])      # (tb*n1, D)
        ln = _layernorm(lat, nl_g_ref[l], nl_b_ref[l])     # (tb*n2, D)

        # Fused latent-side projection: [q | k_lat | v_lat]
        qkv = jnp.dot(ln, wqkv_ref[l],
                      preferred_element_type=jnp.float32)  # (tb*n2, 3*inner)
        # Media-side projection: [k_x | v_x]
        kvx = jnp.dot(xm, wkv_ref[l],
                      preferred_element_type=jnp.float32)  # (tb*n1, 2*inner)

        q3 = (qkv[:, :inner] * scale).reshape(tb, n2, inner)
        kl3 = qkv[:, inner:2 * inner].reshape(tb, n2, inner)
        vl3 = qkv[:, 2 * inner:].reshape(tb, n2, inner)
        kx3 = kvx[:, :inner].reshape(tb, n1, inner)
        vx3 = kvx[:, inner:].reshape(tb, n1, inner)

        k3 = jnp.concatenate([kx3, kl3], axis=1)           # (tb, n1+n2, inner)
        v3 = jnp.concatenate([vx3, vl3], axis=1)           # (tb, n1+n2, inner)

        wo_l = wo_ref[l]                                   # (inner, D)

        # Residual is folded into the per-head output-projection accumulation,
        # so no head-output concatenate is needed.
        new_lat = lat
        for h in range(heads):
            sl = slice(h * dim_head, (h + 1) * dim_head)
            qh = q3[:, :, sl]                              # (tb, n2, dh)
            kh = k3[:, :, sl]                              # (tb, m,  dh)
            vh = v3[:, :, sl]                              # (tb, m,  dh)
            sim = jnp.einsum('bqd,bkd->bqk', qh, kh,
                             preferred_element_type=jnp.float32)   # (tb,n2,m)
            p = jnp.exp(sim - jnp.max(sim, axis=-1, keepdims=True))
            attn = p * pl.reciprocal(jnp.sum(p, axis=-1, keepdims=True),
                                     approx=True)
            oh = jnp.einsum('bqk,bkd->bqd', attn, vh,
                            preferred_element_type=jnp.float32)    # (tb,n2,dh)
            new_lat = new_lat + jnp.dot(
                oh.reshape(tb * n2, dim_head), wo_l[sl, :],
                preferred_element_type=jnp.float32)
        lat = new_lat

        # ---------------------- FeedForward ----------------------
        hdn = _layernorm(lat, ffg_ref[l], ffb_ref[l])
        hdn = jnp.dot(hdn, w1_ref[l],
                      preferred_element_type=jnp.float32)  # (tb*n2, ff)
        hdn = _gelu_exact(hdn)
        lat = lat + jnp.dot(hdn, w2_ref[l],
                            preferred_element_type=jnp.float32)

    out_ref[...] = _layernorm(lat, fng_ref[...], fnb_ref[...])


# ------------------------------ wrapper -------------------------------------
def _full_spec(shape):
    n = len(shape)
    return pl.BlockSpec(shape, lambda i, _n=n: (0,) * _n)


def _choose_tb(bt, target=32):
    """Largest divisor of bt <= target; keep >=2 grid steps when possible
    (so both v7x TensorCores get work)."""
    divs = [d for d in range(1, bt + 1) if bt % d == 0 and d <= target]
    tb = max(divs)
    if bt // tb < 2:
        smaller = [d for d in divs if bt // d >= 2]
        if smaller:
            tb = max(smaller)
    return tb


def perceiver_resampler(x, params, *, target_tb=32):
    """x: (B, T, F, v, D) float32  ->  (B, T, num_latents, D) float32."""
    B, T, F, v, D = x.shape
    n1 = F * v
    n2 = params["latents"].shape[0]
    bt = B * T
    tb = _choose_tb(bt, target_tb)
    grid = (bt // tb,)

    # Flatten to a 2-D activation slab: rows = (b, t, token), lanes = D.
    x2 = x.reshape(bt * n1, D)

    # Fuse the latent-side q and kv projection weights once on the host.
    w_qkv = jnp.concatenate([params["wq"], params["wkv"]], axis=-1)

    weight_args = (
        params["latents"],
        params["nm_g"], params["nm_b"], params["nl_g"], params["nl_b"],
        w_qkv, params["wkv"], params["wo"],
        params["ffg"], params["ffb"], params["w1"], params["w2"],
        params["fng"], params["fnb"],
    )

    in_specs = [pl.BlockSpec((tb * n1, D), lambda i: (i, 0))]
    in_specs += [_full_spec(w.shape) for w in weight_args]

    kern = functools.partial(
        resampler_kernel, depth=DEPTH, heads=HEADS, dim_head=DIM_HEAD,
        tb=tb, n1=n1, n2=n2)

    inner = HEADS * DIM_HEAD
    ffd = FF_MULT * D
    m_rows = n1 + n2
    flops_slice = DEPTH * (
        2 * n2 * D * 3 * inner                 # fused q/kv projection
        + 2 * n1 * D * 2 * inner               # media kv projection
        + HEADS * (2 * n2 * m_rows * DIM_HEAD) * 2   # sim + attn@v
        + 2 * n2 * inner * D                   # output projection
        + 2 * (2 * n2 * D * ffd))              # feed-forward
    trans_slice = DEPTH * (HEADS * n2 * m_rows + n2 * ffd)
    bytes_accessed = (x2.size + bt * n2 * D) * 4 + sum(
        int(w.size) * 4 for w in weight_args)
    cost = pl.CostEstimate(flops=bt * flops_slice,
                           transcendentals=bt * trans_slice,
                           bytes_accessed=bytes_accessed)

    out = pl.pallas_call(
        kern,
        out_shape=jax.ShapeDtypeStruct((bt * n2, D), jnp.float32),
        grid=grid,
        in_specs=in_specs,
        out_specs=pl.BlockSpec((tb * n2, D), lambda i: (i, 0)),
        compiler_params=pltpu.CompilerParams(
            dimension_semantics=("parallel",)),
        cost_estimate=cost,
    )(x2, *weight_args)
    return out.reshape(B, T, n2, D)


# --------------------------- pure-JAX reference -----------------------------
def reference_resampler(x, params):
    B, T, F, v, D = x.shape
    n1 = F * v
    inner = HEADS * DIM_HEAD
    scale = DIM_HEAD ** -0.5
    xf = x.reshape(B, T, n1, D)
    lat = jnp.broadcast_to(params["latents"], (B, T, NUM_LATENTS, D))

    def ln(t, g, b):
        mu = jnp.mean(t, axis=-1, keepdims=True)
        var = jnp.mean((t - mu) ** 2, axis=-1, keepdims=True)
        return (t - mu) * lax.rsqrt(var + EPS) * g + b

    for l in range(DEPTH):
        xm = ln(xf, params["nm_g"][l], params["nm_b"][l])
        lt = ln(lat, params["nl_g"][l], params["nl_b"][l])
        q = jnp.einsum("btnd,de->btne", lt, params["wq"][l])
        kv_in = jnp.concatenate([xm, lt], axis=-2)
        kv = jnp.einsum("btmd,de->btme", kv_in, params["wkv"][l])
        k, vv = kv[..., :inner], kv[..., inner:]

        def split(t):
            b_, t_, n_, _ = t.shape
            return t.reshape(b_, t_, n_, HEADS, DIM_HEAD).transpose(0, 3, 1, 2, 4)

        qh, kh, vh = split(q) * scale, split(k), split(vv)
        sim = jnp.einsum("bhtid,bhtjd->bhtij", qh, kh)
        sim = sim - jnp.max(sim, axis=-1, keepdims=True)
        attn = jax.nn.softmax(sim, axis=-1)
        o = jnp.einsum("bhtij,bhtjd->bhtid", attn, vh)
        o = o.transpose(0, 2, 3, 1, 4).reshape(B, T, NUM_LATENTS, inner)
        lat = jnp.einsum("btne,ed->btnd", o, params["wo"][l]) + lat

        h = ln(lat, params["ffg"][l], params["ffb"][l])
        h = jnp.einsum("btnd,de->btne", h, params["w1"][l])
        h = _gelu_exact(h)
        lat = jnp.einsum("btne,ed->btnd", h, params["w2"][l]) + lat

    return ln(lat, params["fng"], params["fnb"])


# ------------------------------- params -------------------------------------
def make_params(key):
    inner = HEADS * DIM_HEAD
    ks = jax.random.split(key, 8)
    p = {
        "latents": jax.random.normal(ks[0], (NUM_LATENTS, DIM), jnp.float32),
        # LayerNorm params (torch init: gamma=1, beta=0)
        "nm_g": jnp.ones((DEPTH, 1, DIM), jnp.float32),
        "nm_b": jnp.zeros((DEPTH, 1, DIM), jnp.float32),
        "nl_g": jnp.ones((DEPTH, 1, DIM), jnp.float32),
        "nl_b": jnp.zeros((DEPTH, 1, DIM), jnp.float32),
        "ffg": jnp.ones((DEPTH, 1, DIM), jnp.float32),
        "ffb": jnp.zeros((DEPTH, 1, DIM), jnp.float32),
        "fng": jnp.ones((1, DIM), jnp.float32),
        "fnb": jnp.zeros((1, DIM), jnp.float32),
        # Linear weights stored as (in, out) so y = x @ W
        "wq": 0.05 * jax.random.normal(ks[1], (DEPTH, DIM, inner), jnp.float32),
        "wkv": 0.05 * jax.random.normal(ks[2], (DEPTH, DIM, 2 * inner), jnp.float32),
        "wo": 0.05 * jax.random.normal(ks[3], (DEPTH, inner, DIM), jnp.float32),
        "w1": 0.05 * jax.random.normal(ks[4], (DEPTH, DIM, FF_MULT * DIM), jnp.float32),
        "w2": 0.05 * jax.random.normal(ks[5], (DEPTH, FF_MULT * DIM, DIM), jnp.float32),
    }
    return p


# --------------------------------- main --------------------------------------
if __name__ == "__main__":
    key = jax.random.PRNGKey(0)
    k_x, k_p = jax.random.split(key)

    B, T, F, v = 2, 2, 2, 4          # n1 = F*v = 8; B*T = 4 -> TB=2, grid=(2,)
    x = jax.random.normal(k_x, (B, T, F, v, DIM), jnp.float32)
    params = make_params(k_p)

    out = perceiver_resampler(x, params)
    out = jax.block_until_ready(out)

    ref = jax.block_until_ready(reference_resampler(x, params))
    assert out.shape == (B, T, NUM_LATENTS, DIM)
    assert jnp.all(jnp.isfinite(out))
    # Default MXU precision (bf16 passes, f32 accumulation) + approx reciprocal
    # in the in-kernel softmax => slightly looser tolerance than bit-exact f32.
    assert jnp.allclose(out, ref, rtol=1e-2, atol=1e-2), (
        float(jnp.max(jnp.abs(out - ref))))

    print("KERNEL_OK")
</pallas_src>

<mosaic_0001>
module attributes {stable_mosaic.version = 11 : i64} {
  func.func @resampler_kernel(%arg0: i32, %arg1: memref<16x32xf32, #tpu.memory_space<vmem>>, %arg2: memref<8x32xf32, #tpu.memory_space<vmem>>, %arg3: memref<2x1x32xf32, #tpu.memory_space<vmem>>, %arg4: memref<2x1x32xf32, #tpu.memory_space<vmem>>, %arg5: memref<2x1x32xf32, #tpu.memory_space<vmem>>, %arg6: memref<2x1x32xf32, #tpu.memory_space<vmem>>, %arg7: memref<2x32x96xf32, #tpu.memory_space<vmem>>, %arg8: memref<2x32x64xf32, #tpu.memory_space<vmem>>, %arg9: memref<2x32x32xf32, #tpu.memory_space<vmem>>, %arg10: memref<2x1x32xf32, #tpu.memory_space<vmem>>, %arg11: memref<2x1x32xf32, #tpu.memory_space<vmem>>, %arg12: memref<2x32x128xf32, #tpu.memory_space<vmem>>, %arg13: memref<2x128x32xf32, #tpu.memory_space<vmem>>, %arg14: memref<1x32xf32, #tpu.memory_space<vmem>>, %arg15: memref<1x32xf32, #tpu.memory_space<vmem>>, %arg16: memref<16x32xf32, #tpu.memory_space<vmem>>) attributes {dimension_semantics = [#tpu.dimension_semantics<parallel>], iteration_bounds = array<i64: 2>, scalar_prefetch = 0 : i64, scratch_operands = 0 : i64, tpu.core_type = #tpu.core_type<tc>, window_params = [{transform_indices = @transform_0, window_bounds = array<i64: 16, 32>}, {pipeline_mode = #tpu.pipeline_mode<synchronous>, transform_indices = @transform_1, window_bounds = array<i64: 8, 32>}, {pipeline_mode = #tpu.pipeline_mode<synchronous>, transform_indices = @transform_2, window_bounds = array<i64: 2, 1, 32>}, {pipeline_mode = #tpu.pipeline_mode<synchronous>, transform_indices = @transform_3, window_bounds = array<i64: 2, 1, 32>}, {pipeline_mode = #tpu.pipeline_mode<synchronous>, transform_indices = @transform_4, window_bounds = array<i64: 2, 1, 32>}, {pipeline_mode = #tpu.pipeline_mode<synchronous>, transform_indices = @transform_5, window_bounds = array<i64: 2, 1, 32>}, {pipeline_mode = #tpu.pipeline_mode<synchronous>, transform_indices = @transform_6, window_bounds = array<i64: 2, 32, 96>}, {pipeline_mode = #tpu.pipeline_mode<synchronous>, transform_indices = @transform_7, window_bounds = array<i64: 2, 32, 64>}, {pipeline_mode = #tpu.pipeline_mode<synchronous>, transform_indices = @transform_8, window_bounds = array<i64: 2, 32, 32>}, {pipeline_mode = #tpu.pipeline_mode<synchronous>, transform_indices = @transform_9, window_bounds = array<i64: 2, 1, 32>}, {pipeline_mode = #tpu.pipeline_mode<synchronous>, transform_indices = @transform_10, window_bounds = array<i64: 2, 1, 32>}, {pipeline_mode = #tpu.pipeline_mode<synchronous>, transform_indices = @transform_11, window_bounds = array<i64: 2, 32, 128>}, {pipeline_mode = #tpu.pipeline_mode<synchronous>, transform_indices = @transform_12, window_bounds = array<i64: 2, 128, 32>}, {pipeline_mode = #tpu.pipeline_mode<synchronous>, transform_indices = @transform_13, window_bounds = array<i64: 1, 32>}, {pipeline_mode = #tpu.pipeline_mode<synchronous>, transform_indices = @transform_14, window_bounds = array<i64: 1, 32>}, {transform_indices = @transform_15, window_bounds = array<i64: 16, 32>}]} {
    %c0 = arith.constant 0 : index
    %c0_0 = arith.constant 0 : index
    %0 = vector.load %arg1[%c0, %c0_0] : memref<16x32xf32, #tpu.memory_space<vmem>>, vector<16x32xf32>
    %c0_1 = arith.constant 0 : index
    %c0_2 = arith.constant 0 : index
    %1 = vector.load %arg2[%c0_1, %c0_2] : memref<8x32xf32, #tpu.memory_space<vmem>>, vector<8x32xf32>
    %2 = tpu.concatenate %1, %1 in 0 : vector<8x32xf32>, vector<8x32xf32> -> vector<16x32xf32>
    %c0_3 = arith.constant 0 : index
    %c0_4 = arith.constant 0 : index
    %c0_5 = arith.constant 0 : index
    %3 = vector.load %arg3[%c0_3, %c0_4, %c0_5] : memref<2x1x32xf32, #tpu.memory_space<vmem>>, vector<1x1x32xf32>
    %4 = vector.shape_cast %3 : vector<1x1x32xf32> to vector<1x32xf32>
    %c0_6 = arith.constant 0 : index
    %c0_7 = arith.constant 0 : index
    %c0_8 = arith.constant 0 : index
    %5 = vector.load %arg4[%c0_6, %c0_7, %c0_8] : memref<2x1x32xf32, #tpu.memory_space<vmem>>, vector<1x1x32xf32>
    %6 = vector.shape_cast %5 : vector<1x1x32xf32> to vector<1x32xf32>
    %cst = arith.constant dense<0.000000e+00> : vector<16xf32>
    %7 = vector.multi_reduction <add>, %0, %cst [1] : vector<16x32xf32> to vector<16xf32>
    %8 = vector.shape_cast %7 : vector<16xf32> to vector<16x1xf32>
    %cst_9 = arith.constant 3.200000e+01 : f32
    %9 = vector.broadcast %cst_9 : f32 to vector<16x1xf32>
    %10 = arith.divf %8, %9 : vector<16x1xf32>
    %11 = vector.broadcast %10 : vector<16x1xf32> to vector<16x32xf32>
    %12 = arith.subf %0, %11 : vector<16x32xf32>
    %13 = arith.mulf %12, %12 : vector<16x32xf32>
    %cst_10 = arith.constant dense<0.000000e+00> : vector<16xf32>
    %14 = vector.multi_reduction <add>, %13, %cst_10 [1] : vector<16x32xf32> to vector<16xf32>
    %15 = vector.shape_cast %14 : vector<16xf32> to vector<16x1xf32>
    %cst_11 = arith.constant 3.200000e+01 : f32
    %16 = vector.broadcast %cst_11 : f32 to vector<16x1xf32>
    %17 = arith.divf %15, %16 : vector<16x1xf32>
    %18 = vector.broadcast %10 : vector<16x1xf32> to vector<16x32xf32>
    %19 = arith.subf %0, %18 : vector<16x32xf32>
    %cst_12 = arith.constant 9.99999974E-6 : f32
    %20 = vector.broadcast %cst_12 : f32 to vector<16x1xf32>
    %21 = arith.addf %17, %20 : vector<16x1xf32>
    %22 = math.rsqrt %21 : vector<16x1xf32>
    %23 = vector.broadcast %22 : vector<16x1xf32> to vector<16x32xf32>
    %24 = arith.mulf %19, %23 : vector<16x32xf32>
    %25 = vector.broadcast %4 : vector<1x32xf32> to vector<16x32xf32>
    %26 = arith.mulf %24, %25 : vector<16x32xf32>
    %27 = vector.broadcast %6 : vector<1x32xf32> to vector<16x32xf32>
    %28 = arith.addf %26, %27 : vector<16x32xf32>
    %c0_13 = arith.constant 0 : index
    %c0_14 = arith.constant 0 : index
    %c0_15 = arith.constant 0 : index
    %29 = vector.load %arg5[%c0_13, %c0_14, %c0_15] : memref<2x1x32xf32, #tpu.memory_space<vmem>>, vector<1x1x32xf32>
    %30 = vector.shape_cast %29 : vector<1x1x32xf32> to vector<1x32xf32>
    %c0_16 = arith.constant 0 : index
    %c0_17 = arith.constant 0 : index
    %c0_18 = arith.constant 0 : index
    %31 = vector.load %arg6[%c0_16, %c0_17, %c0_18] : memref<2x1x32xf32, #tpu.memory_space<vmem>>, vector<1x1x32xf32>
    %32 = vector.shape_cast %31 : vector<1x1x32xf32> to vector<1x32xf32>
    %cst_19 = arith.constant dense<0.000000e+00> : vector<16xf32>
    %33 = vector.multi_reduction <add>, %2, %cst_19 [1] : vector<16x32xf32> to vector<16xf32>
    %34 = vector.shape_cast %33 : vector<16xf32> to vector<16x1xf32>
    %cst_20 = arith.constant 3.200000e+01 : f32
    %35 = vector.broadcast %cst_20 : f32 to vector<16x1xf32>
    %36 = arith.divf %34, %35 : vector<16x1xf32>
    %37 = vector.broadcast %36 : vector<16x1xf32> to vector<16x32xf32>
    %38 = arith.subf %2, %37 : vector<16x32xf32>
    %39 = arith.mulf %38, %38 : vector<16x32xf32>
    %cst_21 = arith.constant dense<0.000000e+00> : vector<16xf32>
    %40 = vector.multi_reduction <add>, %39, %cst_21 [1] : vector<16x32xf32> to vector<16xf32>
    %41 = vector.shape_cast %40 : vector<16xf32> to vector<16x1xf32>
    %cst_22 = arith.constant 3.200000e+01 : f32
    %42 = vector.broadcast %cst_22 : f32 to vector<16x1xf32>
    %43 = arith.divf %41, %42 : vector<16x1xf32>
    %44 = vector.broadcast %36 : vector<16x1xf32> to vector<16x32xf32>
    %45 = arith.subf %2, %44 : vector<16x32xf32>
    %cst_23 = arith.constant 9.99999974E-6 : f32
    %46 = vector.broadcast %cst_23 : f32 to vector<16x1xf32>
    %47 = arith.addf %43, %46 : vector<16x1xf32>
    %48 = math.rsqrt %47 : vector<16x1xf32>
    %49 = vector.broadcast %48 : vector<16x1xf32> to vector<16x32xf32>
    %50 = arith.mulf %45, %49 : vector<16x32xf32>
    %51 = vector.broadcast %30 : vector<1x32xf32> to vector<16x32xf32>
    %52 = arith.mulf %50, %51 : vector<16x32xf32>
    %53 = vector.broadcast %32 : vector<1x32xf32> to vector<16x32xf32>
    %54 = arith.addf %52, %53 : vector<16x32xf32>
    %c0_24 = arith.constant 0 : index
    %c0_25 = arith.constant 0 : index
    %c0_26 = arith.constant 0 : index
    %55 = vector.load %arg7[%c0_24, %c0_25, %c0_26] : memref<2x32x96xf32, #tpu.memory_space<vmem>>, vector<1x32x96xf32>
    %56 = vector.shape_cast %55 : vector<1x32x96xf32> to vector<32x96xf32>
    %cst_27 = arith.constant dense<0.000000e+00> : vector<16x96xf32>
    %57 = tpu.matmul %54, %56, %cst_27 {dimension_numbers = #tpu.dot_dimension_numbers<[1], [0], [0], [1], [0, 0, 1, 1], [], []>} : vector<16x32xf32>, vector<32x96xf32>, vector<16x96xf32> -> vector<16x96xf32>
    %c0_28 = arith.constant 0 : index
    %c0_29 = arith.constant 0 : index
    %c0_30 = arith.constant 0 : index
    %58 = vector.load %arg8[%c0_28, %c0_29, %c0_30] : memref<2x32x64xf32, #tpu.memory_space<vmem>>, vector<1x32x64xf32>
    %59 = vector.shape_cast %58 : vector<1x32x64xf32> to vector<32x64xf32>
    %cst_31 = arith.constant dense<0.000000e+00> : vector<16x64xf32>
    %60 = tpu.matmul %28, %59, %cst_31 {dimension_numbers = #tpu.dot_dimension_numbers<[1], [0], [0], [1], [0, 0, 1, 1], [], []>} : vector<16x32xf32>, vector<32x64xf32>, vector<16x64xf32> -> vector<16x64xf32>
    %61 = vector.extract_strided_slice %57 {offsets = [0, 0], sizes = [16, 32], strides = [1, 1]} : vector<16x96xf32> to vector<16x32xf32>
    %cst_32 = arith.constant 0.353553385 : f32
    %62 = vector.broadcast %cst_32 : f32 to vector<16x32xf32>
    %63 = arith.mulf %61, %62 : vector<16x32xf32>
    %64 = vector.shape_cast %63 : vector<16x32xf32> to vector<2x8x32xf32>
    %65 = vector.extract_strided_slice %57 {offsets = [0, 32], sizes = [16, 32], strides = [1, 1]} : vector<16x96xf32> to vector<16x32xf32>
    %66 = vector.shape_cast %65 : vector<16x32xf32> to vector<2x8x32xf32>
    %67 = vector.extract_strided_slice %57 {offsets = [0, 64], sizes = [16, 32], strides = [1, 1]} : vector<16x96xf32> to vector<16x32xf32>
    %68 = vector.shape_cast %67 : vector<16x32xf32> to vector<2x8x32xf32>
    %69 = vector.extract_strided_slice %60 {offsets = [0, 0], sizes = [16, 32], strides = [1, 1]} : vector<16x64xf32> to vector<16x32xf32>
    %70 = vector.shape_cast %69 : vector<16x32xf32> to vector<2x8x32xf32>
    %71 = vector.extract_strided_slice %60 {offsets = [0, 32], sizes = [16, 32], strides = [1, 1]} : vector<16x64xf32> to vector<16x32xf32>
    %72 = vector.shape_cast %71 : vector<16x32xf32> to vector<2x8x32xf32>
    %73 = tpu.concatenate %70, %66 in 1 : vector<2x8x32xf32>, vector<2x8x32xf32> -> vector<2x16x32xf32>
    %74 = tpu.concatenate %72, %68 in 1 : vector<2x8x32xf32>, vector<2x8x32xf32> -> vector<2x16x32xf32>
    %c0_33 = arith.constant 0 : index
    %c0_34 = arith.constant 0 : index
    %c0_35 = arith.constant 0 : index
    %75 = vector.load %arg9[%c0_33, %c0_34, %c0_35] : memref<2x32x32xf32, #tpu.memory_space<vmem>>, vector<1x32x32xf32>
    %76 = vector.shape_cast %75 : vector<1x32x32xf32> to vector<32x32xf32>
    %77 = vector.extract_strided_slice %64 {offsets = [0, 0, 0], sizes = [2, 8, 8], strides = [1, 1, 1]} : vector<2x8x32xf32> to vector<2x8x8xf32>
    %78 = vector.extract_strided_slice %73 {offsets = [0, 0, 0], sizes = [2, 16, 8], strides = [1, 1, 1]} : vector<2x16x32xf32> to vector<2x16x8xf32>
    %79 = vector.extract_strided_slice %74 {offsets = [0, 0, 0], sizes = [2, 16, 8], strides = [1, 1, 1]} : vector<2x16x32xf32> to vector<2x16x8xf32>
    "tpu.trace_start"() <{level = 10 : i32, message = "bqd,bkd->bqk"}> : () -> ()
    %cst_36 = arith.constant dense<0.000000e+00> : vector<2x8x16xf32>
    %80 = tpu.matmul %77, %78, %cst_36 {dimension_numbers = #tpu.dot_dimension_numbers<[2], [2], [1], [1], [0, 0, 0, 1, 1, 1], [0], [0]>} : vector<2x8x8xf32>, vector<2x16x8xf32>, vector<2x8x16xf32> -> vector<2x8x16xf32>
    "tpu.trace_stop"() : () -> ()
    %cst_37 = arith.constant dense<0xFF800000> : vector<2x8xf32>
    %81 = vector.multi_reduction <maximumf>, %80, %cst_37 [2] : vector<2x8x16xf32> to vector<2x8xf32>
    %82 = vector.shape_cast %81 : vector<2x8xf32> to vector<2x8x1xf32>
    %83 = vector.broadcast %82 : vector<2x8x1xf32> to vector<2x8x16xf32>
    %84 = arith.subf %80, %83 : vector<2x8x16xf32>
    %85 = math.exp %84 : vector<2x8x16xf32>
    %cst_38 = arith.constant dense<0.000000e+00> : vector<2x8xf32>
    %86 = vector.multi_reduction <add>, %85, %cst_38 [2] : vector<2x8x16xf32> to vector<2x8xf32>
    %87 = vector.shape_cast %86 : vector<2x8xf32> to vector<2x8x1xf32>
    %88 = tpu.reciprocal %87 {approx = true} : vector<2x8x1xf32> -> vector<2x8x1xf32>
    %89 = vector.broadcast %88 : vector<2x8x1xf32> to vector<2x8x16xf32>
    %90 = arith.mulf %85, %89 : vector<2x8x16xf32>
    "tpu.trace_start"() <{level = 10 : i32, message = "bqk,bkd->bqd"}> : () -> ()
    %cst_39 = arith.constant dense<0.000000e+00> : vector<2x8x8xf32>
    %91 = tpu.matmul %90, %79, %cst_39 {dimension_numbers = #tpu.dot_dimension_numbers<[2], [1], [1], [2], [0, 0, 0, 1, 1, 2], [0], [0]>} : vector<2x8x16xf32>, vector<2x16x8xf32>, vector<2x8x8xf32> -> vector<2x8x8xf32>
    "tpu.trace_stop"() : () -> ()
    %92 = vector.shape_cast %91 : vector<2x8x8xf32> to vector<16x8xf32>
    %93 = vector.extract_strided_slice %76 {offsets = [0, 0], sizes = [8, 32], strides = [1, 1]} : vector<32x32xf32> to vector<8x32xf32>
    %cst_40 = arith.constant dense<0.000000e+00> : vector<16x32xf32>
    %94 = tpu.matmul %92, %93, %cst_40 {dimension_numbers = #tpu.dot_dimension_numbers<[1], [0], [0], [1], [0, 0, 1, 1], [], []>} : vector<16x8xf32>, vector<8x32xf32>, vector<16x32xf32> -> vector<16x32xf32>
    %95 = arith.addf %2, %94 : vector<16x32xf32>
    %96 = vector.extract_strided_slice %64 {offsets = [0, 0, 8], sizes = [2, 8, 8], strides = [1, 1, 1]} : vector<2x8x32xf32> to vector<2x8x8xf32>
    %97 = vector.extract_strided_slice %73 {offsets = [0, 0, 8], sizes = [2, 16, 8], strides = [1, 1, 1]} : vector<2x16x32xf32> to vector<2x16x8xf32>
    %98 = vector.extract_strided_slice %74 {offsets = [0, 0, 8], sizes = [2, 16, 8], strides = [1, 1, 1]} : vector<2x16x32xf32> to vector<2x16x8xf32>
    "tpu.trace_start"() <{level = 10 : i32, message = "bqd,bkd->bqk"}> : () -> ()
    %cst_41 = arith.constant dense<0.000000e+00> : vector<2x8x16xf32>
    %99 = tpu.matmul %96, %97, %cst_41 {dimension_numbers = #tpu.dot_dimension_numbers<[2], [2], [1], [1], [0, 0, 0, 1, 1, 1], [0], [0]>} : vector<2x8x8xf32>, vector<2x16x8xf32>, vector<2x8x16xf32> -> vector<2x8x16xf32>
    "tpu.trace_stop"() : () -> ()
    %cst_42 = arith.constant dense<0xFF800000> : vector<2x8xf32>
    %100 = vector.multi_reduction <maximumf>, %99, %cst_42 [2] : vector<2x8x16xf32> to vector<2x8xf32>
    %101 = vector.shape_cast %100 : vector<2x8xf32> to vector<2x8x1xf32>
    %102 = vector.broadcast %101 : vector<2x8x1xf32> to vector<2x8x16xf32>
    %103 = arith.subf %99, %102 : vector<2x8x16xf32>
    %104 = math.exp %103 : vector<2x8x16xf32>
    %cst_43 = arith.constant dense<0.000000e+00> : vector<2x8xf32>
    %105 = vector.multi_reduction <add>, %104, %cst_43 [2] : vector<2x8x16xf32> to vector<2x8xf32>
    %106 = vector.shape_cast %105 : vector<2x8xf32> to vector<2x8x1xf32>
    %107 = tpu.reciprocal %106 {approx = true} : vector<2x8x1xf32> -> vector<2x8x1xf32>
    %108 = vector.broadcast %107 : vector<2x8x1xf32> to vector<2x8x16xf32>
    %109 = arith.mulf %104, %108 : vector<2x8x16xf32>
    "tpu.trace_start"() <{level = 10 : i32, message = "bqk,bkd->bqd"}> : () -> ()
    %cst_44 = arith.constant dense<0.000000e+00> : vector<2x8x8xf32>
    %110 = tpu.matmul %109, %98, %cst_44 {dimension_numbers = #tpu.dot_dimension_numbers<[2], [1], [1], [2], [0, 0, 0, 1, 1, 2], [0], [0]>} : vector<2x8x16xf32>, vector<2x16x8xf32>, vector<2x8x8xf32> -> vector<2x8x8xf32>
    "tpu.trace_stop"() : () -> ()
    %111 = vector.shape_cast %110 : vector<2x8x8xf32> to vector<16x8xf32>
    %112 = vector.extract_strided_slice %76 {offsets = [8, 0], sizes = [8, 32], strides = [1, 1]} : vector<32x32xf32> to vector<8x32xf32>
    %cst_45 = arith.constant dense<0.000000e+00> : vector<16x32xf32>
    %113 = tpu.matmul %111, %112, %cst_45 {dimension_numbers = #tpu.dot_dimension_numbers<[1], [0], [0], [1], [0, 0, 1, 1], [], []>} : vector<16x8xf32>, vector<8x32xf32>, vector<16x32xf32> -> vector<16x32xf32>
    %114 = arith.addf %95, %113 : vector<16x32xf32>
    %115 = vector.extract_strided_slice %64 {offsets = [0, 0, 16], sizes = [2, 8, 8], strides = [1, 1, 1]} : vector<2x8x32xf32> to vector<2x8x8xf32>
    %116 = vector.extract_strided_slice %73 {offsets = [0, 0, 16], sizes = [2, 16, 8], strides = [1, 1, 1]} : vector<2x16x32xf32> to vector<2x16x8xf32>
    %117 = vector.extract_strided_slice %74 {offsets = [0, 0, 16], sizes = [2, 16, 8], strides = [1, 1, 1]} : vector<2x16x32xf32> to vector<2x16x8xf32>
    "tpu.trace_start"() <{level = 10 : i32, message = "bqd,bkd->bqk"}> : () -> ()
    %cst_46 = arith.constant dense<0.000000e+00> : vector<2x8x16xf32>
    %118 = tpu.matmul %115, %116, %cst_46 {dimension_numbers = #tpu.dot_dimension_numbers<[2], [2], [1], [1], [0, 0, 0, 1, 1, 1], [0], [0]>} : vector<2x8x8xf32>, vector<2x16x8xf32>, vector<2x8x16xf32> -> vector<2x8x16xf32>
    "tpu.trace_stop"() : () -> ()
    %cst_47 = arith.constant dense<0xFF800000> : vector<2x8xf32>
    %119 = vector.multi_reduction <maximumf>, %118, %cst_47 [2] : vector<2x8x16xf32> to vector<2x8xf32>
    %120 = vector.shape_cast %119 : vector<2x8xf32> to vector<2x8x1xf32>
    %121 = vector.broadcast %120 : vector<2x8x1xf32> to vector<2x8x16xf32>
    %122 = arith.subf %118, %121 : vector<2x8x16xf32>
    %123 = math.exp %122 : vector<2x8x16xf32>
    %cst_48 = arith.constant dense<0.000000e+00> : vector<2x8xf32>
    %124 = vector.multi_reduction <add>, %123, %cst_48 [2] : vector<2x8x16xf32> to vector<2x8xf32>
    %125 = vector.shape_cast %124 : vector<2x8xf32> to vector<2x8x1xf32>
    %126 = tpu.reciprocal %125 {approx = true} : vector<2x8x1xf32> -> vector<2x8x1xf32>
    %127 = vector.broadcast %126 : vector<2x8x1xf32> to vector<2x8x16xf32>
    %128 = arith.mulf %123, %127 : vector<2x8x16xf32>
    "tpu.trace_start"() <{level = 10 : i32, message = "bqk,bkd->bqd"}> : () -> ()
    %cst_49 = arith.constant dense<0.000000e+00> : vector<2x8x8xf32>
    %129 = tpu.matmul %128, %117, %cst_49 {dimension_numbers = #tpu.dot_dimension_numbers<[2], [1], [1], [2], [0, 0, 0, 1, 1, 2], [0], [0]>} : vector<2x8x16xf32>, vector<2x16x8xf32>, vector<2x8x8xf32> -> vector<2x8x8xf32>
    "tpu.trace_stop"() : () -> ()
    %130 = vector.shape_cast %129 : vector<2x8x8xf32> to vector<16x8xf32>
    %131 = vector.extract_strided_slice %76 {offsets = [16, 0], sizes = [8, 32], strides = [1, 1]} : vector<32x32xf32> to vector<8x32xf32>
    %cst_50 = arith.constant dense<0.000000e+00> : vector<16x32xf32>
    %132 = tpu.matmul %130, %131, %cst_50 {dimension_numbers = #tpu.dot_dimension_numbers<[1], [0], [0], [1], [0, 0, 1, 1], [], []>} : vector<16x8xf32>, vector<8x32xf32>, vector<16x32xf32> -> vector<16x32xf32>
    %133 = arith.addf %114, %132 : vector<16x32xf32>
    %134 = vector.extract_strided_slice %64 {offsets = [0, 0, 24], sizes = [2, 8, 8], strides = [1, 1, 1]} : vector<2x8x32xf32> to vector<2x8x8xf32>
    %135 = vector.extract_strided_slice %73 {offsets = [0, 0, 24], sizes = [2, 16, 8], strides = [1, 1, 1]} : vector<2x16x32xf32> to vector<2x16x8xf32>
    %136 = vector.extract_strided_slice %74 {offsets = [0, 0, 24], sizes = [2, 16, 8], strides = [1, 1, 1]} : vector<2x16x32xf32> to vector<2x16x8xf32>
    "tpu.trace_start"() <{level = 10 : i32, message = "bqd,bkd->bqk"}> : () -> ()
    %cst_51 = arith.constant dense<0.000000e+00> : vector<2x8x16xf32>
    %137 = tpu.matmul %134, %135, %cst_51 {dimension_numbers = #tpu.dot_dimension_numbers<[2], [2], [1], [1], [0, 0, 0, 1, 1, 1], [0], [0]>} : vector<2x8x8xf32>, vector<2x16x8xf32>, vector<2x8x16xf32> -> vector<2x8x16xf32>
    "tpu.trace_stop"() : () -> ()
    %cst_52 = arith.constant dense<0xFF800000> : vector<2x8xf32>
    %138 = vector.multi_reduction <maximumf>, %137, %cst_52 [2] : vector<2x8x16xf32> to vector<2x8xf32>
    %139 = vector.shape_cast %138 : vector<2x8xf32> to vector<2x8x1xf32>
    %140 = vector.broadcast %139 : vector<2x8x1xf32> to vector<2x8x16xf32>
    %141 = arith.subf %137, %140 : vector<2x8x16xf32>
    %142 = math.exp %141 : vector<2x8x16xf32>
    %cst_53 = arith.constant dense<0.000000e+00> : vector<2x8xf32>
    %143 = vector.multi_reduction <add>, %142, %cst_53 [2] : vector<2x8x16xf32> to vector<2x8xf32>
    %144 = vector.shape_cast %143 : vector<2x8xf32> to vector<2x8x1xf32>
    %145 = tpu.reciprocal %144 {approx = true} : vector<2x8x1xf32> -> vector<2x8x1xf32>
    %146 = vector.broadcast %145 : vector<2x8x1xf32> to vector<2x8x16xf32>
    %147 = arith.mulf %142, %146 : vector<2x8x16xf32>
    "tpu.trace_start"() <{level = 10 : i32, message = "bqk,bkd->bqd"}> : () -> ()
    %cst_54 = arith.constant dense<0.000000e+00> : vector<2x8x8xf32>
    %148 = tpu.matmul %147, %136, %cst_54 {dimension_numbers = #tpu.dot_dimension_numbers<[2], [1], [1], [2], [0, 0, 0, 1, 1, 2], [0], [0]>} : vector<2x8x16xf32>, vector<2x16x8xf32>, vector<2x8x8xf32> -> vector<2x8x8xf32>
    "tpu.trace_stop"() : () -> ()
    %149 = vector.shape_cast %148 : vector<2x8x8xf32> to vector<16x8xf32>
    %150 = vector.extract_strided_slice %76 {offsets = [24, 0], sizes = [8, 32], strides = [1, 1]} : vector<32x32xf32> to vector<8x32xf32>
    %cst_55 = arith.constant dense<0.000000e+00> : vector<16x32xf32>
    %151 = tpu.matmul %149, %150, %cst_55 {dimension_numbers = #tpu.dot_dimension_numbers<[1], [0], [0], [1], [0, 0, 1, 1], [], []>} : vector<16x8xf32>, vector<8x32xf32>, vector<16x32xf32> -> vector<16x32xf32>
    %152 = arith.addf %133, %151 : vector<16x32xf32>
    %c0_56 = arith.constant 0 : index
    %c0_57 = arith.constant 0 : index
    %c0_58 = arith.constant 0 : index
    %153 = vector.load %arg10[%c0_56, %c0_57, %c0_58] : memref<2x1x32xf32, #tpu.memory_space<vmem>>, vector<1x1x32xf32>
    %154 = vector.shape_cast %153 : vector<1x1x32xf32> to vector<1x32xf32>
    %c0_59 = arith.constant 0 : index
    %c0_60 = arith.constant 0 : index
    %c0_61 = arith.constant 0 : index
    %155 = vector.load %arg11[%c0_59, %c0_60, %c0_61] : memref<2x1x32xf32, #tpu.memory_space<vmem>>, vector<1x1x32xf32>
    %156 = vector.shape_cast %155 : vector<1x1x32xf32> to vector<1x32xf32>
    %cst_62 = arith.constant dense<0.000000e+00> : vector<16xf32>
    %157 = vector.multi_reduction <add>, %152, %cst_62 [1] : vector<16x32xf32> to vector<16xf32>
    %158 = vector.shape_cast %157 : vector<16xf32> to vector<16x1xf32>
    %cst_63 = arith.constant 3.200000e+01 : f32
    %159 = vector.broadcast %cst_63 : f32 to vector<16x1xf32>
    %160 = arith.divf %158, %159 : vector<16x1xf32>
    %161 = vector.broadcast %160 : vector<16x1xf32> to vector<16x32xf32>
    %162 = arith.subf %152, %161 : vector<16x32xf32>
    %163 = arith.mulf %162, %162 : vector<16x32xf32>
    %cst_64 = arith.constant dense<0.000000e+00> : vector<16xf32>
    %164 = vector.multi_reduction <add>, %163, %cst_64 [1] : vector<16x32xf32> to vector<16xf32>
    %165 = vector.shape_cast %164 : vector<16xf32> to vector<16x1xf32>
    %cst_65 = arith.constant 3.200000e+01 : f32
    %166 = vector.broadcast %cst_65 : f32 to vector<16x1xf32>
    %167 = arith.divf %165, %166 : vector<16x1xf32>
    %168 = vector.broadcast %160 : vector<16x1xf32> to vector<16x32xf32>
    %169 = arith.subf %152, %168 : vector<16x32xf32>
    %cst_66 = arith.constant 9.99999974E-6 : f32
    %170 = vector.broadcast %cst_66 : f32 to vector<16x1xf32>
    %171 = arith.addf %167, %170 : vector<16x1xf32>
    %172 = math.rsqrt %171 : vector<16x1xf32>
    %173 = vector.broadcast %172 : vector<16x1xf32> to vector<16x32xf32>
    %174 = arith.mulf %169, %173 : vector<16x32xf32>
    %175 = vector.broadcast %154 : vector<1x32xf32> to vector<16x32xf32>
    %176 = arith.mulf %174, %175 : vector<16x32xf32>
    %177 = vector.broadcast %156 : vector<1x32xf32> to vector<16x32xf32>
    %178 = arith.addf %176, %177 : vector<16x32xf32>
    %c0_67 = arith.constant 0 : index
    %c0_68 = arith.constant 0 : index
    %c0_69 = arith.constant 0 : index
    %179 = vector.load %arg12[%c0_67, %c0_68, %c0_69] : memref<2x32x128xf32, #tpu.memory_space<vmem>>, vector<1x32x128xf32>
    %180 = vector.shape_cast %179 : vector<1x32x128xf32> to vector<32x128xf32>
    %cst_70 = arith.constant dense<0.000000e+00> : vector<16x128xf32>
    %181 = tpu.matmul %178, %180, %cst_70 {dimension_numbers = #tpu.dot_dimension_numbers<[1], [0], [0], [1], [0, 0, 1, 1], [], []>} : vector<16x32xf32>, vector<32x128xf32>, vector<16x128xf32> -> vector<16x128xf32>
    %cst_71 = arith.constant 5.000000e-01 : f32
    %182 = vector.broadcast %cst_71 : f32 to vector<16x128xf32>
    %183 = arith.mulf %182, %181 : vector<16x128xf32>
    %cst_72 = arith.constant 2.000000e+00 : f32
    %184 = math.sqrt %cst_72 : f32
    %185 = vector.broadcast %184 : f32 to vector<16x128xf32>
    %186 = arith.divf %181, %185 : vector<16x128xf32>
    %187 = math.erf %186 : vector<16x128xf32>
    %cst_73 = arith.constant 1.000000e+00 : f32
    %188 = vector.broadcast %cst_73 : f32 to vector<16x128xf32>
    %189 = arith.addf %188, %187 : vector<16x128xf32>
    %190 = arith.mulf %183, %189 : vector<16x128xf32>
    %c0_74 = arith.constant 0 : index
    %c0_75 = arith.constant 0 : index
    %c0_76 = arith.constant 0 : index
    %191 = vector.load %arg13[%c0_74, %c0_75, %c0_76] : memref<2x128x32xf32, #tpu.memory_space<vmem>>, vector<1x128x32xf32>
    %192 = vector.shape_cast %191 : vector<1x128x32xf32> to vector<128x32xf32>
    %cst_77 = arith.constant dense<0.000000e+00> : vector<16x32xf32>
    %193 = tpu.matmul %190, %192, %cst_77 {dimension_numbers = #tpu.dot_dimension_numbers<[1], [0], [0], [1], [0, 0, 1, 1], [], []>} : vector<16x128xf32>, vector<128x32xf32>, vector<16x32xf32> -> vector<16x32xf32>
    %194 = arith.addf %152, %193 : vector<16x32xf32>
    %c1 = arith.constant 1 : index
    %c0_78 = arith.constant 0 : index
    %c0_79 = arith.constant 0 : index
    %195 = vector.load %arg3[%c1, %c0_78, %c0_79] : memref<2x1x32xf32, #tpu.memory_space<vmem>>, vector<1x1x32xf32>
    %196 = vector.shape_cast %195 : vector<1x1x32xf32> to vector<1x32xf32>
    %c1_80 = arith.constant 1 : index
    %c0_81 = arith.constant 0 : index
    %c0_82 = arith.constant 0 : index
    %197 = vector.load %arg4[%c1_80, %c0_81, %c0_82] : memref<2x1x32xf32, #tpu.memory_space<vmem>>, vector<1x1x32xf32>
    %198 = vector.shape_cast %197 : vector<1x1x32xf32> to vector<1x32xf32>
    %cst_83 = arith.constant dense<0.000000e+00> : vector<16xf32>
    %199 = vector.multi_reduction <add>, %0, %cst_83 [1] : vector<16x32xf32> to vector<16xf32>
    %200 = vector.shape_cast %199 : vector<16xf32> to vector<16x1xf32>
    %cst_84 = arith.constant 3.200000e+01 : f32
    %201 = vector.broadcast %cst_84 : f32 to vector<16x1xf32>
    %202 = arith.divf %200, %201 : vector<16x1xf32>
    %203 = vector.broadcast %202 : vector<16x1xf32> to vector<16x32xf32>
    %204 = arith.subf %0, %203 : vector<16x32xf32>
    %205 = arith.mulf %204, %204 : vector<16x32xf32>
    %cst_85 = arith.constant dense<0.000000e+00> : vector<16xf32>
    %206 = vector.multi_reduction <add>, %205, %cst_85 [1] : vector<16x32xf32> to vector<16xf32>
    %207 = vector.shape_cast %206 : vector<16xf32> to vector<16x1xf32>
    %cst_86 = arith.constant 3.200000e+01 : f32
    %208 = vector.broadcast %cst_86 : f32 to vector<16x1xf32>
    %209 = arith.divf %207, %208 : vector<16x1xf32>
    %210 = vector.broadcast %202 : vector<16x1xf32> to vector<16x32xf32>
    %211 = arith.subf %0, %210 : vector<16x32xf32>
    %cst_87 = arith.constant 9.99999974E-6 : f32
    %212 = vector.broadcast %cst_87 : f32 to vector<16x1xf32>
    %213 = arith.addf %209, %212 : vector<16x1xf32>
    %214 = math.rsqrt %213 : vector<16x1xf32>
    %215 = vector.broadcast %214 : vector<16x1xf32> to vector<16x32xf32>
    %216 = arith.mulf %211, %215 : vector<16x32xf32>
    %217 = vector.broadcast %196 : vector<1x32xf32> to vector<16x32xf32>
    %218 = arith.mulf %216, %217 : vector<16x32xf32>
    %219 = vector.broadcast %198 : vector<1x32xf32> to vector<16x32xf32>
    %220 = arith.addf %218, %219 : vector<16x32xf32>
    %c1_88 = arith.constant 1 : index
    %c0_89 = arith.constant 0 : index
    %c0_90 = arith.constant 0 : index
    %221 = vector.load %arg5[%c1_88, %c0_89, %c0_90] : memref<2x1x32xf32, #tpu.memory_space<vmem>>, vector<1x1x32xf32>
    %222 = vector.shape_cast %221 : vector<1x1x32xf32> to vector<1x32xf32>
    %c1_91 = arith.constant 1 : index
    %c0_92 = arith.constant 0 : index
    %c0_93 = arith.constant 0 : index
    %223 = vector.load %arg6[%c1_91, %c0_92, %c0_93] : memref<2x1x32xf32, #tpu.memory_space<vmem>>, vector<1x1x32xf32>
    %224 = vector.shape_cast %223 : vector<1x1x32xf32> to vector<1x32xf32>
    %cst_94 = arith.constant dense<0.000000e+00> : vector<16xf32>
    %225 = vector.multi_reduction <add>, %194, %cst_94 [1] : vector<16x32xf32> to vector<16xf32>
    %226 = vector.shape_cast %225 : vector<16xf32> to vector<16x1xf32>
    %cst_95 = arith.constant 3.200000e+01 : f32
    %227 = vector.broadcast %cst_95 : f32 to vector<16x1xf32>
    %228 = arith.divf %226, %227 : vector<16x1xf32>
    %229 = vector.broadcast %228 : vector<16x1xf32> to vector<16x32xf32>
    %230 = arith.subf %194, %229 : vector<16x32xf32>
    %231 = arith.mulf %230, %230 : vector<16x32xf32>
    %cst_96 = arith.constant dense<0.000000e+00> : vector<16xf32>
    %232 = vector.multi_reduction <add>, %231, %cst_96 [1] : vector<16x32xf32> to vector<16xf32>
    %233 = vector.shape_cast %232 : vector<16xf32> to vector<16x1xf32>
    %cst_97 = arith.constant 3.200000e+01 : f32
    %234 = vector.broadcast %cst_97 : f32 to vector<16x1xf32>
    %235 = arith.divf %233, %234 : vector<16x1xf32>
    %236 = vector.broadcast %228 : vector<16x1xf32> to vector<16x32xf32>
    %237 = arith.subf %194, %236 : vector<16x32xf32>
    %cst_98 = arith.constant 9.99999974E-6 : f32
    %238 = vector.broadcast %cst_98 : f32 to vector<16x1xf32>
    %239 = arith.addf %235, %238 : vector<16x1xf32>
    %240 = math.rsqrt %239 : vector<16x1xf32>
    %241 = vector.broadcast %240 : vector<16x1xf32> to vector<16x32xf32>
    %242 = arith.mulf %237, %241 : vector<16x32xf32>
    %243 = vector.broadcast %222 : vector<1x32xf32> to vector<16x32xf32>
    %244 = arith.mulf %242, %243 : vector<16x32xf32>
    %245 = vector.broadcast %224 : vector<1x32xf32> to vector<16x32xf32>
    %246 = arith.addf %244, %245 : vector<16x32xf32>
    %c1_99 = arith.constant 1 : index
    %c0_100 = arith.constant 0 : index
    %c0_101 = arith.constant 0 : index
    %247 = vector.load %arg7[%c1_99, %c0_100, %c0_101] : memref<2x32x96xf32, #tpu.memory_space<vmem>>, vector<1x32x96xf32>
    %248 = vector.shape_cast %247 : vector<1x32x96xf32> to vector<32x96xf32>
    %cst_102 = arith.constant dense<0.000000e+00> : vector<16x96xf32>
    %249 = tpu.matmul %246, %248, %cst_102 {dimension_numbers = #tpu.dot_dimension_numbers<[1], [0], [0], [1], [0, 0, 1, 1], [], []>} : vector<16x32xf32>, vector<32x96xf32>, vector<16x96xf32> -> vector<16x96xf32>
    %c1_103 = arith.constant 1 : index
    %c0_104 = arith.constant 0 : index
    %c0_105 = arith.constant 0 : index
    %250 = vector.load %arg8[%c1_103, %c0_104, %c0_105] : memref<2x32x64xf32, #tpu.memory_space<vmem>>, vector<1x32x64xf32>
    %251 = vector.shape_cast %250 : vector<1x32x64xf32> to vector<32x64xf32>
    %cst_106 = arith.constant dense<0.000000e+00> : vector<16x64xf32>
    %252 = tpu.matmul %220, %251, %cst_106 {dimension_numbers = #tpu.dot_dimension_numbers<[1], [0], [0], [1], [0, 0, 1, 1], [], []>} : vector<16x32xf32>, vector<32x64xf32>, vector<16x64xf32> -> vector<16x64xf32>
    %253 = vector.extract_strided_slice %249 {offsets = [0, 0], sizes = [16, 32], strides = [1, 1]} : vector<16x96xf32> to vector<16x32xf32>
    %cst_107 = arith.constant 0.353553385 : f32
    %254 = vector.broadcast %cst_107 : f32 to vector<16x32xf32>
    %255 = arith.mulf %253, %254 : vector<16x32xf32>
    %256 = vector.shape_cast %255 : vector<16x32xf32> to vector<2x8x32xf32>
    %257 = vector.extract_strided_slice %249 {offsets = [0, 32], sizes = [16, 32], strides = [1, 1]} : vector<16x96xf32> to vector<16x32xf32>
    %258 = vector.shape_cast %257 : vector<16x32xf32> to vector<2x8x32xf32>
    %259 = vector.extract_strided_slice %249 {offsets = [0, 64], sizes = [16, 32], strides = [1, 1]} : vector<16x96xf32> to vector<16x32xf32>
    %260 = vector.shape_cast %259 : vector<16x32xf32> to vector<2x8x32xf32>
    %261 = vector.extract_strided_slice %252 {offsets = [0, 0], sizes = [16, 32], strides = [1, 1]} : vector<16x64xf32> to vector<16x32xf32>
    %262 = vector.shape_cast %261 : vector<16x32xf32> to vector<2x8x32xf32>
    %263 = vector.extract_strided_slice %252 {offsets = [0, 32], sizes = [16, 32], strides = [1, 1]} : vector<16x64xf32> to vector<16x32xf32>
    %264 = vector.shape_cast %263 : vector<16x32xf32> to vector<2x8x32xf32>
    %265 = tpu.concatenate %262, %258 in 1 : vector<2x8x32xf32>, vector<2x8x32xf32> -> vector<2x16x32xf32>
    %266 = tpu.concatenate %264, %260 in 1 : vector<2x8x32xf32>, vector<2x8x32xf32> -> vector<2x16x32xf32>
    %c1_108 = arith.constant 1 : index
    %c0_109 = arith.constant 0 : index
    %c0_110 = arith.constant 0 : index
    %267 = vector.load %arg9[%c1_108, %c0_109, %c0_110] : memref<2x32x32xf32, #tpu.memory_space<vmem>>, vector<1x32x32xf32>
    %268 = vector.shape_cast %267 : vector<1x32x32xf32> to vector<32x32xf32>
    %269 = vector.extract_strided_slice %256 {offsets = [0, 0, 0], sizes = [2, 8, 8], strides = [1, 1, 1]} : vector<2x8x32xf32> to vector<2x8x8xf32>
    %270 = vector.extract_strided_slice %265 {offsets = [0, 0, 0], sizes = [2, 16, 8], strides = [1, 1, 1]} : vector<2x16x32xf32> to vector<2x16x8xf32>
    %271 = vector.extract_strided_slice %266 {offsets = [0, 0, 0], sizes = [2, 16, 8], strides = [1, 1, 1]} : vector<2x16x32xf32> to vector<2x16x8xf32>
    "tpu.trace_start"() <{level = 10 : i32, message = "bqd,bkd->bqk"}> : () -> ()
    %cst_111 = arith.constant dense<0.000000e+00> : vector<2x8x16xf32>
    %272 = tpu.matmul %269, %270, %cst_111 {dimension_numbers = #tpu.dot_dimension_numbers<[2], [2], [1], [1], [0, 0, 0, 1, 1, 1], [0], [0]>} : vector<2x8x8xf32>, vector<2x16x8xf32>, vector<2x8x16xf32> -> vector<2x8x16xf32>
    "tpu.trace_stop"() : () -> ()
    %cst_112 = arith.constant dense<0xFF800000> : vector<2x8xf32>
    %273 = vector.multi_reduction <maximumf>, %272, %cst_112 [2] : vector<2x8x16xf32> to vector<2x8xf32>
    %274 = vector.shape_cast %273 : vector<2x8xf32> to vector<2x8x1xf32>
    %275 = vector.broadcast %274 : vector<2x8x1xf32> to vector<2x8x16xf32>
    %276 = arith.subf %272, %275 : vector<2x8x16xf32>
    %277 = math.exp %276 : vector<2x8x16xf32>
    %cst_113 = arith.constant dense<0.000000e+00> : vector<2x8xf32>
    %278 = vector.multi_reduction <add>, %277, %cst_113 [2] : vector<2x8x16xf32> to vector<2x8xf32>
    %279 = vector.shape_cast %278 : vector<2x8xf32> to vector<2x8x1xf32>
    %280 = tpu.reciprocal %279 {approx = true} : vector<2x8x1xf32> -> vector<2x8x1xf32>
    %281 = vector.broadcast %280 : vector<2x8x1xf32> to vector<2x8x16xf32>
    %282 = arith.mulf %277, %281 : vector<2x8x16xf32>
    "tpu.trace_start"() <{level = 10 : i32, message = "bqk,bkd->bqd"}> : () -> ()
    %cst_114 = arith.constant dense<0.000000e+00> : vector<2x8x8xf32>
    %283 = tpu.matmul %282, %271, %cst_114 {dimension_numbers = #tpu.dot_dimension_numbers<[2], [1], [1], [2], [0, 0, 0, 1, 1, 2], [0], [0]>} : vector<2x8x16xf32>, vector<2x16x8xf32>, vector<2x8x8xf32> -> vector<2x8x8xf32>
    "tpu.trace_stop"() : () -> ()
    %284 = vector.shape_cast %283 : vector<2x8x8xf32> to vector<16x8xf32>
    %285 = vector.extract_strided_slice %268 {offsets = [0, 0], sizes = [8, 32], strides = [1, 1]} : vector<32x32xf32> to vector<8x32xf32>
    %cst_115 = arith.constant dense<0.000000e+00> : vector<16x32xf32>
    %286 = tpu.matmul %284, %285, %cst_115 {dimension_numbers = #tpu.dot_dimension_numbers<[1], [0], [0], [1], [0, 0, 1, 1], [], []>} : vector<16x8xf32>, vector<8x32xf32>, vector<16x32xf32> -> vector<16x32xf32>
    %287 = arith.addf %194, %286 : vector<16x32xf32>
    %288 = vector.extract_strided_slice %256 {offsets = [0, 0, 8], sizes = [2, 8, 8], strides = [1, 1, 1]} : vector<2x8x32xf32> to vector<2x8x8xf32>
    %289 = vector.extract_strided_slice %265 {offsets = [0, 0, 8], sizes = [2, 16, 8], strides = [1, 1, 1]} : vector<2x16x32xf32> to vector<2x16x8xf32>
    %290 = vector.extract_strided_slice %266 {offsets = [0, 0, 8], sizes = [2, 16, 8], strides = [1, 1, 1]} : vector<2x16x32xf32> to vector<2x16x8xf32>
    "tpu.trace_start"() <{level = 10 : i32, message = "bqd,bkd->bqk"}> : () -> ()
    %cst_116 = arith.constant dense<0.000000e+00> : vector<2x8x16xf32>
    %291 = tpu.matmul %288, %289, %cst_116 {dimension_numbers = #tpu.dot_dimension_numbers<[2], [2], [1], [1], [0, 0, 0, 1, 1, 1], [0], [0]>} : vector<2x8x8xf32>, vector<2x16x8xf32>, vector<2x8x16xf32> -> vector<2x8x16xf32>
    "tpu.trace_stop"() : () -> ()
    %cst_117 = arith.constant dense<0xFF800000> : vector<2x8xf32>
    %292 = vector.multi_reduction <maximumf>, %291, %cst_117 [2] : vector<2x8x16xf32> to vector<2x8xf32>
    %293 = vector.shape_cast %292 : vector<2x8xf32> to vector<2x8x1xf32>
    %294 = vector.broadcast %293 : vector<2x8x1xf32> to vector<2x8x16xf32>
    %295 = arith.subf %291, %294 : vector<2x8x16xf32>
    %296 = math.exp %295 : vector<2x8x16xf32>
    %cst_118 = arith.constant dense<0.000000e+00> : vector<2x8xf32>
    %297 = vector.multi_reduction <add>, %296, %cst_118 [2] : vector<2x8x16xf32> to vector<2x8xf32>
    %298 = vector.shape_cast %297 : vector<2x8xf32> to vector<2x8x1xf32>
    %299 = tpu.reciprocal %298 {approx = true} : vector<2x8x1xf32> -> vector<2x8x1xf32>
    %300 = vector.broadcast %299 : vector<2x8x1xf32> to vector<2x8x16xf32>
    %301 = arith.mulf %296, %300 : vector<2x8x16xf32>
    "tpu.trace_start"() <{level = 10 : i32, message = "bqk,bkd->bqd"}> : () -> ()
    %cst_119 = arith.constant dense<0.000000e+00> : vector<2x8x8xf32>
    %302 = tpu.matmul %301, %290, %cst_119 {dimension_numbers = #tpu.dot_dimension_numbers<[2], [1], [1], [2], [0, 0, 0, 1, 1, 2], [0], [0]>} : vector<2x8x16xf32>, vector<2x16x8xf32>, vector<2x8x8xf32> -> vector<2x8x8xf32>
    "tpu.trace_stop"() : () -> ()
    %303 = vector.shape_cast %302 : vector<2x8x8xf32> to vector<16x8xf32>
    %304 = vector.extract_strided_slice %268 {offsets = [8, 0], sizes = [8, 32], strides = [1, 1]} : vector<32x32xf32> to vector<8x32xf32>
    %cst_120 = arith.constant dense<0.000000e+00> : vector<16x32xf32>
    %305 = tpu.matmul %303, %304, %cst_120 {dimension_numbers = #tpu.dot_dimension_numbers<[1], [0], [0], [1], [0, 0, 1, 1], [], []>} : vector<16x8xf32>, vector<8x32xf32>, vector<16x32xf32> -> vector<16x32xf32>
    %306 = arith.addf %287, %305 : vector<16x32xf32>
    %307 = vector.extract_strided_slice %256 {offsets = [0, 0, 16], sizes = [2, 8, 8], strides = [1, 1, 1]} : vector<2x8x32xf32> to vector<2x8x8xf32>
    %308 = vector.extract_strided_slice %265 {offsets = [0, 0, 16], sizes = [2, 16, 8], strides = [1, 1, 1]} : vector<2x16x32xf32> to vector<2x16x8xf32>
    %309 = vector.extract_strided_slice %266 {offsets = [0, 0, 16], sizes = [2, 16, 8], strides = [1, 1, 1]} : vector<2x16x32xf32> to vector<2x16x8xf32>
    "tpu.trace_start"() <{level = 10 : i32, message = "bqd,bkd->bqk"}> : () -> ()
    %cst_121 = arith.constant dense<0.000000e+00> : vector<2x8x16xf32>
    %310 = tpu.matmul %307, %308, %cst_121 {dimension_numbers = #tpu.dot_dimension_numbers<[2], [2], [1], [1], [0, 0, 0, 1, 1, 1], [0], [0]>} : vector<2x8x8xf32>, vector<2x16x8xf32>, vector<2x8x16xf32> -> vector<2x8x16xf32>
    "tpu.trace_stop"() : () -> ()
    %cst_122 = arith.constant dense<0xFF800000> : vector<2x8xf32>
    %311 = vector.multi_reduction <maximumf>, %310, %cst_122 [2] : vector<2x8x16xf32> to vector<2x8xf32>
    %312 = vector.shape_cast %311 : vector<2x8xf32> to vector<2x8x1xf32>
    %313 = vector.broadcast %312 : vector<2x8x1xf32> to vector<2x8x16xf32>
    %314 = arith.subf %310, %313 : vector<2x8x16xf32>
    %315 = math.exp %314 : vector<2x8x16xf32>
    %cst_123 = arith.constant dense<0.000000e+00> : vector<2x8xf32>
    %316 = vector.multi_reduction <add>, %315, %cst_123 [2] : vector<2x8x16xf32> to vector<2x8xf32>
    %317 = vector.shape_cast %316 : vector<2x8xf32> to vector<2x8x1xf32>
    %318 = tpu.reciprocal %317 {approx = true} : vector<2x8x1xf32> -> vector<2x8x1xf32>
    %319 = vector.broadcast %318 : vector<2x8x1xf32> to vector<2x8x16xf32>
    %320 = arith.mulf %315, %319 : vector<2x8x16xf32>
    "tpu.trace_start"() <{level = 10 : i32, message = "bqk,bkd->bqd"}> : () -> ()
    %cst_124 = arith.constant dense<0.000000e+00> : vector<2x8x8xf32>
    %321 = tpu.matmul %320, %309, %cst_124 {dimension_numbers = #tpu.dot_dimension_numbers<[2], [1], [1], [2], [0, 0, 0, 1, 1, 2], [0], [0]>} : vector<2x8x16xf32>, vector<2x16x8xf32>, vector<2x8x8xf32> -> vector<2x8x8xf32>
    "tpu.trace_stop"() : () -> ()
    %322 = vector.shape_cast %321 : vector<2x8x8xf32> to vector<16x8xf32>
    %323 = vector.extract_strided_slice %268 {offsets = [16, 0], sizes = [8, 32], strides = [1, 1]} : vector<32x32xf32> to vector<8x32xf32>
    %cst_125 = arith.constant dense<0.000000e+00> : vector<16x32xf32>
    %324 = tpu.matmul %322, %323, %cst_125 {dimension_numbers = #tpu.dot_dimension_numbers<[1], [0], [0], [1], [0, 0, 1, 1], [], []>} : vector<16x8xf32>, vector<8x32xf32>, vector<16x32xf32> -> vector<16x32xf32>
    %325 = arith.addf %306, %324 : vector<16x32xf32>
    %326 = vector.extract_strided_slice %256 {offsets = [0, 0, 24], sizes = [2, 8, 8], strides = [1, 1, 1]} : vector<2x8x32xf32> to vector<2x8x8xf32>
    %327 = vector.extract_strided_slice %265 {offsets = [0, 0, 24], sizes = [2, 16, 8], strides = [1, 1, 1]} : vector<2x16x32xf32> to vector<2x16x8xf32>
    %328 = vector.extract_strided_slice %266 {offsets = [0, 0, 24], sizes = [2, 16, 8], strides = [1, 1, 1]} : vector<2x16x32xf32> to vector<2x16x8xf32>
    "tpu.trace_start"() <{level = 10 : i32, message = "bqd,bkd->bqk"}> : () -> ()
    %cst_126 = arith.constant dense<0.000000e+00> : vector<2x8x16xf32>
    %329 = tpu.matmul %326, %327, %cst_126 {dimension_numbers = #tpu.dot_dimension_numbers<[2], [2], [1], [1], [0, 0, 0, 1, 1, 1], [0], [0]>} : vector<2x8x8xf32>, vector<2x16x8xf32>, vector<2x8x16xf32> -> vector<2x8x16xf32>
    "tpu.trace_stop"() : () -> ()
    %cst_127 = arith.constant dense<0xFF800000> : vector<2x8xf32>
    %330 = vector.multi_reduction <maximumf>, %329, %cst_127 [2] : vector<2x8x16xf32> to vector<2x8xf32>
    %331 = vector.shape_cast %330 : vector<2x8xf32> to vector<2x8x1xf32>
    %332 = vector.broadcast %331 : vector<2x8x1xf32> to vector<2x8x16xf32>
    %333 = arith.subf %329, %332 : vector<2x8x16xf32>
    %334 = math.exp %333 : vector<2x8x16xf32>
    %cst_128 = arith.constant dense<0.000000e+00> : vector<2x8xf32>
    %335 = vector.multi_reduction <add>, %334, %cst_128 [2] : vector<2x8x16xf32> to vector<2x8xf32>
    %336 = vector.shape_cast %335 : vector<2x8xf32> to vector<2x8x1xf32>
    %337 = tpu.reciprocal %336 {approx = true} : vector<2x8x1xf32> -> vector<2x8x1xf32>
    %338 = vector.broadcast %337 : vector<2x8x1xf32> to vector<2x8x16xf32>
    %339 = arith.mulf %334, %338 : vector<2x8x16xf32>
    "tpu.trace_start"() <{level = 10 : i32, message = "bqk,bkd->bqd"}> : () -> ()
    %cst_129 = arith.constant dense<0.000000e+00> : vector<2x8x8xf32>
    %340 = tpu.matmul %339, %328, %cst_129 {dimension_numbers = #tpu.dot_dimension_numbers<[2], [1], [1], [2], [0, 0, 0, 1, 1, 2], [0], [0]>} : vector<2x8x16xf32>, vector<2x16x8xf32>, vector<2x8x8xf32> -> vector<2x8x8xf32>
    "tpu.trace_stop"() : () -> ()
    %341 = vector.shape_cast %340 : vector<2x8x8xf32> to vector<16x8xf32>
    %342 = vector.extract_strided_slice %268 {offsets = [24, 0], sizes = [8, 32], strides = [1, 1]} : vector<32x32xf32> to vector<8x32xf32>
    %cst_130 = arith.constant dense<0.000000e+00> : vector<16x32xf32>
    %343 = tpu.matmul %341, %342, %cst_130 {dimension_numbers = #tpu.dot_dimension_numbers<[1], [0], [0], [1], [0, 0, 1, 1], [], []>} : vector<16x8xf32>, vector<8x32xf32>, vector<16x32xf32> -> vector<16x32xf32>
    %344 = arith.addf %325, %343 : vector<16x32xf32>
    %c1_131 = arith.constant 1 : index
    %c0_132 = arith.constant 0 : index
    %c0_133 = arith.constant 0 : index
    %345 = vector.load %arg10[%c1_131, %c0_132, %c0_133] : memref<2x1x32xf32, #tpu.memory_space<vmem>>, vector<1x1x32xf32>
    %346 = vector.shape_cast %345 : vector<1x1x32xf32> to vector<1x32xf32>
    %c1_134 = arith.constant 1 : index
    %c0_135 = arith.constant 0 : index
    %c0_136 = arith.constant 0 : index
    %347 = vector.load %arg11[%c1_134, %c0_135, %c0_136] : memref<2x1x32xf32, #tpu.memory_space<vmem>>, vector<1x1x32xf32>
    %348 = vector.shape_cast %347 : vector<1x1x32xf32> to vector<1x32xf32>
    %cst_137 = arith.constant dense<0.000000e+00> : vector<16xf32>
    %349 = vector.multi_reduction <add>, %344, %cst_137 [1] : vector<16x32xf32> to vector<16xf32>
    %350 = vector.shape_cast %349 : vector<16xf32> to vector<16x1xf32>
    %cst_138 = arith.constant 3.200000e+01 : f32
    %351 = vector.broadcast %cst_138 : f32 to vector<16x1xf32>
    %352 = arith.divf %350, %351 : vector<16x1xf32>
    %353 = vector.broadcast %352 : vector<16x1xf32> to vector<16x32xf32>
    %354 = arith.subf %344, %353 : vector<16x32xf32>
    %355 = arith.mulf %354, %354 : vector<16x32xf32>
    %cst_139 = arith.constant dense<0.000000e+00> : vector<16xf32>
    %356 = vector.multi_reduction <add>, %355, %cst_139 [1] : vector<16x32xf32> to vector<16xf32>
    %357 = vector.shape_cast %356 : vector<16xf32> to vector<16x1xf32>
    %cst_140 = arith.constant 3.200000e+01 : f32
    %358 = vector.broadcast %cst_140 : f32 to vector<16x1xf32>
    %359 = arith.divf %357, %358 : vector<16x1xf32>
    %360 = vector.broadcast %352 : vector<16x1xf32> to vector<16x32xf32>
    %361 = arith.subf %344, %360 : vector<16x32xf32>
    %cst_141 = arith.constant 9.99999974E-6 : f32
    %362 = vector.broadcast %cst_141 : f32 to vector<16x1xf32>
    %363 = arith.addf %359, %362 : vector<16x1xf32>
    %364 = math.rsqrt %363 : vector<16x1xf32>
    %365 = vector.broadcast %364 : vector<16x1xf32> to vector<16x32xf32>
    %366 = arith.mulf %361, %365 : vector<16x32xf32>
    %367 = vector.broadcast %346 : vector<1x32xf32> to vector<16x32xf32>
    %368 = arith.mulf %366, %367 : vector<16x32xf32>
    %369 = vector.broadcast %348 : vector<1x32xf32> to vector<16x32xf32>
    %370 = arith.addf %368, %369 : vector<16x32xf32>
    %c1_142 = arith.constant 1 : index
    %c0_143 = arith.constant 0 : index
    %c0_144 = arith.constant 0 : index
    %371 = vector.load %arg12[%c1_142, %c0_143, %c0_144] : memref<2x32x128xf32, #tpu.memory_space<vmem>>, vector<1x32x128xf32>
    %372 = vector.shape_cast %371 : vector<1x32x128xf32> to vector<32x128xf32>
    %cst_145 = arith.constant dense<0.000000e+00> : vector<16x128xf32>
    %373 = tpu.matmul %370, %372, %cst_145 {dimension_numbers = #tpu.dot_dimension_numbers<[1], [0], [0], [1], [0, 0, 1, 1], [], []>} : vector<16x32xf32>, vector<32x128xf32>, vector<16x128xf32> -> vector<16x128xf32>
    %cst_146 = arith.constant 5.000000e-01 : f32
    %374 = vector.broadcast %cst_146 : f32 to vector<16x128xf32>
    %375 = arith.mulf %374, %373 : vector<16x128xf32>
    %cst_147 = arith.constant 2.000000e+00 : f32
    %376 = math.sqrt %cst_147 : f32
    %377 = vector.broadcast %376 : f32 to vector<16x128xf32>
    %378 = arith.divf %373, %377 : vector<16x128xf32>
    %379 = math.erf %378 : vector<16x128xf32>
    %cst_148 = arith.constant 1.000000e+00 : f32
    %380 = vector.broadcast %cst_148 : f32 to vector<16x128xf32>
    %381 = arith.addf %380, %379 : vector<16x128xf32>
    %382 = arith.mulf %375, %381 : vector<16x128xf32>
    %c1_149 = arith.constant 1 : index
    %c0_150 = arith.constant 0 : index
    %c0_151 = arith.constant 0 : index
    %383 = vector.load %arg13[%c1_149, %c0_150, %c0_151] : memref<2x128x32xf32, #tpu.memory_space<vmem>>, vector<1x128x32xf32>
    %384 = vector.shape_cast %383 : vector<1x128x32xf32> to vector<128x32xf32>
    %cst_152 = arith.constant dense<0.000000e+00> : vector<16x32xf32>
    %385 = tpu.matmul %382, %384, %cst_152 {dimension_numbers = #tpu.dot_dimension_numbers<[1], [0], [0], [1], [0, 0, 1, 1], [], []>} : vector<16x128xf32>, vector<128x32xf32>, vector<16x32xf32> -> vector<16x32xf32>
    %386 = arith.addf %344, %385 : vector<16x32xf32>
    %c0_153 = arith.constant 0 : index
    %c0_154 = arith.constant 0 : index
    %387 = vector.load %arg14[%c0_153, %c0_154] : memref<1x32xf32, #tpu.memory_space<vmem>>, vector<1x32xf32>
    %c0_155 = arith.constant 0 : index
    %c0_156 = arith.constant 0 : index
    %388 = vector.load %arg15[%c0_155, %c0_156] : memref<1x32xf32, #tpu.memory_space<vmem>>, vector<1x32xf32>
    %cst_157 = arith.constant dense<0.000000e+00> : vector<16xf32>
    %389 = vector.multi_reduction <add>, %386, %cst_157 [1] : vector<16x32xf32> to vector<16xf32>
    %390 = vector.shape_cast %389 : vector<16xf32> to vector<16x1xf32>
    %cst_158 = arith.constant 3.200000e+01 : f32
    %391 = vector.broadcast %cst_158 : f32 to vector<16x1xf32>
    %392 = arith.divf %390, %391 : vector<16x1xf32>
    %393 = vector.broadcast %392 : vector<16x1xf32> to vector<16x32xf32>
    %394 = arith.subf %386, %393 : vector<16x32xf32>
    %395 = arith.mulf %394, %394 : vector<16x32xf32>
    %cst_159 = arith.constant dense<0.000000e+00> : vector<16xf32>
    %396 = vector.multi_reduction <add>, %395, %cst_159 [1] : vector<16x32xf32> to vector<16xf32>
    %397 = vector.shape_cast %396 : vector<16xf32> to vector<16x1xf32>
    %cst_160 = arith.constant 3.200000e+01 : f32
    %398 = vector.broadcast %cst_160 : f32 to vector<16x1xf32>
    %399 = arith.divf %397, %398 : vector<16x1xf32>
    %400 = vector.broadcast %392 : vector<16x1xf32> to vector<16x32xf32>
    %401 = arith.subf %386, %400 : vector<16x32xf32>
    %cst_161 = arith.constant 9.99999974E-6 : f32
    %402 = vector.broadcast %cst_161 : f32 to vector<16x1xf32>
    %403 = arith.addf %399, %402 : vector<16x1xf32>
    %404 = math.rsqrt %403 : vector<16x1xf32>
    %405 = vector.broadcast %404 : vector<16x1xf32> to vector<16x32xf32>
    %406 = arith.mulf %401, %405 : vector<16x32xf32>
    %407 = vector.broadcast %387 : vector<1x32xf32> to vector<16x32xf32>
    %408 = arith.mulf %406, %407 : vector<16x32xf32>
    %409 = vector.broadcast %388 : vector<1x32xf32> to vector<16x32xf32>
    %410 = arith.addf %408, %409 : vector<16x32xf32>
    %c0_162 = arith.constant 0 : index
    %c0_163 = arith.constant 0 : index
    %411 = vector.load %arg16[%c0_162, %c0_163] : memref<16x32xf32, #tpu.memory_space<vmem>>, vector<16x32xf32>
    tpu.vector_store %arg16[%c0_162, %c0_163], %410 {strides = array<i32>} : memref<16x32xf32, #tpu.memory_space<vmem>>, vector<16x32xf32>,
    return
  }
  func.func @transform_0(%arg0: i32) -> (i32, i32) {
    %c0_i32 = arith.constant 0 : i32
    %c0_i32_0 = arith.constant 0 : i32
    return %arg0, %c0_i32 : i32, i32
  }
  func.func @transform_1(%arg0: i32) -> (i32, i32) {
    %c0_i32 = arith.constant 0 : i32
    %c0_i32_0 = arith.constant 0 : i32
    %c0_i32_1 = arith.constant 0 : i32
    return %c0_i32, %c0_i32_0 : i32, i32
  }
  func.func @transform_2(%arg0: i32) -> (i32, i32, i32) {
    %c0_i32 = arith.constant 0 : i32
    %c0_i32_0 = arith.constant 0 : i32
    %c0_i32_1 = arith.constant 0 : i32
    %c0_i32_2 = arith.constant 0 : i32
    return %c0_i32, %c0_i32_0, %c0_i32_1 : i32, i32, i32
  }
  func.func @transform_3(%arg0: i32) -> (i32, i32, i32) {
    %c0_i32 = arith.constant 0 : i32
    %c0_i32_0 = arith.constant 0 : i32
    %c0_i32_1 = arith.constant 0 : i32
    %c0_i32_2 = arith.constant 0 : i32
    return %c0_i32, %c0_i32_0, %c0_i32_1 : i32, i32, i32
  }
  func.func @transform_4(%arg0: i32) -> (i32, i32, i32) {
    %c0_i32 = arith.constant 0 : i32
    %c0_i32_0 = arith.constant 0 : i32
    %c0_i32_1 = arith.constant 0 : i32
    %c0_i32_2 = arith.constant 0 : i32
    return %c0_i32, %c0_i32_0, %c0_i32_1 : i32, i32, i32
  }
  func.func @transform_5(%arg0: i32) -> (i32, i32, i32) {
    %c0_i32 = arith.constant 0 : i32
    %c0_i32_0 = arith.constant 0 : i32
    %c0_i32_1 = arith.constant 0 : i32
    %c0_i32_2 = arith.constant 0 : i32
    return %c0_i32, %c0_i32_0, %c0_i32_1 : i32, i32, i32
  }
  func.func @transform_6(%arg0: i32) -> (i32, i32, i32) {
    %c0_i32 = arith.constant 0 : i32
    %c0_i32_0 = arith.constant 0 : i32
    %c0_i32_1 = arith.constant 0 : i32
    %c0_i32_2 = arith.constant 0 : i32
    return %c0_i32, %c0_i32_0, %c0_i32_1 : i32, i32, i32
  }
  func.func @transform_7(%arg0: i32) -> (i32, i32, i32) {
    %c0_i32 = arith.constant 0 : i32
    %c0_i32_0 = arith.constant 0 : i32
    %c0_i32_1 = arith.constant 0 : i32
    %c0_i32_2 = arith.constant 0 : i32
    return %c0_i32, %c0_i32_0, %c0_i32_1 : i32, i32, i32
  }
  func.func @transform_8(%arg0: i32) -> (i32, i32, i32) {
    %c0_i32 = arith.constant 0 : i32
    %c0_i32_0 = arith.constant 0 : i32
    %c0_i32_1 = arith.constant 0 : i32
    %c0_i32_2 = arith.constant 0 : i32
    return %c0_i32, %c0_i32_0, %c0_i32_1 : i32, i32, i32
  }
  func.func @transform_9(%arg0: i32) -> (i32, i32, i32) {
    %c0_i32 = arith.constant 0 : i32
    %c0_i32_0 = arith.constant 0 : i32
    %c0_i32_1 = arith.constant 0 : i32
    %c0_i32_2 = arith.constant 0 : i32
    return %c0_i32, %c0_i32_0, %c0_i32_1 : i32, i32, i32
  }
  func.func @transform_10(%arg0: i32) -> (i32, i32, i32) {
    %c0_i32 = arith.constant 0 : i32
    %c0_i32_0 = arith.constant 0 : i32
    %c0_i32_1 = arith.constant 0 : i32
    %c0_i32_2 = arith.constant 0 : i32
    return %c0_i32, %c0_i32_0, %c0_i32_1 : i32, i32, i32
  }
  func.func @transform_11(%arg0: i32) -> (i32, i32, i32) {
    %c0_i32 = arith.constant 0 : i32
    %c0_i32_0 = arith.constant 0 : i32
    %c0_i32_1 = arith.constant 0 : i32
    %c0_i32_2 = arith.constant 0 : i32
    return %c0_i32, %c0_i32_0, %c0_i32_1 : i32, i32, i32
  }
  func.func @transform_12(%arg0: i32) -> (i32, i32, i32) {
    %c0_i32 = arith.constant 0 : i32
    %c0_i32_0 = arith.constant 0 : i32
    %c0_i32_1 = arith.constant 0 : i32
    %c0_i32_2 = arith.constant 0 : i32
    return %c0_i32, %c0_i32_0, %c0_i32_1 : i32, i32, i32
  }
  func.func @transform_13(%arg0: i32) -> (i32, i32) {
    %c0_i32 = arith.constant 0 : i32
    %c0_i32_0 = arith.constant 0 : i32
    %c0_i32_1 = arith.constant 0 : i32
    return %c0_i32, %c0_i32_0 : i32, i32
  }
  func.func @transform_14(%arg0: i32) -> (i32, i32) {
    %c0_i32 = arith.constant 0 : i32
    %c0_i32_0 = arith.constant 0 : i32
    %c0_i32_1 = arith.constant 0 : i32
    return %c0_i32, %c0_i32_0 : i32, i32
  }
  func.func @transform_15(%arg0: i32) -> (i32, i32) {
    %c0_i32 = arith.constant 0 : i32
    %c0_i32_0 = arith.constant 0 : i32
    return %arg0, %c0_i32 : i32, i32
  }
}

</mosaic_0001>

<llo_original>
// kernel: tpu_custom_call.1
$region0: #{tpu_custom_call.1}
  #allocation0 [shape = 'u32[]', space=smem, size = 0x4, offset = 0x4, fixed_abs, tag = 'smem constant byte address 0x4 - core index']
  #allocation1 [shape = 'u32[72,128]{1,0:T(1,128)}', space=vmem, size = 0x9000, scoped, tag = 'internal scratch']
  %s0 = inlined_call_operand.vmem [shape: f32[32,32], index: 0, kind: input, shape index: {}]
  %s1 = inlined_call_operand.vmem [shape: f32[8,32], index: 1, kind: input, shape index: {}]
  %s2 = inlined_call_operand.vmem [shape: f32[2,1,32], index: 2, kind: input, shape index: {}]
  %s3 = inlined_call_operand.vmem [shape: f32[2,1,32], index: 3, kind: input, shape index: {}]
  %s4 = inlined_call_operand.vmem [shape: f32[2,1,32], index: 4, kind: input, shape index: {}]
  %s5 = inlined_call_operand.vmem [shape: f32[2,1,32], index: 5, kind: input, shape index: {}]
  %s6 = inlined_call_operand.vmem [shape: f32[2,32,96], index: 6, kind: input, shape index: {}]
  %s7 = inlined_call_operand.vmem [shape: f32[2,32,64], index: 7, kind: input, shape index: {}]
  %s8 = inlined_call_operand.vmem [shape: f32[2,32,32], index: 8, kind: input, shape index: {}]
  %s9 = inlined_call_operand.vmem [shape: f32[2,1,32], index: 9, kind: input, shape index: {}]
  %s10 = inlined_call_operand.vmem [shape: f32[2,1,32], index: 10, kind: input, shape index: {}]
  %s11 = inlined_call_operand.vmem [shape: f32[2,32,128], index: 11, kind: input, shape index: {}]
  %s12 = inlined_call_operand.vmem [shape: f32[2,128,32], index: 12, kind: input, shape index: {}]
  %s13 = inlined_call_operand.vmem [shape: f32[1,32], index: 13, kind: input, shape index: {}]
  %s14 = inlined_call_operand.vmem [shape: f32[1,32], index: 14, kind: input, shape index: {}]
  %s15 = inlined_call_operand.hbm [shape: f32[32,32], index: 15, kind: output, shape index: {}]
  %s16 = sld [smem:[#allocation0]]
  $region93: #{tpu_custom_call.1} parent=0
    _
  %s18 = ssub.s32 1, %s16
  %s19 = scalar_select 0, %s18, %s16
  $region1: #{tpu_custom_call.1} parent=0
    #allocation2 [shape = 'u8[16384]{0}', space=vmem, size = 0x4000, scoped, tag = 'output window, operand 0']
    #allocation3 [shape = 's32[2]{0}', space=sflag, size = 0x8, scoped, tag = 'scoped memory for tpu_custom_call.1']
    %20 = vsyncpa [#allocation3], 0
    %s21 = scalar_lea.sflag [#allocation3], 1
    %22 = vsyncpa %s21, 0
    loop: start=0, step=1, limit=4
    $region2: #{tpu_custom_call.1} parent=1 // loop_pre_header
      _
    $region3: #{tpu_custom_call.1} parent=1 // loop_header
      %s24 = sphi 0, %s28
      %p25 = scmp.ge.s32.totalorder %s24, 4
      %s34 = sphi 0, %s36
      %s37 = sphi 0, %s34
      %s38 = sphi 0, %s37
      %s54 = sphi 0, %s38
      %s58 = sphi 0, %s58
      %s60 = sphi 0, %s58
      %s61 = sphi 0, %s60
      %s75 = sphi 0, %s61
      %s79 = sphi 0, %s79
      %s81 = sphi 0, %s79
      %s82 = sphi 0, %s81
      %s96 = sphi 0, %s82
      %s100 = sphi 0, %s100
      %s102 = sphi 0, %s100
      %s103 = sphi 0, %s102
      %s117 = sphi 0, %s103
      %s121 = sphi 0, %s121
      %s123 = sphi 0, %s121
      %s124 = sphi 0, %s123
      %s138 = sphi 0, %s124
      %s142 = sphi 0, %s142
      %s144 = sphi 0, %s142
      %s145 = sphi 0, %s144
      %s159 = sphi 0, %s145
      %s163 = sphi 0, %s163
      %s165 = sphi 0, %s163
      %s166 = sphi 0, %s165
      %s180 = sphi 0, %s166
      %s184 = sphi 0, %s184
      %s186 = sphi 0, %s184
      %s187 = sphi 0, %s186
      %s201 = sphi 0, %s187
      %s205 = sphi 0, %s205
      %s207 = sphi 0, %s205
      %s208 = sphi 0, %s207
      %s222 = sphi 0, %s208
      %s226 = sphi 0, %s226
      %s228 = sphi 0, %s226
      %s229 = sphi 0, %s228
      %s243 = sphi 0, %s229
      %s247 = sphi 0, %s247
      %s249 = sphi 0, %s247
      %s250 = sphi 0, %s249
      %s264 = sphi 0, %s250
      %s268 = sphi 0, %s268
      %s270 = sphi 0, %s268
      %s271 = sphi 0, %s270
      %s285 = sphi 0, %s271
      %s289 = sphi 0, %s289
      %s291 = sphi 0, %s289
      %s292 = sphi 0, %s291
      %s306 = sphi 0, %s292
      %s310 = sphi 0, %s310
      %s312 = sphi 0, %s310
      %s313 = sphi 0, %s312
      %s327 = sphi 0, %s313
      %s331 = sphi 0, %s331
      %s333 = sphi 0, %s331
      %s334 = sphi 0, %s333
      %s348 = sphi 0, %s334
      %s354 = sphi 0, %s356
      %s357 = sphi 0, %s354
      %s358 = sphi 0, %s357
      %s374 = sphi 0, %s358
    $region4: #{tpu_custom_call.1} parent=1 // loop_header_branch
      %27 = sbr.rel (%p25) target = $region8
    $region5: #{tpu_custom_call.1} parent=1 // loop_body
      %s29 = ssub.s32 %s24, 1
      %s30 = ssub.s32 %s24, 2
      %s31 = sadd.s32 %s24, 1
      %s32 = ssub.s32 %s24, %s31
      %p33 = scmp.eq.s32.totalorder %s32, 0
      %s35 = sadd.s32 %s34, 1
      %s36 = scalar_select %p33, %s34, %s35
      %p39 = pneg %p33
      %p40 = scmp.eq.s32.totalorder %s24, 1
      %p41 = por %p39, %p40
      %p42 = scmp.ne.s32.totalorder %s34, %s37
      %p43 = scmp.eq.s32.totalorder %s24, 0
      %p44 = por %p42, %p43
      %p45 = scmp.ne.s32.totalorder %s34, %s37
      %p46 = scmp.eq.s32.totalorder %s29, 1
      %p47 = por %p45, %p46
      %p48 = scmp.ne.s32.totalorder %s37, %s38
      %p49 = scmp.eq.s32.totalorder %s29, 0
      %p50 = por %p48, %p49
      %p51 = scmp.ne.s32.totalorder %s37, %s38
      %p52 = scmp.eq.s32.totalorder %s30, 1
      %p53 = por %p51, %p52
      %p55 = scmp.ne.s32.totalorder %s38, %s54
      %p56 = scmp.eq.s32.totalorder %s30, 0
      %p57 = por %p55, %p56
      %s59 = sadd.s32 %s58, 1
      %p62 = scmp.eq.s32.totalorder %s24, 1
      %p63 = scmp.ne.s32.totalorder %s58, %s60
      %p64 = scmp.eq.s32.totalorder %s24, 0
      %p65 = por %p63, %p64
      %p66 = scmp.ne.s32.totalorder %s58, %s60
      %p67 = scmp.eq.s32.totalorder %s29, 1
      %p68 = por %p66, %p67
      %p69 = scmp.ne.s32.totalorder %s60, %s61
      %p70 = scmp.eq.s32.totalorder %s29, 0
      %p71 = por %p69, %p70
      %p72 = scmp.ne.s32.totalorder %s60, %s61
      %p73 = scmp.eq.s32.totalorder %s30, 1
      %p74 = por %p72, %p73
      %p76 = scmp.ne.s32.totalorder %s61, %s75
      %p77 = scmp.eq.s32.totalorder %s30, 0
      %p78 = por %p76, %p77
      %s80 = sadd.s32 %s79, 1
      %p83 = scmp.eq.s32.totalorder %s24, 1
      %p84 = scmp.ne.s32.totalorder %s79, %s81
      %p85 = scmp.eq.s32.totalorder %s24, 0
      %p86 = por %p84, %p85
      %p87 = scmp.ne.s32.totalorder %s79, %s81
      %p88 = scmp.eq.s32.totalorder %s29, 1
      %p89 = por %p87, %p88
      %p90 = scmp.ne.s32.totalorder %s81, %s82
      %p91 = scmp.eq.s32.totalorder %s29, 0
      %p92 = por %p90, %p91
      %p93 = scmp.ne.s32.totalorder %s81, %s82
      %p94 = scmp.eq.s32.totalorder %s30, 1
      %p95 = por %p93, %p94
      %p97 = scmp.ne.s32.totalorder %s82, %s96
      %p98 = scmp.eq.s32.totalorder %s30, 0
      %p99 = por %p97, %p98
      %s101 = sadd.s32 %s100, 1
      %p104 = scmp.eq.s32.totalorder %s24, 1
      %p105 = scmp.ne.s32.totalorder %s100, %s102
      %p106 = scmp.eq.s32.totalorder %s24, 0
      %p107 = por %p105, %p106
      %p108 = scmp.ne.s32.totalorder %s100, %s102
      %p109 = scmp.eq.s32.totalorder %s29, 1
      %p110 = por %p108, %p109
      %p111 = scmp.ne.s32.totalorder %s102, %s103
      %p112 = scmp.eq.s32.totalorder %s29, 0
      %p113 = por %p111, %p112
      %p114 = scmp.ne.s32.totalorder %s102, %s103
      %p115 = scmp.eq.s32.totalorder %s30, 1
      %p116 = por %p114, %p115
      %p118 = scmp.ne.s32.totalorder %s103, %s117
      %p119 = scmp.eq.s32.totalorder %s30, 0
      %p120 = por %p118, %p119
      %s122 = sadd.s32 %s121, 1
      %p125 = scmp.eq.s32.totalorder %s24, 1
      %p126 = scmp.ne.s32.totalorder %s121, %s123
      %p127 = scmp.eq.s32.totalorder %s24, 0
      %p128 = por %p126, %p127
      %p129 = scmp.ne.s32.totalorder %s121, %s123
      %p130 = scmp.eq.s32.totalorder %s29, 1
      %p131 = por %p129, %p130
      %p132 = scmp.ne.s32.totalorder %s123, %s124
      %p133 = scmp.eq.s32.totalorder %s29, 0
      %p134 = por %p132, %p133
      %p135 = scmp.ne.s32.totalorder %s123, %s124
      %p136 = scmp.eq.s32.totalorder %s30, 1
      %p137 = por %p135, %p136
      %p139 = scmp.ne.s32.totalorder %s124, %s138
      %p140 = scmp.eq.s32.totalorder %s30, 0
      %p141 = por %p139, %p140
      %s143 = sadd.s32 %s142, 1
      %p146 = scmp.eq.s32.totalorder %s24, 1
      %p147 = scmp.ne.s32.totalorder %s142, %s144
      %p148 = scmp.eq.s32.totalorder %s24, 0
      %p149 = por %p147, %p148
      %p150 = scmp.ne.s32.totalorder %s142, %s144
      %p151 = scmp.eq.s32.totalorder %s29, 1
      %p152 = por %p150, %p151
      %p153 = scmp.ne.s32.totalorder %s144, %s145
      %p154 = scmp.eq.s32.totalorder %s29, 0
      %p155 = por %p153, %p154
      %p156 = scmp.ne.s32.totalorder %s144, %s145
      %p157 = scmp.eq.s32.totalorder %s30, 1
      %p158 = por %p156, %p157
      %p160 = scmp.ne.s32.totalorder %s145, %s159
      %p161 = scmp.eq.s32.totalorder %s30, 0
      %p162 = por %p160, %p161
      %s164 = sadd.s32 %s163, 1
      %p167 = scmp.eq.s32.totalorder %s24, 1
      %p168 = scmp.ne.s32.totalorder %s163, %s165
      %p169 = scmp.eq.s32.totalorder %s24, 0
      %p170 = por %p168, %p169
      %p171 = scmp.ne.s32.totalorder %s163, %s165
      %p172 = scmp.eq.s32.totalorder %s29, 1
      %p173 = por %p171, %p172
      %p174 = scmp.ne.s32.totalorder %s165, %s166
      %p175 = scmp.eq.s32.totalorder %s29, 0
      %p176 = por %p174, %p175
      %p177 = scmp.ne.s32.totalorder %s165, %s166
      %p178 = scmp.eq.s32.totalorder %s30, 1
      %p179 = por %p177, %p178
      %p181 = scmp.ne.s32.totalorder %s166, %s180
      %p182 = scmp.eq.s32.totalorder %s30, 0
      %p183 = por %p181, %p182
      %s185 = sadd.s32 %s184, 1
      %p188 = scmp.eq.s32.totalorder %s24, 1
      %p189 = scmp.ne.s32.totalorder %s184, %s186
      %p190 = scmp.eq.s32.totalorder %s24, 0
      %p191 = por %p189, %p190
      %p192 = scmp.ne.s32.totalorder %s184, %s186
      %p193 = scmp.eq.s32.totalorder %s29, 1
      %p194 = por %p192, %p193
      %p195 = scmp.ne.s32.totalorder %s186, %s187
      %p196 = scmp.eq.s32.totalorder %s29, 0
      %p197 = por %p195, %p196
      %p198 = scmp.ne.s32.totalorder %s186, %s187
      %p199 = scmp.eq.s32.totalorder %s30, 1
      %p200 = por %p198, %p199
      %p202 = scmp.ne.s32.totalorder %s187, %s201
      %p203 = scmp.eq.s32.totalorder %s30, 0
      %p204 = por %p202, %p203
      %s206 = sadd.s32 %s205, 1
      %p209 = scmp.eq.s32.totalorder %s24, 1
      %p210 = scmp.ne.s32.totalorder %s205, %s207
      %p211 = scmp.eq.s32.totalorder %s24, 0
      %p212 = por %p210, %p211
      %p213 = scmp.ne.s32.totalorder %s205, %s207
      %p214 = scmp.eq.s32.totalorder %s29, 1
      %p215 = por %p213, %p214
      %p216 = scmp.ne.s32.totalorder %s207, %s208
      %p217 = scmp.eq.s32.totalorder %s29, 0
      %p218 = por %p216, %p217
      %p219 = scmp.ne.s32.totalorder %s207, %s208
      %p220 = scmp.eq.s32.totalorder %s30, 1
      %p221 = por %p219, %p220
      %p223 = scmp.ne.s32.totalorder %s208, %s222
      %p224 = scmp.eq.s32.totalorder %s30, 0
      %p225 = por %p223, %p224
      %s227 = sadd.s32 %s226, 1
      %p230 = scmp.eq.s32.totalorder %s24, 1
      %p231 = scmp.ne.s32.totalorder %s226, %s228
      %p232 = scmp.eq.s32.totalorder %s24, 0
      %p233 = por %p231, %p232
      %p234 = scmp.ne.s32.totalorder %s226, %s228
      %p235 = scmp.eq.s32.totalorder %s29, 1
      %p236 = por %p234, %p235
      %p237 = scmp.ne.s32.totalorder %s228, %s229
      %p238 = scmp.eq.s32.totalorder %s29, 0
      %p239 = por %p237, %p238
      %p240 = scmp.ne.s32.totalorder %s228, %s229
      %p241 = scmp.eq.s32.totalorder %s30, 1
      %p242 = por %p240, %p241
      %p244 = scmp.ne.s32.totalorder %s229, %s243
      %p245 = scmp.eq.s32.totalorder %s30, 0
      %p246 = por %p244, %p245
      %s248 = sadd.s32 %s247, 1
      %p251 = scmp.eq.s32.totalorder %s24, 1
      %p252 = scmp.ne.s32.totalorder %s247, %s249
      %p253 = scmp.eq.s32.totalorder %s24, 0
      %p254 = por %p252, %p253
      %p255 = scmp.ne.s32.totalorder %s247, %s249
      %p256 = scmp.eq.s32.totalorder %s29, 1
      %p257 = por %p255, %p256
      %p258 = scmp.ne.s32.totalorder %s249, %s250
      %p259 = scmp.eq.s32.totalorder %s29, 0
      %p260 = por %p258, %p259
      %p261 = scmp.ne.s32.totalorder %s249, %s250
      %p262 = scmp.eq.s32.totalorder %s30, 1
      %p263 = por %p261, %p262
      %p265 = scmp.ne.s32.totalorder %s250, %s264
      %p266 = scmp.eq.s32.totalorder %s30, 0
      %p267 = por %p265, %p266
      %s269 = sadd.s32 %s268, 1
      %p272 = scmp.eq.s32.totalorder %s24, 1
      %p273 = scmp.ne.s32.totalorder %s268, %s270
      %p274 = scmp.eq.s32.totalorder %s24, 0
      %p275 = por %p273, %p274
      %p276 = scmp.ne.s32.totalorder %s268, %s270
      %p277 = scmp.eq.s32.totalorder %s29, 1
      %p278 = por %p276, %p277
      %p279 = scmp.ne.s32.totalorder %s270, %s271
      %p280 = scmp.eq.s32.totalorder %s29, 0
      %p281 = por %p279, %p280
      %p282 = scmp.ne.s32.totalorder %s270, %s271
      %p283 = scmp.eq.s32.totalorder %s30, 1
      %p284 = por %p282, %p283
      %p286 = scmp.ne.s32.totalorder %s271, %s285
      %p287 = scmp.eq.s32.totalorder %s30, 0
      %p288 = por %p286, %p287
      %s290 = sadd.s32 %s289, 1
      %p293 = scmp.eq.s32.totalorder %s24, 1
      %p294 = scmp.ne.s32.totalorder %s289, %s291
      %p295 = scmp.eq.s32.totalorder %s24, 0
      %p296 = por %p294, %p295
      %p297 = scmp.ne.s32.totalorder %s289, %s291
      %p298 = scmp.eq.s32.totalorder %s29, 1
      %p299 = por %p297, %p298
      %p300 = scmp.ne.s32.totalorder %s291, %s292
      %p301 = scmp.eq.s32.totalorder %s29, 0
      %p302 = por %p300, %p301
      %p303 = scmp.ne.s32.totalorder %s291, %s292
      %p304 = scmp.eq.s32.totalorder %s30, 1
      %p305 = por %p303, %p304
      %p307 = scmp.ne.s32.totalorder %s292, %s306
      %p308 = scmp.eq.s32.totalorder %s30, 0
      %p309 = por %p307, %p308
      %s311 = sadd.s32 %s310, 1
      %p314 = scmp.eq.s32.totalorder %s24, 1
      %p315 = scmp.ne.s32.totalorder %s310, %s312
      %p316 = scmp.eq.s32.totalorder %s24, 0
      %p317 = por %p315, %p316
      %p318 = scmp.ne.s32.totalorder %s310, %s312
      %p319 = scmp.eq.s32.totalorder %s29, 1
      %p320 = por %p318, %p319
      %p321 = scmp.ne.s32.totalorder %s312, %s313
      %p322 = scmp.eq.s32.totalorder %s29, 0
      %p323 = por %p321, %p322
      %p324 = scmp.ne.s32.totalorder %s312, %s313
      %p325 = scmp.eq.s32.totalorder %s30, 1
      %p326 = por %p324, %p325
      %p328 = scmp.ne.s32.totalorder %s313, %s327
      %p329 = scmp.eq.s32.totalorder %s30, 0
      %p330 = por %p328, %p329
      %s332 = sadd.s32 %s331, 1
      %p335 = scmp.eq.s32.totalorder %s24, 1
      %p336 = scmp.ne.s32.totalorder %s331, %s333
      %p337 = scmp.eq.s32.totalorder %s24, 0
      %p338 = por %p336, %p337
      %p339 = scmp.ne.s32.totalorder %s331, %s333
      %p340 = scmp.eq.s32.totalorder %s29, 1
      %p341 = por %p339, %p340
      %p342 = scmp.ne.s32.totalorder %s333, %s334
      %p343 = scmp.eq.s32.totalorder %s29, 0
      %p344 = por %p342, %p343
      %p345 = scmp.ne.s32.totalorder %s333, %s334
      %p346 = scmp.eq.s32.totalorder %s30, 1
      %p347 = por %p345, %p346
      %p349 = scmp.ne.s32.totalorder %s334, %s348
      %p350 = scmp.eq.s32.totalorder %s30, 0
      %p351 = por %p349, %p350
      %s352 = ssub.s32 %s24, %s31
      %p353 = scmp.eq.s32.totalorder %s352, 0
      %s355 = sadd.s32 %s354, 1
      %s356 = scalar_select %p353, %s354, %s355
      %p359 = pneg %p353
      %p360 = scmp.eq.s32.totalorder %s24, 1
      %p361 = por %p359, %p360
      %p362 = scmp.ne.s32.totalorder %s354, %s357
      %p363 = scmp.eq.s32.totalorder %s24, 0
      %p364 = por %p362, %p363
      %p365 = scmp.ne.s32.totalorder %s354, %s357
      %p366 = scmp.eq.s32.totalorder %s29, 1
      %p367 = por %p365, %p366
      %p368 = scmp.ne.s32.totalorder %s357, %s358
      %p369 = scmp.eq.s32.totalorder %s29, 0
      %p370 = por %p368, %p369
      %p371 = scmp.ne.s32.totalorder %s357, %s358
      %p372 = scmp.eq.s32.totalorder %s30, 1
      %p373 = por %p371, %p372
      %p375 = scmp.ne.s32.totalorder %s358, %s374
      %p376 = scmp.eq.s32.totalorder %s30, 0
      %p377 = por %p375, %p376
      %p378 = scmp.le.s32.totalorder 1, %s24
      %p379 = scmp.lt.s32.totalorder %s24, 3
      %p380 = pnand %p378, %p379
      %p381 = pneg %p380
      // Predicated region
      $region9: #{tpu_custom_call.1} parent=5 // pred_check
        _
      $region10: #{tpu_custom_call.1} parent=5 // pred_check_branch
        %383 = sbr.rel (%p380) target = $region12
      $region11: #{tpu_custom_call.1} parent=5 // pred_region
        %s384 = ssub.s32 %s24, 1
        // Predicated region
        $region13: #{tpu_custom_call.1} parent=11 // pred_check
          %p385 = pneg %p71
        $region14: #{tpu_custom_call.1} parent=11 // pred_check_branch
          %387 = sbr.rel (%p385) target = $region16
        $region15: #{tpu_custom_call.1} parent=11 // pred_region
          _
        $region16: #{tpu_custom_call.1} parent=11 // pred_fallthru
          _
        // Predicated region
        $region17: #{tpu_custom_call.1} parent=11 // pred_check
          %p388 = pneg %p92
        $region18: #{tpu_custom_call.1} parent=11 // pred_check_branch
          %390 = sbr.rel (%p388) target = $region20
        $region19: #{tpu_custom_call.1} parent=11 // pred_region
          _
        $region20: #{tpu_custom_call.1} parent=11 // pred_fallthru
          _
        // Predicated region
        $region21: #{tpu_custom_call.1} parent=11 // pred_check
          %p391 = pneg %p113
        $region22: #{tpu_custom_call.1} parent=11 // pred_check_branch
          %393 = sbr.rel (%p391) target = $region24
        $region23: #{tpu_custom_call.1} parent=11 // pred_region
          _
        $region24: #{tpu_custom_call.1} parent=11 // pred_fallthru
          _
        // Predicated region
        $region25: #{tpu_custom_call.1} parent=11 // pred_check
          %p394 = pneg %p134
        $region26: #{tpu_custom_call.1} parent=11 // pred_check_branch
          %396 = sbr.rel (%p394) target = $region28
        $region27: #{tpu_custom_call.1} parent=11 // pred_region
          _
        $region28: #{tpu_custom_call.1} parent=11 // pred_fallthru
          _
        // Predicated region
        $region29: #{tpu_custom_call.1} parent=11 // pred_check
          %p397 = pneg %p155
        $region30: #{tpu_custom_call.1} parent=11 // pred_check_branch
          %399 = sbr.rel (%p397) target = $region32
        $region31: #{tpu_custom_call.1} parent=11 // pred_region
          _
        $region32: #{tpu_custom_call.1} parent=11 // pred_fallthru
          _
        // Predicated region
        $region33: #{tpu_custom_call.1} parent=11 // pred_check
          %p400 = pneg %p176
        $region34: #{tpu_custom_call.1} parent=11 // pred_check_branch
          %402 = sbr.rel (%p400) target = $region36
        $region35: #{tpu_custom_call.1} parent=11 // pred_region
          _
        $region36: #{tpu_custom_call.1} parent=11 // pred_fallthru
          _
        // Predicated region
        $region37: #{tpu_custom_call.1} parent=11 // pred_check
          %p403 = pneg %p197
        $region38: #{tpu_custom_call.1} parent=11 // pred_check_branch
          %405 = sbr.rel (%p403) target = $region40
        $region39: #{tpu_custom_call.1} parent=11 // pred_region
          _
        $region40: #{tpu_custom_call.1} parent=11 // pred_fallthru
          _
        // Predicated region
        $region41: #{tpu_custom_call.1} parent=11 // pred_check
          %p406 = pneg %p218
        $region42: #{tpu_custom_call.1} parent=11 // pred_check_branch
          %408 = sbr.rel (%p406) target = $region44
        $region43: #{tpu_custom_call.1} parent=11 // pred_region
          _
        $region44: #{tpu_custom_call.1} parent=11 // pred_fallthru
          _
        // Predicated region
        $region45: #{tpu_custom_call.1} parent=11 // pred_check
          %p409 = pneg %p239
        $region46: #{tpu_custom_call.1} parent=11 // pred_check_branch
          %411 = sbr.rel (%p409) target = $region48
        $region47: #{tpu_custom_call.1} parent=11 // pred_region
          _
        $region48: #{tpu_custom_call.1} parent=11 // pred_fallthru
          _
        // Predicated region
        $region49: #{tpu_custom_call.1} parent=11 // pred_check
          %p412 = pneg %p260
        $region50: #{tpu_custom_call.1} parent=11 // pred_check_branch
          %414 = sbr.rel (%p412) target = $region52
        $region51: #{tpu_custom_call.1} parent=11 // pred_region
          _
        $region52: #{tpu_custom_call.1} parent=11 // pred_fallthru
          _
        // Predicated region
        $region53: #{tpu_custom_call.1} parent=11 // pred_check
          %p415 = pneg %p281
        $region54: #{tpu_custom_call.1} parent=11 // pred_check_branch
          %417 = sbr.rel (%p415) target = $region56
        $region55: #{tpu_custom_call.1} parent=11 // pred_region
          _
        $region56: #{tpu_custom_call.1} parent=11 // pred_fallthru
          _
        // Predicated region
        $region57: #{tpu_custom_call.1} parent=11 // pred_check
          %p418 = pneg %p302
        $region58: #{tpu_custom_call.1} parent=11 // pred_check_branch
          %420 = sbr.rel (%p418) target = $region60
        $region59: #{tpu_custom_call.1} parent=11 // pred_region
          _
        $region60: #{tpu_custom_call.1} parent=11 // pred_fallthru
          _
        // Predicated region
        $region61: #{tpu_custom_call.1} parent=11 // pred_check
          %p421 = pneg %p323
        $region62: #{tpu_custom_call.1} parent=11 // pred_check_branch
          %423 = sbr.rel (%p421) target = $region64
        $region63: #{tpu_custom_call.1} parent=11 // pred_region
          _
        $region64: #{tpu_custom_call.1} parent=11 // pred_fallthru
          _
        // Predicated region
        $region65: #{tpu_custom_call.1} parent=11 // pred_check
          %p424 = pneg %p344
        $region66: #{tpu_custom_call.1} parent=11 // pred_check_branch
          %426 = sbr.rel (%p424) target = $region68
        $region67: #{tpu_custom_call.1} parent=11 // pred_region
          _
        $region68: #{tpu_custom_call.1} parent=11 // pred_fallthru
          _
      $region12: #{tpu_custom_call.1} parent=5 // pred_fallthru
        _
      %p427 = scmp.lt.s32.totalorder %s24, 2
      // Predicated region
      $region69: #{tpu_custom_call.1} parent=5 // pred_check
        %p428 = pneg %p427
      $region70: #{tpu_custom_call.1} parent=5 // pred_check_branch
        %430 = sbr.rel (%p428) target = $region72
      $region71: #{tpu_custom_call.1} parent=5 // pred_region
        // Predicated region
        $region73: #{tpu_custom_call.1} parent=71 // pred_check
          %p431 = pneg %p44
        $region74: #{tpu_custom_call.1} parent=71 // pred_check_branch
          %433 = sbr.rel (%p431) target = $region76
        $region75: #{tpu_custom_call.1} parent=71 // pred_region
          %s434 = smul.u32 2, %s24
          %p435 = scmp.lt.s32.totalorder %s434, 3
          %s436 = scalar_select %p435, %s434, 3
          %s437 = smul.addr %s436, 8
          %s438 = scalar_lea.vmem %s0, %s437
          %s439 = smul.u32 2, %s24
        $region76: #{tpu_custom_call.1} parent=71 // pred_fallthru
          _
      $region72: #{tpu_custom_call.1} parent=5 // pred_fallthru
        _
      %p440 = scmp.le.s32.totalorder 1, %s24
      %p441 = scmp.lt.s32.totalorder %s24, 3
      %p442 = pnand %p440, %p441
      %p443 = pneg %p442
      // Predicated region
      $region77: #{tpu_custom_call.1} parent=5 // pred_check
        _
      $region78: #{tpu_custom_call.1} parent=5 // pred_check_branch
        %445 = sbr.rel (%p442) target = $region80
      $region79: #{tpu_custom_call.1} parent=5 // pred_region
        %s446 = ssub.s32 %s24, 1
        %s447 = smul.u32 2, %s29
        %p448 = scmp.lt.s32.totalorder %s447, 3
        %s449 = scalar_select %p448, %s447, 3
        %s450 = smul.addr %s449, 8
        %s451 = scalar_lea.vmem %s0, %s450
        %p452 = pneg %p50
        %p453 = pneg %p47
        %p454 = pneg %p71
        %p455 = pneg %p68
        %p456 = pneg %p92
        %p457 = pneg %p89
        %p458 = pneg %p113
        %p459 = pneg %p110
        %p460 = pneg %p134
        %p461 = pneg %p131
        %p462 = pneg %p155
        %p463 = pneg %p152
        %p464 = pneg %p176
        %p465 = pneg %p173
        %p466 = pneg %p197
        %p467 = pneg %p194
        %p468 = pneg %p218
        %p469 = pneg %p215
        %p470 = pneg %p239
        %p471 = pneg %p236
        %p472 = pneg %p260
        %p473 = pneg %p257
        %p474 = pneg %p281
        %p475 = pneg %p278
        %p476 = pneg %p302
        %p477 = pneg %p299
        %p478 = pneg %p323
        %p479 = pneg %p320
        %p480 = pneg %p344
        %p481 = pneg %p341
        %p482 = pneg %p370
        %p483 = pneg %p367
        %s484 = sand.u32 %s357, 1
        %s485 = scalar_lea.sflag [#allocation3], %s484
        %s486 = sand.u32 %s357, 1
        %s487 = smul.addr %s486, 16
        %s488 = scalar_lea.vmem [#allocation2], %s487
        %s489 = smul.u32 2, %s29
        %p490 = scmp.lt.s32.totalorder %s489, 3
        %s491 = scalar_select %p490, %s489, 3
        %s492 = smul.addr %s491, 8
        %s493 = scalar_lea.vmem %s0, %s492
        %s494 = smul.u32 2, %s29
        %s495 = smul.u32 2, %s29
        %v496 = vld [vmem:[%s493] sm:$0xff]
        %v497 = vld [vmem:[%s493 + $0x8] sm:$0xff]
        %v498 = vld [vmem:[%s1] sm:$0xff]
        %v499 = vld [vmem:[%s2] sm:$0x1]
        %v500 = vld [vmem:[%s3] sm:$0x1]
        %vm501 = vcmask 261120
        %v502 = vsel %vm501, %v496, 0.0
        %503 = vadd.xlane.f32.xlu0 %v502
        %v504 = vpop.xlane.xlu0 %503
        %v505 = vsel %vm501, %v497, 0.0
        %506 = vadd.xlane.f32.xlu0 %v505
        %v507 = vpop.xlane.xlu0 %506
        %v508 = vrcp.pop 32.0
        %v509 = vmul.f32 32.0, %v508
        %v510 = vsub.f32 1.0, %v509
        %v511 = vmul.f32 %v508, %v510
        %v512 = vadd.f32 %v508, %v511
        %vm513 = vweird.f32 %v508
        %v514 = vsel %vm513, %v508, %v512
        %v515 = vmul.f32 %v504, %v514
        %v516 = vmul.f32 %v507, %v514
        %v517 = vsub.f32 %v496, %v515
        %v518 = vsub.f32 %v497, %v516
        %v519 = vmul.f32 %v517, %v517
        %v520 = vmul.f32 %v518, %v518
        %v521 = vsel %vm501, %v519, 0.0
        %522 = vadd.xlane.f32.xlu0 %v521
        %v523 = vpop.xlane.xlu0 %522
        %v524 = vsel %vm501, %v520, 0.0
        %525 = vadd.xlane.f32.xlu0 %v524
        %v526 = vpop.xlane.xlu0 %525
        %v527 = vmul.f32 %v523, %v514
        %v528 = vmul.f32 %v526, %v514
        %v529 = vadd.f32 %v527, 1e-05
        %v530 = vadd.f32 %v528, 1e-05
        %v531 = vrsqrt.pop %v529
        %v532 = vmul.f32 %v531, %v529
        %v533 = vmul.f32 %v532, %v531
        %v534 = vmul.f32 0.5, %v533
        %v535 = vsub.f32 1.5, %v534
        %v536 = vmul.f32 %v531, %v535
        %vm537 = vweird.f32 %v529
        %vm538 = vweird.f32 %v531
        %vm539 = vmor %vm537, %vm538
        %v540 = vsel %vm539, %v531, %v536
        %v541 = vrsqrt.pop %v530
        %v542 = vmul.f32 %v541, %v530
        %v543 = vmul.f32 %v542, %v541
        %v544 = vmul.f32 0.5, %v543
        %v545 = vsub.f32 1.5, %v544
        %v546 = vmul.f32 %v541, %v545
        %vm547 = vweird.f32 %v530
        %vm548 = vweird.f32 %v541
        %vm549 = vmor %vm547, %vm548
        %v550 = vsel %vm549, %v541, %v546
        %v551 = vmul.f32 %v517, %v540
        %v552 = vmul.f32 %v518, %v550
        %v554 = vperm.slane %v499, 0
        %v556 = vmul.f32 %v551, %v554
        %v557 = vmul.f32 %v552, %v554
        %v559 = vperm.slane %v500, 0
        %v561 = vadd.f32 %v556, %v559
        %v562 = vadd.f32 %v557, %v559
        %v563 = vld [vmem:[%s4] sm:$0x1]
        %v564 = vld [vmem:[%s5] sm:$0x1]
        %v565 = vsel %vm501, %v498, 0.0
        %566 = vadd.xlane.f32.xlu0 %v565
        %v567 = vpop.xlane.xlu0 %566
        %v568 = vmul.f32 %v567, %v514
        %v569 = vsub.f32 %v498, %v568
        %v570 = vmul.f32 %v569, %v569
        %v571 = vsel %vm501, %v570, 0.0
        %572 = vadd.xlane.f32.xlu0 %v571
        %v573 = vpop.xlane.xlu0 %572
        %v574 = vmul.f32 %v573, %v514
        %v575 = vadd.f32 %v574, 1e-05
        %v576 = vrsqrt.pop %v575
        %v577 = vmul.f32 %v576, %v575
        %v578 = vmul.f32 %v577, %v576
        %v579 = vmul.f32 0.5, %v578
        %v580 = vsub.f32 1.5, %v579
        %v581 = vmul.f32 %v576, %v580
        %vm582 = vweird.f32 %v575
        %vm583 = vweird.f32 %v576
        %vm584 = vmor %vm582, %vm583
        %v585 = vsel %vm584, %v576, %v581
        %v586 = vmul.f32 %v569, %v585
        %v588 = vperm.slane %v563, 0
        %v590 = vmul.f32 %v586, %v588
        %v592 = vperm.slane %v564, 0
        %v594 = vadd.f32 %v590, %v592
        %v595 = vld [vmem:[%s6] sm:$0xff]
        %v596 = vld [vmem:[%s6 + $0x8] sm:$0xff]
        %v597 = vld [vmem:[%s6 + $0x10] sm:$0xff]
        %v598 = vld [vmem:[%s6 + $0x18] sm:$0xff]
        %v600 = vsel %vm501, %v594, 0
        %602 = vmatpush.msra.mxu0 0.0
        %603 = vmatpush.msra.mxu0 0.0
        %604 = vmatpush.msra.mxu0 0.0
        %605 = vmatpush.msra.mxu0 0.0
        %606 = vmatpush.msra.mxu0 0.0
        %607 = vmatpush.msra.mxu0 0.0
        %608 = vmatpush.msra.mxu0 0.0
        %609 = vmatpush.msra.mxu0 0.0
        %610 = vmatpush.msra.mxu0 0.0
        %611 = vmatpush.msra.mxu0 0.0
        %612 = vmatpush.msra.mxu0 0.0
        %613 = vmatpush.msra.mxu0 0.0
        %614 = vmatpush.msra.mxu0 %v598
        %615 = vmatpush.msra.mxu0 %v597
        %616 = vmatpush.msra.mxu0 %v596
        %617 = vmatpush.msra.mxu0 %v595
        %618 = vmatmul.f32.gmra.mxu0 %v600
        %v619 = vpop.f32.mrf.mxu0
        %v620 = vadd.f32 0.0, %v619
        %621 = vmatmul.f32.gmra.mxu0 %v600
        %v622 = vpop.f32.mrf.mxu0
        %v623 = vadd.f32 0.0, %v622
        %624 = vdwg.mxu0
        %v625 = vld [vmem:[%s7] sm:$0xff]
        %v626 = vld [vmem:[%s7 + $0x8] sm:$0xff]
        %v627 = vld [vmem:[%s7 + $0x10] sm:$0xff]
        %v628 = vld [vmem:[%s7 + $0x18] sm:$0xff]
        %v630 = vsel %vm501, %v561, 0
        %v633 = vsel %vm501, %v562, 0
        %635 = vmatpush.msra.mxu0 0.0
        %636 = vmatpush.msra.mxu0 0.0
        %637 = vmatpush.msra.mxu0 0.0
        %638 = vmatpush.msra.mxu0 0.0
        %639 = vmatpush.msra.mxu0 0.0
        %640 = vmatpush.msra.mxu0 0.0
        %641 = vmatpush.msra.mxu0 0.0
        %642 = vmatpush.msra.mxu0 0.0
        %643 = vmatpush.msra.mxu0 0.0
        %644 = vmatpush.msra.mxu0 0.0
        %645 = vmatpush.msra.mxu0 0.0
        %646 = vmatpush.msra.mxu0 0.0
        %647 = vmatpush.msra.mxu0 %v628
        %648 = vmatpush.msra.mxu0 %v627
        %649 = vmatpush.msra.mxu0 %v626
        %650 = vmatpush.msra.mxu0 %v625
        %651 = vmatmul.f32.gmra.mxu0 %v630
        %v652 = vpop.f32.mrf.mxu0
        %v653 = vadd.f32 0.0, %v652
        %654 = vmatmul.f32.gmra.mxu0 %v633
        %v655 = vpop.f32.mrf.mxu0
        %v656 = vadd.f32 0.0, %v655
        %657 = vdwg.mxu0
        %v658 = vmul.f32 %v620, 0.35355338
        %v659 = vmul.f32 %v623, 0.35355338
        %662 = vrot.lane.b32.xlu0 %v620, 96
        %v663 = vpop.permute.xlu0 %662
        %664 = vrot.lane.b32.xlu0 %v623, 96
        %v665 = vpop.permute.xlu0 %664
        %v666 = vld [vmem:[%s8] sm:$0xff]
        %v667 = vld [vmem:[%s8 + $0x8] sm:$0xff]
        %v668 = vld [vmem:[%s8 + $0x10] sm:$0xff]
        %v669 = vld [vmem:[%s8 + $0x18] sm:$0xff]
        %vm670 = vcmask 64512
        %v672 = vsel %vm670, %v658, 0
        %v675 = vsel %vm670, %v653, 0
        %v677 = vsel %vm670, %v663, 0
        %679 = vmatpush.xpose.msra.mxu0 0.0
        %680 = vmatpush.xpose.msra.mxu0 0.0
        %681 = vmatpush.xpose.msra.mxu0 0.0
        %682 = vmatpush.xpose.msra.mxu0 0.0
        %683 = vmatpush.xpose.msra.mxu0 0.0
        %684 = vmatpush.xpose.msra.mxu0 0.0
        %685 = vmatpush.xpose.msra.mxu0 0.0
        %686 = vmatpush.xpose.msra.mxu0 0.0
        %687 = vmatpush.xpose.msra.mxu0 0.0
        %688 = vmatpush.xpose.msra.mxu0 0.0
        %689 = vmatpush.xpose.msra.mxu0 0.0
        %690 = vmatpush.xpose.msra.mxu0 0.0
        %691 = vmatpush.xpose.msra.mxu0 0.0
        %692 = vmatpush.xpose.msra.mxu0 0.0
        %693 = vmatpush.xpose.msra.mxu0 %v677
        %694 = vmatpush.xpose.msra.mxu0 %v675
        %695 = vmatmul.f32.gmra.mxu0 %v672
        %v696 = vpop.f32.mrf.mxu0
        %v697 = vadd.f32 0.0, %v696
        %698 = vdwg.mxu0
        %v700 = vsel %vm670, %v659, 0
        %v703 = vsel %vm670, %v656, 0
        %v705 = vsel %vm670, %v665, 0
        %707 = vmatpush.xpose.msra.mxu0 0.0
        %708 = vmatpush.xpose.msra.mxu0 0.0
        %709 = vmatpush.xpose.msra.mxu0 0.0
        %710 = vmatpush.xpose.msra.mxu0 0.0
        %711 = vmatpush.xpose.msra.mxu0 0.0
        %712 = vmatpush.xpose.msra.mxu0 0.0
        %713 = vmatpush.xpose.msra.mxu0 0.0
        %714 = vmatpush.xpose.msra.mxu0 0.0
        %715 = vmatpush.xpose.msra.mxu0 0.0
        %716 = vmatpush.xpose.msra.mxu0 0.0
        %717 = vmatpush.xpose.msra.mxu0 0.0
        %718 = vmatpush.xpose.msra.mxu0 0.0
        %719 = vmatpush.xpose.msra.mxu0 0.0
        %720 = vmatpush.xpose.msra.mxu0 0.0
        %721 = vmatpush.xpose.msra.mxu0 %v705
        %722 = vmatpush.xpose.msra.mxu0 %v703
        %723 = vmatmul.f32.gmra.mxu0 %v700
        %v724 = vpop.f32.mrf.mxu0
        %v725 = vadd.f32 0.0, %v724
        %726 = vdwg.mxu0
        %vm727 = vcmask 130048
        %v728 = vsel %vm727, %v697, -inf
        %729 = vmax.xlane.f32.xlu0 %v728
        %v730 = vpop.xlane.xlu0 %729
        %v731 = vsel %vm727, %v725, -inf
        %732 = vmax.xlane.f32.xlu0 %v731
        %v733 = vpop.xlane.xlu0 %732
        %v734 = vsub.f32 %v697, %v730
        %v735 = vsub.f32 %v725, %v733
        %v736 = vmul.f32 %v734, 1.442695
        %v737 = vpow.pop %v736
        %v738 = vmul.f32 %v735, 1.442695
        %v739 = vpow.pop %v738
        %v740 = vsel %vm727, %v737, 0.0
        %741 = vadd.xlane.f32.xlu0 %v740
        %v742 = vpop.xlane.xlu0 %741
        %v743 = vsel %vm727, %v739, 0.0
        %744 = vadd.xlane.f32.xlu0 %v743
        %v745 = vpop.xlane.xlu0 %744
        %v746 = vrcp.pop %v742
        %v747 = vrcp.pop %v745
        %v748 = vmul.f32 %v737, %v746
        %v749 = vmul.f32 %v739, %v747
        %750 = vrot.lane.b32.xlu0 %v653, 96
        %v751 = vpop.permute.xlu0 %750
        %752 = vrot.lane.b32.xlu0 %v663, 96
        %v753 = vpop.permute.xlu0 %752
        %v757 = vsel %vm727, %v748, 0
        %759 = vmatpush.msra.mxu0 0.0
        %760 = vmatpush.msra.mxu0 0.0
        %761 = vmatpush.msra.mxu0 0.0
        %762 = vmatpush.msra.mxu0 0.0
        %763 = vmatpush.msra.mxu0 0.0
        %764 = vmatpush.msra.mxu0 0.0
        %765 = vmatpush.msra.mxu0 0.0
        %766 = vmatpush.msra.mxu0 0.0
        %767 = vmatpush.msra.mxu0 0.0
        %768 = vmatpush.msra.mxu0 0.0
        %769 = vmatpush.msra.mxu0 0.0
        %770 = vmatpush.msra.mxu0 0.0
        %771 = vmatpush.msra.mxu0 0.0
        %772 = vmatpush.msra.mxu0 0.0
        %773 = vmatpush.msra.mxu0 %v753
        %774 = vmatpush.msra.mxu0 %v751
        %775 = vmatmul.f32.gmra.mxu0 %v757
        %v776 = vpop.f32.mrf.mxu0
        %v777 = vadd.f32 0.0, %v776
        %778 = vdwg.mxu0
        %779 = vrot.lane.b32.xlu0 %v656, 96
        %v780 = vpop.permute.xlu0 %779
        %781 = vrot.lane.b32.xlu0 %v665, 96
        %v782 = vpop.permute.xlu0 %781
        %v786 = vsel %vm727, %v749, 0
        %788 = vmatpush.msra.mxu0 0.0
        %789 = vmatpush.msra.mxu0 0.0
        %790 = vmatpush.msra.mxu0 0.0
        %791 = vmatpush.msra.mxu0 0.0
        %792 = vmatpush.msra.mxu0 0.0
        %793 = vmatpush.msra.mxu0 0.0
        %794 = vmatpush.msra.mxu0 0.0
        %795 = vmatpush.msra.mxu0 0.0
        %796 = vmatpush.msra.mxu0 0.0
        %797 = vmatpush.msra.mxu0 0.0
        %798 = vmatpush.msra.mxu0 0.0
        %799 = vmatpush.msra.mxu0 0.0
        %800 = vmatpush.msra.mxu0 0.0
        %801 = vmatpush.msra.mxu0 0.0
        %802 = vmatpush.msra.mxu0 %v782
        %803 = vmatpush.msra.mxu0 %v780
        %804 = vmatmul.f32.gmra.mxu0 %v786
        %v805 = vpop.f32.mrf.mxu0
        %v806 = vadd.f32 0.0, %v805
        %807 = vdwg.mxu0
        %v809 = vsel %vm670, %v777, 0
        %v812 = vsel %vm670, %v806, 0
        %814 = vmatpush.msra.mxu0 0.0
        %815 = vmatpush.msra.mxu0 0.0
        %816 = vmatpush.msra.mxu0 0.0
        %817 = vmatpush.msra.mxu0 0.0
        %818 = vmatpush.msra.mxu0 0.0
        %819 = vmatpush.msra.mxu0 0.0
        %820 = vmatpush.msra.mxu0 0.0
        %821 = vmatpush.msra.mxu0 0.0
        %822 = vmatpush.msra.mxu0 0.0
        %823 = vmatpush.msra.mxu0 0.0
        %824 = vmatpush.msra.mxu0 0.0
        %825 = vmatpush.msra.mxu0 0.0
        %826 = vmatpush.msra.mxu0 0.0
        %827 = vmatpush.msra.mxu0 0.0
        %828 = vmatpush.msra.mxu0 0.0
        %829 = vmatpush.msra.mxu0 %v666
        %830 = vmatmul.f32.gmra.mxu0 %v809
        %v831 = vpop.f32.mrf.mxu0
        %v832 = vadd.f32 0.0, %v831
        %833 = vmatmul.f32.gmra.mxu0 %v812
        %v834 = vpop.f32.mrf.mxu0
        %v835 = vadd.f32 0.0, %v834
        %836 = vdwg.mxu0
        %v837 = vadd.f32 %v498, %v832
        %v838 = vadd.f32 %v498, %v835
        %839 = vrot.lane.b32.xlu0 %v658, 120
        %v840 = vpop.permute.xlu0 %839
        %841 = vrot.lane.b32.xlu0 %v653, 120
        %v842 = vpop.permute.xlu0 %841
        %843 = vrot.lane.b32.xlu0 %v663, 120
        %v844 = vpop.permute.xlu0 %843
        %v845 = vsel %vm670, %v840, 0
        %v847 = vsel %vm670, %v842, 0
        %v849 = vsel %vm670, %v844, 0
        %851 = vmatpush.xpose.msra.mxu0 0.0
        %852 = vmatpush.xpose.msra.mxu0 0.0
        %853 = vmatpush.xpose.msra.mxu0 0.0
        %854 = vmatpush.xpose.msra.mxu0 0.0
        %855 = vmatpush.xpose.msra.mxu0 0.0
        %856 = vmatpush.xpose.msra.mxu0 0.0
        %857 = vmatpush.xpose.msra.mxu0 0.0
        %858 = vmatpush.xpose.msra.mxu0 0.0
        %859 = vmatpush.xpose.msra.mxu0 0.0
        %860 = vmatpush.xpose.msra.mxu0 0.0
        %861 = vmatpush.xpose.msra.mxu0 0.0
        %862 = vmatpush.xpose.msra.mxu0 0.0
        %863 = vmatpush.xpose.msra.mxu0 0.0
        %864 = vmatpush.xpose.msra.mxu0 0.0
        %865 = vmatpush.xpose.msra.mxu0 %v849
        %866 = vmatpush.xpose.msra.mxu0 %v847
        %867 = vmatmul.f32.gmra.mxu0 %v845
        %v868 = vpop.f32.mrf.mxu0
        %v869 = vadd.f32 0.0, %v868
        %870 = vdwg.mxu0
        %871 = vrot.lane.b32.xlu0 %v659, 120
        %v872 = vpop.permute.xlu0 %871
        %873 = vrot.lane.b32.xlu0 %v656, 120
        %v874 = vpop.permute.xlu0 %873
        %875 = vrot.lane.b32.xlu0 %v665, 120
        %v876 = vpop.permute.xlu0 %875
        %v877 = vsel %vm670, %v872, 0
        %v879 = vsel %vm670, %v874, 0
        %v881 = vsel %vm670, %v876, 0
        %883 = vmatpush.xpose.msra.mxu0 0.0
        %884 = vmatpush.xpose.msra.mxu0 0.0
        %885 = vmatpush.xpose.msra.mxu0 0.0
        %886 = vmatpush.xpose.msra.mxu0 0.0
        %887 = vmatpush.xpose.msra.mxu0 0.0
        %888 = vmatpush.xpose.msra.mxu0 0.0
        %889 = vmatpush.xpose.msra.mxu0 0.0
        %890 = vmatpush.xpose.msra.mxu0 0.0
        %891 = vmatpush.xpose.msra.mxu0 0.0
        %892 = vmatpush.xpose.msra.mxu0 0.0
        %893 = vmatpush.xpose.msra.mxu0 0.0
        %894 = vmatpush.xpose.msra.mxu0 0.0
        %895 = vmatpush.xpose.msra.mxu0 0.0
        %896 = vmatpush.xpose.msra.mxu0 0.0
        %897 = vmatpush.xpose.msra.mxu0 %v881
        %898 = vmatpush.xpose.msra.mxu0 %v879
        %899 = vmatmul.f32.gmra.mxu0 %v877
        %v900 = vpop.f32.mrf.mxu0
        %v901 = vadd.f32 0.0, %v900
        %902 = vdwg.mxu0
        %v903 = vsel %vm727, %v869, -inf
        %904 = vmax.xlane.f32.xlu0 %v903
        %v905 = vpop.xlane.xlu0 %904
        %v906 = vsel %vm727, %v901, -inf
        %907 = vmax.xlane.f32.xlu0 %v906
        %v908 = vpop.xlane.xlu0 %907
        %v909 = vsub.f32 %v869, %v905
        %v910 = vsub.f32 %v901, %v908
        %v911 = vmul.f32 %v909, 1.442695
        %v912 = vpow.pop %v911
        %v913 = vmul.f32 %v910, 1.442695
        %v914 = vpow.pop %v913
        %v915 = vsel %vm727, %v912, 0.0
        %916 = vadd.xlane.f32.xlu0 %v915
        %v917 = vpop.xlane.xlu0 %916
        %v918 = vsel %vm727, %v914, 0.0
        %919 = vadd.xlane.f32.xlu0 %v918
        %v920 = vpop.xlane.xlu0 %919
        %v921 = vrcp.pop %v917
        %v922 = vrcp.pop %v920
        %v923 = vmul.f32 %v912, %v921
        %v924 = vmul.f32 %v914, %v922
        %925 = vrot.lane.b32.xlu0 %v653, 88
        %v926 = vpop.permute.xlu0 %925
        %927 = vrot.lane.b32.xlu0 %v663, 88
        %v928 = vpop.permute.xlu0 %927
        %v932 = vsel %vm727, %v923, 0
        %934 = vmatpush.msra.mxu0 0.0
        %935 = vmatpush.msra.mxu0 0.0
        %936 = vmatpush.msra.mxu0 0.0
        %937 = vmatpush.msra.mxu0 0.0
        %938 = vmatpush.msra.mxu0 0.0
        %939 = vmatpush.msra.mxu0 0.0
        %940 = vmatpush.msra.mxu0 0.0
        %941 = vmatpush.msra.mxu0 0.0
        %942 = vmatpush.msra.mxu0 0.0
        %943 = vmatpush.msra.mxu0 0.0
        %944 = vmatpush.msra.mxu0 0.0
        %945 = vmatpush.msra.mxu0 0.0
        %946 = vmatpush.msra.mxu0 0.0
        %947 = vmatpush.msra.mxu0 0.0
        %948 = vmatpush.msra.mxu0 %v928
        %949 = vmatpush.msra.mxu0 %v926
        %950 = vmatmul.f32.gmra.mxu0 %v932
        %v951 = vpop.f32.mrf.mxu0
        %v952 = vadd.f32 0.0, %v951
        %953 = vdwg.mxu0
        %954 = vrot.lane.b32.xlu0 %v656, 88
        %v955 = vpop.permute.xlu0 %954
        %956 = vrot.lane.b32.xlu0 %v665, 88
        %v957 = vpop.permute.xlu0 %956
        %v961 = vsel %vm727, %v924, 0
        %963 = vmatpush.msra.mxu0 0.0
        %964 = vmatpush.msra.mxu0 0.0
        %965 = vmatpush.msra.mxu0 0.0
        %966 = vmatpush.msra.mxu0 0.0
        %967 = vmatpush.msra.mxu0 0.0
        %968 = vmatpush.msra.mxu0 0.0
        %969 = vmatpush.msra.mxu0 0.0
        %970 = vmatpush.msra.mxu0 0.0
        %971 = vmatpush.msra.mxu0 0.0
        %972 = vmatpush.msra.mxu0 0.0
        %973 = vmatpush.msra.mxu0 0.0
        %974 = vmatpush.msra.mxu0 0.0
        %975 = vmatpush.msra.mxu0 0.0
        %976 = vmatpush.msra.mxu0 0.0
        %977 = vmatpush.msra.mxu0 %v957
        %978 = vmatpush.msra.mxu0 %v955
        %979 = vmatmul.f32.gmra.mxu0 %v961
        %v980 = vpop.f32.mrf.mxu0
        %v981 = vadd.f32 0.0, %v980
        %982 = vdwg.mxu0
        %v984 = vsel %vm670, %v952, 0
        %v987 = vsel %vm670, %v981, 0
        %989 = vmatpush.msra.mxu0 0.0
        %990 = vmatpush.msra.mxu0 0.0
        %991 = vmatpush.msra.mxu0 0.0
        %992 = vmatpush.msra.mxu0 0.0
        %993 = vmatpush.msra.mxu0 0.0
        %994 = vmatpush.msra.mxu0 0.0
        %995 = vmatpush.msra.mxu0 0.0
        %996 = vmatpush.msra.mxu0 0.0
        %997 = vmatpush.msra.mxu0 0.0
        %998 = vmatpush.msra.mxu0 0.0
        %999 = vmatpush.msra.mxu0 0.0
        %1000 = vmatpush.msra.mxu0 0.0
        %1001 = vmatpush.msra.mxu0 0.0
        %1002 = vmatpush.msra.mxu0 0.0
        %1003 = vmatpush.msra.mxu0 0.0
        %1004 = vmatpush.msra.mxu0 %v667
        %1005 = vmatmul.f32.gmra.mxu0 %v984
        %v1006 = vpop.f32.mrf.mxu0
        %v1007 = vadd.f32 0.0, %v1006
        %1008 = vmatmul.f32.gmra.mxu0 %v987
        %v1009 = vpop.f32.mrf.mxu0
        %v1010 = vadd.f32 0.0, %v1009
        %1011 = vdwg.mxu0
        %v1012 = vadd.f32 %v837, %v1007
        %v1013 = vadd.f32 %v838, %v1010
        %1014 = vrot.lane.b32.xlu0 %v658, 112
        %v1015 = vpop.permute.xlu0 %1014
        %1016 = vrot.lane.b32.xlu0 %v653, 112
        %v1017 = vpop.permute.xlu0 %1016
        %1018 = vrot.lane.b32.xlu0 %v663, 112
        %v1019 = vpop.permute.xlu0 %1018
        %v1020 = vsel %vm670, %v1015, 0
        %v1022 = vsel %vm670, %v1017, 0
        %v1024 = vsel %vm670, %v1019, 0
        %1026 = vmatpush.xpose.msra.mxu0 0.0
        %1027 = vmatpush.xpose.msra.mxu0 0.0
        %1028 = vmatpush.xpose.msra.mxu0 0.0
        %1029 = vmatpush.xpose.msra.mxu0 0.0
        %1030 = vmatpush.xpose.msra.mxu0 0.0
        %1031 = vmatpush.xpose.msra.mxu0 0.0
        %1032 = vmatpush.xpose.msra.mxu0 0.0
        %1033 = vmatpush.xpose.msra.mxu0 0.0
        %1034 = vmatpush.xpose.msra.mxu0 0.0
        %1035 = vmatpush.xpose.msra.mxu0 0.0
        %1036 = vmatpush.xpose.msra.mxu0 0.0
        %1037 = vmatpush.xpose.msra.mxu0 0.0
        %1038 = vmatpush.xpose.msra.mxu0 0.0
        %1039 = vmatpush.xpose.msra.mxu0 0.0
        %1040 = vmatpush.xpose.msra.mxu0 %v1024
        %1041 = vmatpush.xpose.msra.mxu0 %v1022
        %1042 = vmatmul.f32.gmra.mxu0 %v1020
        %v1043 = vpop.f32.mrf.mxu0
        %v1044 = vadd.f32 0.0, %v1043
        %1045 = vdwg.mxu0
        %1046 = vrot.lane.b32.xlu0 %v659, 112
        %v1047 = vpop.permute.xlu0 %1046
        %1048 = vrot.lane.b32.xlu0 %v656, 112
        %v1049 = vpop.permute.xlu0 %1048
        %1050 = vrot.lane.b32.xlu0 %v665, 112
        %v1051 = vpop.permute.xlu0 %1050
        %v1052 = vsel %vm670, %v1047, 0
        %v1054 = vsel %vm670, %v1049, 0
        %v1056 = vsel %vm670, %v1051, 0
        %1058 = vmatpush.xpose.msra.mxu0 0.0
        %1059 = vmatpush.xpose.msra.mxu0 0.0
        %1060 = vmatpush.xpose.msra.mxu0 0.0
        %1061 = vmatpush.xpose.msra.mxu0 0.0
        %1062 = vmatpush.xpose.msra.mxu0 0.0
        %1063 = vmatpush.xpose.msra.mxu0 0.0
        %1064 = vmatpush.xpose.msra.mxu0 0.0
        %1065 = vmatpush.xpose.msra.mxu0 0.0
        %1066 = vmatpush.xpose.msra.mxu0 0.0
        %1067 = vmatpush.xpose.msra.mxu0 0.0
        %1068 = vmatpush.xpose.msra.mxu0 0.0
        %1069 = vmatpush.xpose.msra.mxu0 0.0
        %1070 = vmatpush.xpose.msra.mxu0 0.0
        %1071 = vmatpush.xpose.msra.mxu0 0.0
        %1072 = vmatpush.xpose.msra.mxu0 %v1056
        %1073 = vmatpush.xpose.msra.mxu0 %v1054
        %1074 = vmatmul.f32.gmra.mxu0 %v1052
        %v1075 = vpop.f32.mrf.mxu0
        %v1076 = vadd.f32 0.0, %v1075
        %1077 = vdwg.mxu0
        %v1078 = vsel %vm727, %v1044, -inf
        %1079 = vmax.xlane.f32.xlu0 %v1078
        %v1080 = vpop.xlane.xlu0 %1079
        %v1081 = vsel %vm727, %v1076, -inf
        %1082 = vmax.xlane.f32.xlu0 %v1081
        %v1083 = vpop.xlane.xlu0 %1082
        %v1084 = vsub.f32 %v1044, %v1080
        %v1085 = vsub.f32 %v1076, %v1083
        %v1086 = vmul.f32 %v1084, 1.442695
        %v1087 = vpow.pop %v1086
        %v1088 = vmul.f32 %v1085, 1.442695
        %v1089 = vpow.pop %v1088
        %v1090 = vsel %vm727, %v1087, 0.0
        %1091 = vadd.xlane.f32.xlu0 %v1090
        %v1092 = vpop.xlane.xlu0 %1091
        %v1093 = vsel %vm727, %v1089, 0.0
        %1094 = vadd.xlane.f32.xlu0 %v1093
        %v1095 = vpop.xlane.xlu0 %1094
        %v1096 = vrcp.pop %v1092
        %v1097 = vrcp.pop %v1095
        %v1098 = vmul.f32 %v1087, %v1096
        %v1099 = vmul.f32 %v1089, %v1097
        %1100 = vrot.lane.b32.xlu0 %v653, 80
        %v1101 = vpop.permute.xlu0 %1100
        %1102 = vrot.lane.b32.xlu0 %v663, 80
        %v1103 = vpop.permute.xlu0 %1102
        %v1107 = vsel %vm727, %v1098, 0
        %1109 = vmatpush.msra.mxu0 0.0
        %1110 = vmatpush.msra.mxu0 0.0
        %1111 = vmatpush.msra.mxu0 0.0
        %1112 = vmatpush.msra.mxu0 0.0
        %1113 = vmatpush.msra.mxu0 0.0
        %1114 = vmatpush.msra.mxu0 0.0
        %1115 = vmatpush.msra.mxu0 0.0
        %1116 = vmatpush.msra.mxu0 0.0
        %1117 = vmatpush.msra.mxu0 0.0
        %1118 = vmatpush.msra.mxu0 0.0
        %1119 = vmatpush.msra.mxu0 0.0
        %1120 = vmatpush.msra.mxu0 0.0
        %1121 = vmatpush.msra.mxu0 0.0
        %1122 = vmatpush.msra.mxu0 0.0
        %1123 = vmatpush.msra.mxu0 %v1103
        %1124 = vmatpush.msra.mxu0 %v1101
        %1125 = vmatmul.f32.gmra.mxu0 %v1107
        %v1126 = vpop.f32.mrf.mxu0
        %v1127 = vadd.f32 0.0, %v1126
        %1128 = vdwg.mxu0
        %1129 = vrot.lane.b32.xlu0 %v656, 80
        %v1130 = vpop.permute.xlu0 %1129
        %1131 = vrot.lane.b32.xlu0 %v665, 80
        %v1132 = vpop.permute.xlu0 %1131
        %v1136 = vsel %vm727, %v1099, 0
        %1138 = vmatpush.msra.mxu0 0.0
        %1139 = vmatpush.msra.mxu0 0.0
        %1140 = vmatpush.msra.mxu0 0.0
        %1141 = vmatpush.msra.mxu0 0.0
        %1142 = vmatpush.msra.mxu0 0.0
        %1143 = vmatpush.msra.mxu0 0.0
        %1144 = vmatpush.msra.mxu0 0.0
        %1145 = vmatpush.msra.mxu0 0.0
        %1146 = vmatpush.msra.mxu0 0.0
        %1147 = vmatpush.msra.mxu0 0.0
        %1148 = vmatpush.msra.mxu0 0.0
        %1149 = vmatpush.msra.mxu0 0.0
        %1150 = vmatpush.msra.mxu0 0.0
        %1151 = vmatpush.msra.mxu0 0.0
        %1152 = vmatpush.msra.mxu0 %v1132
        %1153 = vmatpush.msra.mxu0 %v1130
        %1154 = vmatmul.f32.gmra.mxu0 %v1136
        %v1155 = vpop.f32.mrf.mxu0
        %v1156 = vadd.f32 0.0, %v1155
        %1157 = vdwg.mxu0
        %v1159 = vsel %vm670, %v1127, 0
        %v1162 = vsel %vm670, %v1156, 0
        %1164 = vmatpush.msra.mxu0 0.0
        %1165 = vmatpush.msra.mxu0 0.0
        %1166 = vmatpush.msra.mxu0 0.0
        %1167 = vmatpush.msra.mxu0 0.0
        %1168 = vmatpush.msra.mxu0 0.0
        %1169 = vmatpush.msra.mxu0 0.0
        %1170 = vmatpush.msra.mxu0 0.0
        %1171 = vmatpush.msra.mxu0 0.0
        %1172 = vmatpush.msra.mxu0 0.0
        %1173 = vmatpush.msra.mxu0 0.0
        %1174 = vmatpush.msra.mxu0 0.0
        %1175 = vmatpush.msra.mxu0 0.0
        %1176 = vmatpush.msra.mxu0 0.0
        %1177 = vmatpush.msra.mxu0 0.0
        %1178 = vmatpush.msra.mxu0 0.0
        %1179 = vmatpush.msra.mxu0 %v668
        %1180 = vmatmul.f32.gmra.mxu0 %v1159
        %v1181 = vpop.f32.mrf.mxu0
        %v1182 = vadd.f32 0.0, %v1181
        %1183 = vmatmul.f32.gmra.mxu0 %v1162
        %v1184 = vpop.f32.mrf.mxu0
        %v1185 = vadd.f32 0.0, %v1184
        %1186 = vdwg.mxu0
        %v1187 = vadd.f32 %v1012, %v1182
        %v1188 = vadd.f32 %v1013, %v1185
        %1189 = vrot.lane.b32.xlu0 %v658, 104
        %v1190 = vpop.permute.xlu0 %1189
        %1191 = vrot.lane.b32.xlu0 %v653, 104
        %v1192 = vpop.permute.xlu0 %1191
        %1193 = vrot.lane.b32.xlu0 %v663, 104
        %v1194 = vpop.permute.xlu0 %1193
        %v1195 = vsel %vm670, %v1190, 0
        %v1197 = vsel %vm670, %v1192, 0
        %v1199 = vsel %vm670, %v1194, 0
        %1201 = vmatpush.xpose.msra.mxu0 0.0
        %1202 = vmatpush.xpose.msra.mxu0 0.0
        %1203 = vmatpush.xpose.msra.mxu0 0.0
        %1204 = vmatpush.xpose.msra.mxu0 0.0
        %1205 = vmatpush.xpose.msra.mxu0 0.0
        %1206 = vmatpush.xpose.msra.mxu0 0.0
        %1207 = vmatpush.xpose.msra.mxu0 0.0
        %1208 = vmatpush.xpose.msra.mxu0 0.0
        %1209 = vmatpush.xpose.msra.mxu0 0.0
        %1210 = vmatpush.xpose.msra.mxu0 0.0
        %1211 = vmatpush.xpose.msra.mxu0 0.0
        %1212 = vmatpush.xpose.msra.mxu0 0.0
        %1213 = vmatpush.xpose.msra.mxu0 0.0
        %1214 = vmatpush.xpose.msra.mxu0 0.0
        %1215 = vmatpush.xpose.msra.mxu0 %v1199
        %1216 = vmatpush.xpose.msra.mxu0 %v1197
        %1217 = vmatmul.f32.gmra.mxu0 %v1195
        %v1218 = vpop.f32.mrf.mxu0
        %v1219 = vadd.f32 0.0, %v1218
        %1220 = vdwg.mxu0
        %1221 = vrot.lane.b32.xlu0 %v659, 104
        %v1222 = vpop.permute.xlu0 %1221
        %1223 = vrot.lane.b32.xlu0 %v656, 104
        %v1224 = vpop.permute.xlu0 %1223
        %1225 = vrot.lane.b32.xlu0 %v665, 104
        %v1226 = vpop.permute.xlu0 %1225
        %v1227 = vsel %vm670, %v1222, 0
        %v1229 = vsel %vm670, %v1224, 0
        %v1231 = vsel %vm670, %v1226, 0
        %1233 = vmatpush.xpose.msra.mxu0 0.0
        %1234 = vmatpush.xpose.msra.mxu0 0.0
        %1235 = vmatpush.xpose.msra.mxu0 0.0
        %1236 = vmatpush.xpose.msra.mxu0 0.0
        %1237 = vmatpush.xpose.msra.mxu0 0.0
        %1238 = vmatpush.xpose.msra.mxu0 0.0
        %1239 = vmatpush.xpose.msra.mxu0 0.0
        %1240 = vmatpush.xpose.msra.mxu0 0.0
        %1241 = vmatpush.xpose.msra.mxu0 0.0
        %1242 = vmatpush.xpose.msra.mxu0 0.0
        %1243 = vmatpush.xpose.msra.mxu0 0.0
        %1244 = vmatpush.xpose.msra.mxu0 0.0
        %1245 = vmatpush.xpose.msra.mxu0 0.0
        %1246 = vmatpush.xpose.msra.mxu0 0.0
        %1247 = vmatpush.xpose.msra.mxu0 %v1231
        %1248 = vmatpush.xpose.msra.mxu0 %v1229
        %1249 = vmatmul.f32.gmra.mxu0 %v1227
        %v1250 = vpop.f32.mrf.mxu0
        %v1251 = vadd.f32 0.0, %v1250
        %1252 = vdwg.mxu0
        %v1253 = vsel %vm727, %v1219, -inf
        %1254 = vmax.xlane.f32.xlu0 %v1253
        %v1255 = vpop.xlane.xlu0 %1254
        %v1256 = vsel %vm727, %v1251, -inf
        %1257 = vmax.xlane.f32.xlu0 %v1256
        %v1258 = vpop.xlane.xlu0 %1257
        %v1259 = vsub.f32 %v1219, %v1255
        %v1260 = vsub.f32 %v1251, %v1258
        %v1261 = vmul.f32 %v1259, 1.442695
        %v1262 = vpow.pop %v1261
        %v1263 = vmul.f32 %v1260, 1.442695
        %v1264 = vpow.pop %v1263
        %v1265 = vsel %vm727, %v1262, 0.0
        %1266 = vadd.xlane.f32.xlu0 %v1265
        %v1267 = vpop.xlane.xlu0 %1266
        %v1268 = vsel %vm727, %v1264, 0.0
        %1269 = vadd.xlane.f32.xlu0 %v1268
        %v1270 = vpop.xlane.xlu0 %1269
        %v1271 = vrcp.pop %v1267
        %v1272 = vrcp.pop %v1270
        %v1273 = vmul.f32 %v1262, %v1271
        %v1274 = vmul.f32 %v1264, %v1272
        %1275 = vrot.lane.b32.xlu0 %v653, 72
        %v1276 = vpop.permute.xlu0 %1275
        %1277 = vrot.lane.b32.xlu0 %v663, 72
        %v1278 = vpop.permute.xlu0 %1277
        %v1282 = vsel %vm727, %v1273, 0
        %1284 = vmatpush.msra.mxu0 0.0
        %1285 = vmatpush.msra.mxu0 0.0
        %1286 = vmatpush.msra.mxu0 0.0
        %1287 = vmatpush.msra.mxu0 0.0
        %1288 = vmatpush.msra.mxu0 0.0
        %1289 = vmatpush.msra.mxu0 0.0
        %1290 = vmatpush.msra.mxu0 0.0
        %1291 = vmatpush.msra.mxu0 0.0
        %1292 = vmatpush.msra.mxu0 0.0
        %1293 = vmatpush.msra.mxu0 0.0
        %1294 = vmatpush.msra.mxu0 0.0
        %1295 = vmatpush.msra.mxu0 0.0
        %1296 = vmatpush.msra.mxu0 0.0
        %1297 = vmatpush.msra.mxu0 0.0
        %1298 = vmatpush.msra.mxu0 %v1278
        %1299 = vmatpush.msra.mxu0 %v1276
        %1300 = vmatmul.f32.gmra.mxu0 %v1282
        %v1301 = vpop.f32.mrf.mxu0
        %v1302 = vadd.f32 0.0, %v1301
        %1303 = vdwg.mxu0
        %1304 = vrot.lane.b32.xlu0 %v656, 72
        %v1305 = vpop.permute.xlu0 %1304
        %1306 = vrot.lane.b32.xlu0 %v665, 72
        %v1307 = vpop.permute.xlu0 %1306
        %v1311 = vsel %vm727, %v1274, 0
        %1313 = vmatpush.msra.mxu0 0.0
        %1314 = vmatpush.msra.mxu0 0.0
        %1315 = vmatpush.msra.mxu0 0.0
        %1316 = vmatpush.msra.mxu0 0.0
        %1317 = vmatpush.msra.mxu0 0.0
        %1318 = vmatpush.msra.mxu0 0.0
        %1319 = vmatpush.msra.mxu0 0.0
        %1320 = vmatpush.msra.mxu0 0.0
        %1321 = vmatpush.msra.mxu0 0.0
        %1322 = vmatpush.msra.mxu0 0.0
        %1323 = vmatpush.msra.mxu0 0.0
        %1324 = vmatpush.msra.mxu0 0.0
        %1325 = vmatpush.msra.mxu0 0.0
        %1326 = vmatpush.msra.mxu0 0.0
        %1327 = vmatpush.msra.mxu0 %v1307
        %1328 = vmatpush.msra.mxu0 %v1305
        %1329 = vmatmul.f32.gmra.mxu0 %v1311
        %v1330 = vpop.f32.mrf.mxu0
        %v1331 = vadd.f32 0.0, %v1330
        %1332 = vdwg.mxu0
        %v1334 = vsel %vm670, %v1302, 0
        %v1337 = vsel %vm670, %v1331, 0
        %1339 = vmatpush.msra.mxu0 0.0
        %1340 = vmatpush.msra.mxu0 0.0
        %1341 = vmatpush.msra.mxu0 0.0
        %1342 = vmatpush.msra.mxu0 0.0
        %1343 = vmatpush.msra.mxu0 0.0
        %1344 = vmatpush.msra.mxu0 0.0
        %1345 = vmatpush.msra.mxu0 0.0
        %1346 = vmatpush.msra.mxu0 0.0
        %1347 = vmatpush.msra.mxu0 0.0
        %1348 = vmatpush.msra.mxu0 0.0
        %1349 = vmatpush.msra.mxu0 0.0
        %1350 = vmatpush.msra.mxu0 0.0
        %1351 = vmatpush.msra.mxu0 0.0
        %1352 = vmatpush.msra.mxu0 0.0
        %1353 = vmatpush.msra.mxu0 0.0
        %1354 = vmatpush.msra.mxu0 %v669
        %1355 = vmatmul.f32.gmra.mxu0 %v1334
        %v1356 = vpop.f32.mrf.mxu0
        %v1357 = vadd.f32 0.0, %v1356
        %1358 = vmatmul.f32.gmra.mxu0 %v1337
        %v1359 = vpop.f32.mrf.mxu0
        %v1360 = vadd.f32 0.0, %v1359
        %1361 = vdwg.mxu0
        %v1362 = vadd.f32 %v1187, %v1357
        %v1363 = vadd.f32 %v1188, %v1360
        %v1364 = vld [vmem:[%s9] sm:$0x1]
        %v1365 = vld [vmem:[%s10] sm:$0x1]
        %v1366 = vsel %vm501, %v1362, 0.0
        %1367 = vadd.xlane.f32.xlu0 %v1366
        %v1368 = vpop.xlane.xlu0 %1367
        %v1369 = vsel %vm501, %v1363, 0.0
        %1370 = vadd.xlane.f32.xlu0 %v1369
        %v1371 = vpop.xlane.xlu0 %1370
        %v1372 = vmul.f32 %v1368, %v514
        %v1373 = vmul.f32 %v1371, %v514
        %v1374 = vsub.f32 %v1362, %v1372
        %v1375 = vsub.f32 %v1363, %v1373
        %v1376 = vmul.f32 %v1374, %v1374
        %v1377 = vmul.f32 %v1375, %v1375
        %v1378 = vsel %vm501, %v1376, 0.0
        %1379 = vadd.xlane.f32.xlu0 %v1378
        %v1380 = vpop.xlane.xlu0 %1379
        %v1381 = vsel %vm501, %v1377, 0.0
        %1382 = vadd.xlane.f32.xlu0 %v1381
        %v1383 = vpop.xlane.xlu0 %1382
        %v1384 = vmul.f32 %v1380, %v514
        %v1385 = vmul.f32 %v1383, %v514
        %v1386 = vadd.f32 %v1384, 1e-05
        %v1387 = vadd.f32 %v1385, 1e-05
        %v1388 = vrsqrt.pop %v1386
        %v1389 = vmul.f32 %v1388, %v1386
        %v1390 = vmul.f32 %v1389, %v1388
        %v1391 = vmul.f32 0.5, %v1390
        %v1392 = vsub.f32 1.5, %v1391
        %v1393 = vmul.f32 %v1388, %v1392
        %vm1394 = vweird.f32 %v1386
        %vm1395 = vweird.f32 %v1388
        %vm1396 = vmor %vm1394, %vm1395
        %v1397 = vsel %vm1396, %v1388, %v1393
        %v1398 = vrsqrt.pop %v1387
        %v1399 = vmul.f32 %v1398, %v1387
        %v1400 = vmul.f32 %v1399, %v1398
        %v1401 = vmul.f32 0.5, %v1400
        %v1402 = vsub.f32 1.5, %v1401
        %v1403 = vmul.f32 %v1398, %v1402
        %vm1404 = vweird.f32 %v1387
        %vm1405 = vweird.f32 %v1398
        %vm1406 = vmor %vm1404, %vm1405
        %v1407 = vsel %vm1406, %v1398, %v1403
        %v1408 = vmul.f32 %v1374, %v1397
        %v1409 = vmul.f32 %v1375, %v1407
        %v1411 = vperm.slane %v1364, 0
        %v1413 = vmul.f32 %v1408, %v1411
        %v1414 = vmul.f32 %v1409, %v1411
        %v1416 = vperm.slane %v1365, 0
        %v1418 = vadd.f32 %v1413, %v1416
        %v1419 = vadd.f32 %v1414, %v1416
        %v1420 = vld [vmem:[%s11] sm:$0xff]
        %v1421 = vld [vmem:[%s11 + $0x8] sm:$0xff]
        %v1422 = vld [vmem:[%s11 + $0x10] sm:$0xff]
        %v1423 = vld [vmem:[%s11 + $0x18] sm:$0xff]
        %v1425 = vsel %vm501, %v1418, 0
        %v1428 = vsel %vm501, %v1419, 0
        %1430 = vmatpush.msra.mxu0 0.0
        %1431 = vmatpush.msra.mxu0 0.0
        %1432 = vmatpush.msra.mxu0 0.0
        %1433 = vmatpush.msra.mxu0 0.0
        %1434 = vmatpush.msra.mxu0 0.0
        %1435 = vmatpush.msra.mxu0 0.0
        %1436 = vmatpush.msra.mxu0 0.0
        %1437 = vmatpush.msra.mxu0 0.0
        %1438 = vmatpush.msra.mxu0 0.0
        %1439 = vmatpush.msra.mxu0 0.0
        %1440 = vmatpush.msra.mxu0 0.0
        %1441 = vmatpush.msra.mxu0 0.0
        %1442 = vmatpush.msra.mxu0 %v1423
        %1443 = vmatpush.msra.mxu0 %v1422
        %1444 = vmatpush.msra.mxu0 %v1421
        %1445 = vmatpush.msra.mxu0 %v1420
        %1446 = vmatmul.f32.gmra.mxu0 %v1425
        %v1447 = vpop.f32.mrf.mxu0
        %v1448 = vadd.f32 0.0, %v1447
        %1449 = vmatmul.f32.gmra.mxu0 %v1428
        %v1450 = vpop.f32.mrf.mxu0
        %v1451 = vadd.f32 0.0, %v1450
        %1452 = vdwg.mxu0
        %v1453 = vmul.f32 %v1448, 0.5
        %v1454 = vmul.f32 %v1451, 0.5
        %v1455 = vrcp.pop 1.4142135
        %v1456 = vmul.f32 1.4142135, %v1455
        %v1457 = vsub.f32 1.0, %v1456
        %v1458 = vmul.f32 %v1455, %v1457
        %v1459 = vadd.f32 %v1455, %v1458
        %vm1460 = vweird.f32 %v1455
        %v1461 = vsel %vm1460, %v1455, %v1459
        %v1462 = vmul.f32 %v1448, %v1461
        %v1463 = vmul.f32 %v1451, %v1461
        %v1464 = vmul.f32 %v1462, %v1462
        %v1465 = vmin.f32 16.0, %v1464
        %v1466 = vmul.f32 %v1465, 2.1237322e-06
        %v1467 = vadd.f32 %v1466, 0.00028619796
        %v1468 = vmul.f32 %v1465, %v1467
        %v1469 = vadd.f32 %v1468, 0.0036580483
        %v1470 = vmul.f32 %v1465, %v1469
        %v1471 = vadd.f32 %v1470, 0.05243302
        %v1472 = vmul.f32 %v1465, %v1471
        %v1473 = vadd.f32 %v1472, 0.18741608
        %v1474 = vmul.f32 %v1465, %v1473
        %v1475 = vadd.f32 %v1474, 1.1283791
        %v1476 = vmul.f32 %v1462, %v1475
        %v1477 = vmul.f32 %v1465, 3.8918573e-05
        %v1478 = vadd.f32 %v1477, 0.001143296
        %v1479 = vmul.f32 %v1465, %v1478
        %v1480 = vadd.f32 %v1479, 0.014752088
        %v1481 = vmul.f32 %v1465, %v1480
        %v1482 = vadd.f32 %v1481, 0.112945676
        %v1483 = vmul.f32 %v1465, %v1482
        %v1484 = vadd.f32 %v1483, 0.4994258
        %v1485 = vmul.f32 %v1465, %v1484
        %v1486 = vadd.f32 %v1485, 1.0
        %v1487 = vrcp.pop %v1486
        %v1488 = vmul.f32 %v1486, %v1487
        %v1489 = vsub.f32 1.0, %v1488
        %v1490 = vmul.f32 %v1487, %v1489
        %v1491 = vadd.f32 %v1487, %v1490
        %vm1492 = vweird.f32 %v1486
        %vm1493 = vweird.f32 %v1487
        %vm1494 = vmor %vm1492, %vm1493
        %v1495 = vsel %vm1494, %v1487, %v1491
        %v1496 = vand.u32 2147483647, %v1486
        %vm1497 = vcmp.eq.f32.partialorder %v1496, 8.507059e+37
        %v1498 = vand.u32 %v1486, 2147483648
        %v1499 = vor.u32 1.1754944e-38, %v1498
        %v1500 = vsel %vm1497, %v1499, %v1495
        %v1501 = vmul.f32 %v1476, %v1500
        %v1502 = vmin.f32 %v1501, 1.0
        %v1503 = vmax.f32 %v1502, -1.0
        %v1504 = vmul.f32 %v1463, %v1463
        %v1505 = vmin.f32 16.0, %v1504
        %v1506 = vmul.f32 %v1505, 2.1237322e-06
        %v1507 = vadd.f32 %v1506, 0.00028619796
        %v1508 = vmul.f32 %v1505, %v1507
        %v1509 = vadd.f32 %v1508, 0.0036580483
        %v1510 = vmul.f32 %v1505, %v1509
        %v1511 = vadd.f32 %v1510, 0.05243302
        %v1512 = vmul.f32 %v1505, %v1511
        %v1513 = vadd.f32 %v1512, 0.18741608
        %v1514 = vmul.f32 %v1505, %v1513
        %v1515 = vadd.f32 %v1514, 1.1283791
        %v1516 = vmul.f32 %v1463, %v1515
        %v1517 = vmul.f32 %v1505, 3.8918573e-05
        %v1518 = vadd.f32 %v1517, 0.001143296
        %v1519 = vmul.f32 %v1505, %v1518
        %v1520 = vadd.f32 %v1519, 0.014752088
        %v1521 = vmul.f32 %v1505, %v1520
        %v1522 = vadd.f32 %v1521, 0.112945676
        %v1523 = vmul.f32 %v1505, %v1522
        %v1524 = vadd.f32 %v1523, 0.4994258
        %v1525 = vmul.f32 %v1505, %v1524
        %v1526 = vadd.f32 %v1525, 1.0
        %v1527 = vrcp.pop %v1526
        %v1528 = vmul.f32 %v1526, %v1527
        %v1529 = vsub.f32 1.0, %v1528
        %v1530 = vmul.f32 %v1527, %v1529
        %v1531 = vadd.f32 %v1527, %v1530
        %vm1532 = vweird.f32 %v1526
        %vm1533 = vweird.f32 %v1527
        %vm1534 = vmor %vm1532, %vm1533
        %v1535 = vsel %vm1534, %v1527, %v1531
        %v1536 = vand.u32 2147483647, %v1526
        %vm1537 = vcmp.eq.f32.partialorder %v1536, 8.507059e+37
        %v1538 = vand.u32 %v1526, 2147483648
        %v1539 = vor.u32 1.1754944e-38, %v1538
        %v1540 = vsel %vm1537, %v1539, %v1535
        %v1541 = vmul.f32 %v1516, %v1540
        %v1542 = vmin.f32 %v1541, 1.0
        %v1543 = vmax.f32 %v1542, -1.0
        %v1544 = vadd.f32 %v1503, 1.0
        %v1545 = vadd.f32 %v1543, 1.0
        %v1546 = vmul.f32 %v1453, %v1544
        %v1547 = vmul.f32 %v1454, %v1545
        %v1548 = vld [vmem:[%s12] sm:$0xff]
        %v1549 = vld [vmem:[%s12 + $0x8] sm:$0xff]
        %v1550 = vld [vmem:[%s12 + $0x10] sm:$0xff]
        %v1551 = vld [vmem:[%s12 + $0x18] sm:$0xff]
        %v1552 = vld [vmem:[%s12 + $0x20] sm:$0xff]
        %v1553 = vld [vmem:[%s12 + $0x28] sm:$0xff]
        %v1554 = vld [vmem:[%s12 + $0x30] sm:$0xff]
        %v1555 = vld [vmem:[%s12 + $0x38] sm:$0xff]
        %v1556 = vld [vmem:[%s12 + $0x40] sm:$0xff]
        %v1557 = vld [vmem:[%s12 + $0x48] sm:$0xff]
        %v1558 = vld [vmem:[%s12 + $0x50] sm:$0xff]
        %v1559 = vld [vmem:[%s12 + $0x58] sm:$0xff]
        %v1560 = vld [vmem:[%s12 + $0x60] sm:$0xff]
        %v1561 = vld [vmem:[%s12 + $0x68] sm:$0xff]
        %v1562 = vld [vmem:[%s12 + $0x70] sm:$0xff]
        %v1563 = vld [vmem:[%s12 + $0x78] sm:$0xff]
        %1564 = vmatpush.msra.mxu0 %v1563
        %1565 = vmatpush.msra.mxu0 %v1562
        %1566 = vmatpush.msra.mxu0 %v1561
        %1567 = vmatpush.msra.mxu0 %v1560
        %1568 = vmatpush.msra.mxu0 %v1559
        %1569 = vmatpush.msra.mxu0 %v1558
        %1570 = vmatpush.msra.mxu0 %v1557
        %1571 = vmatpush.msra.mxu0 %v1556
        %1572 = vmatpush.msra.mxu0 %v1555
        %1573 = vmatpush.msra.mxu0 %v1554
        %1574 = vmatpush.msra.mxu0 %v1553
        %1575 = vmatpush.msra.mxu0 %v1552
        %1576 = vmatpush.msra.mxu0 %v1551
        %1577 = vmatpush.msra.mxu0 %v1550
        %1578 = vmatpush.msra.mxu0 %v1549
        %1579 = vmatpush.msra.mxu0 %v1548
        %1580 = vmatmul.f32.gmra.mxu0 %v1546
        %v1581 = vpop.f32.mrf.mxu0
        %v1582 = vadd.f32 0.0, %v1581
        %1583 = vmatmul.f32.gmra.mxu0 %v1547
        %v1584 = vpop.f32.mrf.mxu0
        %v1585 = vadd.f32 0.0, %v1584
        %1586 = vdwg.mxu0
        %v1587 = vadd.f32 %v1362, %v1582
        %v1588 = vadd.f32 %v1363, %v1585
        %s1589 = scalar_lea.vmem %s2, 1
        %v1590 = vld [vmem:[%s1589] sm:$0x1]
        %s1591 = scalar_lea.vmem %s3, 1
        %v1592 = vld [vmem:[%s1591] sm:$0x1]
        %v1594 = vperm.slane %v1590, 0
        %v1596 = vmul.f32 %v551, %v1594
        %v1597 = vmul.f32 %v552, %v1594
        %v1599 = vperm.slane %v1592, 0
        %v1601 = vadd.f32 %v1596, %v1599
        %v1602 = vadd.f32 %v1597, %v1599
        %s1603 = scalar_lea.vmem %s4, 1
        %v1604 = vld [vmem:[%s1603] sm:$0x1]
        %s1605 = scalar_lea.vmem %s5, 1
        %v1606 = vld [vmem:[%s1605] sm:$0x1]
        %v1607 = vsel %vm501, %v1587, 0.0
        %1608 = vadd.xlane.f32.xlu0 %v1607
        %v1609 = vpop.xlane.xlu0 %1608
        %v1610 = vsel %vm501, %v1588, 0.0
        %1611 = vadd.xlane.f32.xlu0 %v1610
        %v1612 = vpop.xlane.xlu0 %1611
        %v1613 = vmul.f32 %v1609, %v514
        %v1614 = vmul.f32 %v1612, %v514
        %v1615 = vsub.f32 %v1587, %v1613
        %v1616 = vsub.f32 %v1588, %v1614
        %v1617 = vmul.f32 %v1615, %v1615
        %v1618 = vmul.f32 %v1616, %v1616
        %v1619 = vsel %vm501, %v1617, 0.0
        %1620 = vadd.xlane.f32.xlu0 %v1619
        %v1621 = vpop.xlane.xlu0 %1620
        %v1622 = vsel %vm501, %v1618, 0.0
        %1623 = vadd.xlane.f32.xlu0 %v1622
        %v1624 = vpop.xlane.xlu0 %1623
        %v1625 = vmul.f32 %v1621, %v514
        %v1626 = vmul.f32 %v1624, %v514
        %v1627 = vadd.f32 %v1625, 1e-05
        %v1628 = vadd.f32 %v1626, 1e-05
        %v1629 = vrsqrt.pop %v1627
        %v1630 = vmul.f32 %v1629, %v1627
        %v1631 = vmul.f32 %v1630, %v1629
        %v1632 = vmul.f32 0.5, %v1631
        %v1633 = vsub.f32 1.5, %v1632
        %v1634 = vmul.f32 %v1629, %v1633
        %vm1635 = vweird.f32 %v1627
        %vm1636 = vweird.f32 %v1629
        %vm1637 = vmor %vm1635, %vm1636
        %v1638 = vsel %vm1637, %v1629, %v1634
        %v1639 = vrsqrt.pop %v1628
        %v1640 = vmul.f32 %v1639, %v1628
        %v1641 = vmul.f32 %v1640, %v1639
        %v1642 = vmul.f32 0.5, %v1641
        %v1643 = vsub.f32 1.5, %v1642
        %v1644 = vmul.f32 %v1639, %v1643
        %vm1645 = vweird.f32 %v1628
        %vm1646 = vweird.f32 %v1639
        %vm1647 = vmor %vm1645, %vm1646
        %v1648 = vsel %vm1647, %v1639, %v1644
        %v1649 = vmul.f32 %v1615, %v1638
        %v1650 = vmul.f32 %v1616, %v1648
        %v1652 = vperm.slane %v1604, 0
        %v1654 = vmul.f32 %v1649, %v1652
        %v1655 = vmul.f32 %v1650, %v1652
        %v1657 = vperm.slane %v1606, 0
        %v1659 = vadd.f32 %v1654, %v1657
        %v1660 = vadd.f32 %v1655, %v1657
        %s1661 = scalar_lea.vmem %s6, 32
        %v1662 = vld [vmem:[%s1661] sm:$0xff]
        %v1663 = vld [vmem:[%s1661 + $0x8] sm:$0xff]
        %v1664 = vld [vmem:[%s1661 + $0x10] sm:$0xff]
        %v1665 = vld [vmem:[%s1661 + $0x18] sm:$0xff]
        %v1667 = vsel %vm501, %v1659, 0
        %v1670 = vsel %vm501, %v1660, 0
        %1672 = vmatpush.msra.mxu0 0.0
        %1673 = vmatpush.msra.mxu0 0.0
        %1674 = vmatpush.msra.mxu0 0.0
        %1675 = vmatpush.msra.mxu0 0.0
        %1676 = vmatpush.msra.mxu0 0.0
        %1677 = vmatpush.msra.mxu0 0.0
        %1678 = vmatpush.msra.mxu0 0.0
        %1679 = vmatpush.msra.mxu0 0.0
        %1680 = vmatpush.msra.mxu0 0.0
        %1681 = vmatpush.msra.mxu0 0.0
        %1682 = vmatpush.msra.mxu0 0.0
        %1683 = vmatpush.msra.mxu0 0.0
        %1684 = vmatpush.msra.mxu0 %v1665
        %1685 = vmatpush.msra.mxu0 %v1664
        %1686 = vmatpush.msra.mxu0 %v1663
        %1687 = vmatpush.msra.mxu0 %v1662
        %1688 = vmatmul.f32.gmra.mxu0 %v1667
        %v1689 = vpop.f32.mrf.mxu0
        %v1690 = vadd.f32 0.0, %v1689
        %1691 = vmatmul.f32.gmra.mxu0 %v1670
        %v1692 = vpop.f32.mrf.mxu0
        %v1693 = vadd.f32 0.0, %v1692
        %1694 = vdwg.mxu0
        %s1695 = scalar_lea.vmem %s7, 32
        %v1696 = vld [vmem:[%s1695] sm:$0xff]
        %v1697 = vld [vmem:[%s1695 + $0x8] sm:$0xff]
        %v1698 = vld [vmem:[%s1695 + $0x10] sm:$0xff]
        %v1699 = vld [vmem:[%s1695 + $0x18] sm:$0xff]
        %v1701 = vsel %vm501, %v1601, 0
        %v1704 = vsel %vm501, %v1602, 0
        %1706 = vmatpush.msra.mxu0 0.0
        %1707 = vmatpush.msra.mxu0 0.0
        %1708 = vmatpush.msra.mxu0 0.0
        %1709 = vmatpush.msra.mxu0 0.0
        %1710 = vmatpush.msra.mxu0 0.0
        %1711 = vmatpush.msra.mxu0 0.0
        %1712 = vmatpush.msra.mxu0 0.0
        %1713 = vmatpush.msra.mxu0 0.0
        %1714 = vmatpush.msra.mxu0 0.0
        %1715 = vmatpush.msra.mxu0 0.0
        %1716 = vmatpush.msra.mxu0 0.0
        %1717 = vmatpush.msra.mxu0 0.0
        %1718 = vmatpush.msra.mxu0 %v1699
        %1719 = vmatpush.msra.mxu0 %v1698
        %1720 = vmatpush.msra.mxu0 %v1697
        %1721 = vmatpush.msra.mxu0 %v1696
        %1722 = vmatmul.f32.gmra.mxu0 %v1701
        %v1723 = vpop.f32.mrf.mxu0
        %v1724 = vadd.f32 0.0, %v1723
        %1725 = vmatmul.f32.gmra.mxu0 %v1704
        %v1726 = vpop.f32.mrf.mxu0
        %v1727 = vadd.f32 0.0, %v1726
        %1728 = vdwg.mxu0
        %v1729 = vmul.f32 %v1690, 0.35355338
        %v1730 = vmul.f32 %v1693, 0.35355338
        %1733 = vrot.lane.b32.xlu0 %v1690, 96
        %v1734 = vpop.permute.xlu0 %1733
        %1735 = vrot.lane.b32.xlu0 %v1693, 96
        %v1736 = vpop.permute.xlu0 %1735
        %s1737 = scalar_lea.vmem %s8, 32
        %v1738 = vld [vmem:[%s1737] sm:$0xff]
        %v1739 = vld [vmem:[%s1737 + $0x8] sm:$0xff]
        %v1740 = vld [vmem:[%s1737 + $0x10] sm:$0xff]
        %v1741 = vld [vmem:[%s1737 + $0x18] sm:$0xff]
        %v1743 = vsel %vm670, %v1729, 0
        %v1746 = vsel %vm670, %v1724, 0
        %v1748 = vsel %vm670, %v1734, 0
        %1750 = vmatpush.xpose.msra.mxu0 0.0
        %1751 = vmatpush.xpose.msra.mxu0 0.0
        %1752 = vmatpush.xpose.msra.mxu0 0.0
        %1753 = vmatpush.xpose.msra.mxu0 0.0
        %1754 = vmatpush.xpose.msra.mxu0 0.0
        %1755 = vmatpush.xpose.msra.mxu0 0.0
        %1756 = vmatpush.xpose.msra.mxu0 0.0
        %1757 = vmatpush.xpose.msra.mxu0 0.0
        %1758 = vmatpush.xpose.msra.mxu0 0.0
        %1759 = vmatpush.xpose.msra.mxu0 0.0
        %1760 = vmatpush.xpose.msra.mxu0 0.0
        %1761 = vmatpush.xpose.msra.mxu0 0.0
        %1762 = vmatpush.xpose.msra.mxu0 0.0
        %1763 = vmatpush.xpose.msra.mxu0 0.0
        %1764 = vmatpush.xpose.msra.mxu0 %v1748
        %1765 = vmatpush.xpose.msra.mxu0 %v1746
        %1766 = vmatmul.f32.gmra.mxu0 %v1743
        %v1767 = vpop.f32.mrf.mxu0
        %v1768 = vadd.f32 0.0, %v1767
        %1769 = vdwg.mxu0
        %v1771 = vsel %vm670, %v1730, 0
        %v1774 = vsel %vm670, %v1727, 0
        %v1776 = vsel %vm670, %v1736, 0
        %1778 = vmatpush.xpose.msra.mxu0 0.0
        %1779 = vmatpush.xpose.msra.mxu0 0.0
        %1780 = vmatpush.xpose.msra.mxu0 0.0
        %1781 = vmatpush.xpose.msra.mxu0 0.0
        %1782 = vmatpush.xpose.msra.mxu0 0.0
        %1783 = vmatpush.xpose.msra.mxu0 0.0
        %1784 = vmatpush.xpose.msra.mxu0 0.0
        %1785 = vmatpush.xpose.msra.mxu0 0.0
        %1786 = vmatpush.xpose.msra.mxu0 0.0
        %1787 = vmatpush.xpose.msra.mxu0 0.0
        %1788 = vmatpush.xpose.msra.mxu0 0.0
        %1789 = vmatpush.xpose.msra.mxu0 0.0
        %1790 = vmatpush.xpose.msra.mxu0 0.0
        %1791 = vmatpush.xpose.msra.mxu0 0.0
        %1792 = vmatpush.xpose.msra.mxu0 %v1776
        %1793 = vmatpush.xpose.msra.mxu0 %v1774
        %1794 = vmatmul.f32.gmra.mxu0 %v1771
        %v1795 = vpop.f32.mrf.mxu0
        %v1796 = vadd.f32 0.0, %v1795
        %1797 = vdwg.mxu0
        %v1798 = vsel %vm727, %v1768, -inf
        %1799 = vmax.xlane.f32.xlu0 %v1798
        %v1800 = vpop.xlane.xlu0 %1799
        %v1801 = vsel %vm727, %v1796, -inf
        %1802 = vmax.xlane.f32.xlu0 %v1801
        %v1803 = vpop.xlane.xlu0 %1802
        %v1804 = vsub.f32 %v1768, %v1800
        %v1805 = vsub.f32 %v1796, %v1803
        %v1806 = vmul.f32 %v1804, 1.442695
        %v1807 = vpow.pop %v1806
        %v1808 = vmul.f32 %v1805, 1.442695
        %v1809 = vpow.pop %v1808
        %v1810 = vsel %vm727, %v1807, 0.0
        %1811 = vadd.xlane.f32.xlu0 %v1810
        %v1812 = vpop.xlane.xlu0 %1811
        %v1813 = vsel %vm727, %v1809, 0.0
        %1814 = vadd.xlane.f32.xlu0 %v1813
        %v1815 = vpop.xlane.xlu0 %1814
        %v1816 = vrcp.pop %v1812
        %v1817 = vrcp.pop %v1815
        %v1818 = vmul.f32 %v1807, %v1816
        %v1819 = vmul.f32 %v1809, %v1817
        %1820 = vrot.lane.b32.xlu0 %v1724, 96
        %v1821 = vpop.permute.xlu0 %1820
        %1822 = vrot.lane.b32.xlu0 %v1734, 96
        %v1823 = vpop.permute.xlu0 %1822
        %v1827 = vsel %vm727, %v1818, 0
        %1829 = vmatpush.msra.mxu0 0.0
        %1830 = vmatpush.msra.mxu0 0.0
        %1831 = vmatpush.msra.mxu0 0.0
        %1832 = vmatpush.msra.mxu0 0.0
        %1833 = vmatpush.msra.mxu0 0.0
        %1834 = vmatpush.msra.mxu0 0.0
        %1835 = vmatpush.msra.mxu0 0.0
        %1836 = vmatpush.msra.mxu0 0.0
        %1837 = vmatpush.msra.mxu0 0.0
        %1838 = vmatpush.msra.mxu0 0.0
        %1839 = vmatpush.msra.mxu0 0.0
        %1840 = vmatpush.msra.mxu0 0.0
        %1841 = vmatpush.msra.mxu0 0.0
        %1842 = vmatpush.msra.mxu0 0.0
        %1843 = vmatpush.msra.mxu0 %v1823
        %1844 = vmatpush.msra.mxu0 %v1821
        %1845 = vmatmul.f32.gmra.mxu0 %v1827
        %v1846 = vpop.f32.mrf.mxu0
        %v1847 = vadd.f32 0.0, %v1846
        %1848 = vdwg.mxu0
        %1849 = vrot.lane.b32.xlu0 %v1727, 96
        %v1850 = vpop.permute.xlu0 %1849
        %1851 = vrot.lane.b32.xlu0 %v1736, 96
        %v1852 = vpop.permute.xlu0 %1851
        %v1856 = vsel %vm727, %v1819, 0
        %1858 = vmatpush.msra.mxu0 0.0
        %1859 = vmatpush.msra.mxu0 0.0
        %1860 = vmatpush.msra.mxu0 0.0
        %1861 = vmatpush.msra.mxu0 0.0
        %1862 = vmatpush.msra.mxu0 0.0
        %1863 = vmatpush.msra.mxu0 0.0
        %1864 = vmatpush.msra.mxu0 0.0
        %1865 = vmatpush.msra.mxu0 0.0
        %1866 = vmatpush.msra.mxu0 0.0
        %1867 = vmatpush.msra.mxu0 0.0
        %1868 = vmatpush.msra.mxu0 0.0
        %1869 = vmatpush.msra.mxu0 0.0
        %1870 = vmatpush.msra.mxu0 0.0
        %1871 = vmatpush.msra.mxu0 0.0
        %1872 = vmatpush.msra.mxu0 %v1852
        %1873 = vmatpush.msra.mxu0 %v1850
        %1874 = vmatmul.f32.gmra.mxu0 %v1856
        %v1875 = vpop.f32.mrf.mxu0
        %v1876 = vadd.f32 0.0, %v1875
        %1877 = vdwg.mxu0
        %v1879 = vsel %vm670, %v1847, 0
        %v1882 = vsel %vm670, %v1876, 0
        %1884 = vmatpush.msra.mxu0 0.0
        %1885 = vmatpush.msra.mxu0 0.0
        %1886 = vmatpush.msra.mxu0 0.0
        %1887 = vmatpush.msra.mxu0 0.0
        %1888 = vmatpush.msra.mxu0 0.0
        %1889 = vmatpush.msra.mxu0 0.0
        %1890 = vmatpush.msra.mxu0 0.0
        %1891 = vmatpush.msra.mxu0 0.0
        %1892 = vmatpush.msra.mxu0 0.0
        %1893 = vmatpush.msra.mxu0 0.0
        %1894 = vmatpush.msra.mxu0 0.0
        %1895 = vmatpush.msra.mxu0 0.0
        %1896 = vmatpush.msra.mxu0 0.0
        %1897 = vmatpush.msra.mxu0 0.0
        %1898 = vmatpush.msra.mxu0 0.0
        %1899 = vmatpush.msra.mxu0 %v1738
        %1900 = vmatmul.f32.gmra.mxu0 %v1879
        %v1901 = vpop.f32.mrf.mxu0
        %v1902 = vadd.f32 0.0, %v1901
        %1903 = vmatmul.f32.gmra.mxu0 %v1882
        %v1904 = vpop.f32.mrf.mxu0
        %v1905 = vadd.f32 0.0, %v1904
        %1906 = vdwg.mxu0
        %v1907 = vadd.f32 %v1587, %v1902
        %v1908 = vadd.f32 %v1588, %v1905
        %1909 = vrot.lane.b32.xlu0 %v1729, 120
        %v1910 = vpop.permute.xlu0 %1909
        %1911 = vrot.lane.b32.xlu0 %v1724, 120
        %v1912 = vpop.permute.xlu0 %1911
        %1913 = vrot.lane.b32.xlu0 %v1734, 120
        %v1914 = vpop.permute.xlu0 %1913
        %v1915 = vsel %vm670, %v1910, 0
        %v1917 = vsel %vm670, %v1912, 0
        %v1919 = vsel %vm670, %v1914, 0
        %1921 = vmatpush.xpose.msra.mxu0 0.0
        %1922 = vmatpush.xpose.msra.mxu0 0.0
        %1923 = vmatpush.xpose.msra.mxu0 0.0
        %1924 = vmatpush.xpose.msra.mxu0 0.0
        %1925 = vmatpush.xpose.msra.mxu0 0.0
        %1926 = vmatpush.xpose.msra.mxu0 0.0
        %1927 = vmatpush.xpose.msra.mxu0 0.0
        %1928 = vmatpush.xpose.msra.mxu0 0.0
        %1929 = vmatpush.xpose.msra.mxu0 0.0
        %1930 = vmatpush.xpose.msra.mxu0 0.0
        %1931 = vmatpush.xpose.msra.mxu0 0.0
        %1932 = vmatpush.xpose.msra.mxu0 0.0
        %1933 = vmatpush.xpose.msra.mxu0 0.0
        %1934 = vmatpush.xpose.msra.mxu0 0.0
        %1935 = vmatpush.xpose.msra.mxu0 %v1919
        %1936 = vmatpush.xpose.msra.mxu0 %v1917
        %1937 = vmatmul.f32.gmra.mxu0 %v1915
        %v1938 = vpop.f32.mrf.mxu0
        %v1939 = vadd.f32 0.0, %v1938
        %1940 = vdwg.mxu0
        %1941 = vrot.lane.b32.xlu0 %v1730, 120
        %v1942 = vpop.permute.xlu0 %1941
        %1943 = vrot.lane.b32.xlu0 %v1727, 120
        %v1944 = vpop.permute.xlu0 %1943
        %1945 = vrot.lane.b32.xlu0 %v1736, 120
        %v1946 = vpop.permute.xlu0 %1945
        %v1947 = vsel %vm670, %v1942, 0
        %v1949 = vsel %vm670, %v1944, 0
        %v1951 = vsel %vm670, %v1946, 0
        %1953 = vmatpush.xpose.msra.mxu0 0.0
        %1954 = vmatpush.xpose.msra.mxu0 0.0
        %1955 = vmatpush.xpose.msra.mxu0 0.0
        %1956 = vmatpush.xpose.msra.mxu0 0.0
        %1957 = vmatpush.xpose.msra.mxu0 0.0
        %1958 = vmatpush.xpose.msra.mxu0 0.0
        %1959 = vmatpush.xpose.msra.mxu0 0.0
        %1960 = vmatpush.xpose.msra.mxu0 0.0
        %1961 = vmatpush.xpose.msra.mxu0 0.0
        %1962 = vmatpush.xpose.msra.mxu0 0.0
        %1963 = vmatpush.xpose.msra.mxu0 0.0
        %1964 = vmatpush.xpose.msra.mxu0 0.0
        %1965 = vmatpush.xpose.msra.mxu0 0.0
        %1966 = vmatpush.xpose.msra.mxu0 0.0
        %1967 = vmatpush.xpose.msra.mxu0 %v1951
        %1968 = vmatpush.xpose.msra.mxu0 %v1949
        %1969 = vmatmul.f32.gmra.mxu0 %v1947
        %v1970 = vpop.f32.mrf.mxu0
        %v1971 = vadd.f32 0.0, %v1970
        %1972 = vdwg.mxu0
        %v1973 = vsel %vm727, %v1939, -inf
        %1974 = vmax.xlane.f32.xlu0 %v1973
        %v1975 = vpop.xlane.xlu0 %1974
        %v1976 = vsel %vm727, %v1971, -inf
        %1977 = vmax.xlane.f32.xlu0 %v1976
        %v1978 = vpop.xlane.xlu0 %1977
        %v1979 = vsub.f32 %v1939, %v1975
        %v1980 = vsub.f32 %v1971, %v1978
        %v1981 = vmul.f32 %v1979, 1.442695
        %v1982 = vpow.pop %v1981
        %v1983 = vmul.f32 %v1980, 1.442695
        %v1984 = vpow.pop %v1983
        %v1985 = vsel %vm727, %v1982, 0.0
        %1986 = vadd.xlane.f32.xlu0 %v1985
        %v1987 = vpop.xlane.xlu0 %1986
        %v1988 = vsel %vm727, %v1984, 0.0
        %1989 = vadd.xlane.f32.xlu0 %v1988
        %v1990 = vpop.xlane.xlu0 %1989
        %v1991 = vrcp.pop %v1987
        %v1992 = vrcp.pop %v1990
        %v1993 = vmul.f32 %v1982, %v1991
        %v1994 = vmul.f32 %v1984, %v1992
        %1995 = vrot.lane.b32.xlu0 %v1724, 88
        %v1996 = vpop.permute.xlu0 %1995
        %1997 = vrot.lane.b32.xlu0 %v1734, 88
        %v1998 = vpop.permute.xlu0 %1997
        %v2002 = vsel %vm727, %v1993, 0
        %2004 = vmatpush.msra.mxu0 0.0
        %2005 = vmatpush.msra.mxu0 0.0
        %2006 = vmatpush.msra.mxu0 0.0
        %2007 = vmatpush.msra.mxu0 0.0
        %2008 = vmatpush.msra.mxu0 0.0
        %2009 = vmatpush.msra.mxu0 0.0
        %2010 = vmatpush.msra.mxu0 0.0
        %2011 = vmatpush.msra.mxu0 0.0
        %2012 = vmatpush.msra.mxu0 0.0
        %2013 = vmatpush.msra.mxu0 0.0
        %2014 = vmatpush.msra.mxu0 0.0
        %2015 = vmatpush.msra.mxu0 0.0
        %2016 = vmatpush.msra.mxu0 0.0
        %2017 = vmatpush.msra.mxu0 0.0
        %2018 = vmatpush.msra.mxu0 %v1998
        %2019 = vmatpush.msra.mxu0 %v1996
        %2020 = vmatmul.f32.gmra.mxu0 %v2002
        %v2021 = vpop.f32.mrf.mxu0
        %v2022 = vadd.f32 0.0, %v2021
        %2023 = vdwg.mxu0
        %2024 = vrot.lane.b32.xlu0 %v1727, 88
        %v2025 = vpop.permute.xlu0 %2024
        %2026 = vrot.lane.b32.xlu0 %v1736, 88
        %v2027 = vpop.permute.xlu0 %2026
        %v2031 = vsel %vm727, %v1994, 0
        %2033 = vmatpush.msra.mxu0 0.0
        %2034 = vmatpush.msra.mxu0 0.0
        %2035 = vmatpush.msra.mxu0 0.0
        %2036 = vmatpush.msra.mxu0 0.0
        %2037 = vmatpush.msra.mxu0 0.0
        %2038 = vmatpush.msra.mxu0 0.0
        %2039 = vmatpush.msra.mxu0 0.0
        %2040 = vmatpush.msra.mxu0 0.0
        %2041 = vmatpush.msra.mxu0 0.0
        %2042 = vmatpush.msra.mxu0 0.0
        %2043 = vmatpush.msra.mxu0 0.0
        %2044 = vmatpush.msra.mxu0 0.0
        %2045 = vmatpush.msra.mxu0 0.0
        %2046 = vmatpush.msra.mxu0 0.0
        %2047 = vmatpush.msra.mxu0 %v2027
        %2048 = vmatpush.msra.mxu0 %v2025
        %2049 = vmatmul.f32.gmra.mxu0 %v2031
        %v2050 = vpop.f32.mrf.mxu0
        %v2051 = vadd.f32 0.0, %v2050
        %2052 = vdwg.mxu0
        %v2054 = vsel %vm670, %v2022, 0
        %v2057 = vsel %vm670, %v2051, 0
        %2059 = vmatpush.msra.mxu0 0.0
        %2060 = vmatpush.msra.mxu0 0.0
        %2061 = vmatpush.msra.mxu0 0.0
        %2062 = vmatpush.msra.mxu0 0.0
        %2063 = vmatpush.msra.mxu0 0.0
        %2064 = vmatpush.msra.mxu0 0.0
        %2065 = vmatpush.msra.mxu0 0.0
        %2066 = vmatpush.msra.mxu0 0.0
        %2067 = vmatpush.msra.mxu0 0.0
        %2068 = vmatpush.msra.mxu0 0.0
        %2069 = vmatpush.msra.mxu0 0.0
        %2070 = vmatpush.msra.mxu0 0.0
        %2071 = vmatpush.msra.mxu0 0.0
        %2072 = vmatpush.msra.mxu0 0.0
        %2073 = vmatpush.msra.mxu0 0.0
        %2074 = vmatpush.msra.mxu0 %v1739
        %2075 = vmatmul.f32.gmra.mxu0 %v2054
        %v2076 = vpop.f32.mrf.mxu0
        %v2077 = vadd.f32 0.0, %v2076
        %2078 = vmatmul.f32.gmra.mxu0 %v2057
        %v2079 = vpop.f32.mrf.mxu0
        %v2080 = vadd.f32 0.0, %v2079
        %2081 = vdwg.mxu0
        %v2082 = vadd.f32 %v1907, %v2077
        %v2083 = vadd.f32 %v1908, %v2080
        %2084 = vrot.lane.b32.xlu0 %v1729, 112
        %v2085 = vpop.permute.xlu0 %2084
        %2086 = vrot.lane.b32.xlu0 %v1724, 112
        %v2087 = vpop.permute.xlu0 %2086
        %2088 = vrot.lane.b32.xlu0 %v1734, 112
        %v2089 = vpop.permute.xlu0 %2088
        %v2090 = vsel %vm670, %v2085, 0
        %v2092 = vsel %vm670, %v2087, 0
        %v2094 = vsel %vm670, %v2089, 0
        %2096 = vmatpush.xpose.msra.mxu0 0.0
        %2097 = vmatpush.xpose.msra.mxu0 0.0
        %2098 = vmatpush.xpose.msra.mxu0 0.0
        %2099 = vmatpush.xpose.msra.mxu0 0.0
        %2100 = vmatpush.xpose.msra.mxu0 0.0
        %2101 = vmatpush.xpose.msra.mxu0 0.0
        %2102 = vmatpush.xpose.msra.mxu0 0.0
        %2103 = vmatpush.xpose.msra.mxu0 0.0
        %2104 = vmatpush.xpose.msra.mxu0 0.0
        %2105 = vmatpush.xpose.msra.mxu0 0.0
        %2106 = vmatpush.xpose.msra.mxu0 0.0
        %2107 = vmatpush.xpose.msra.mxu0 0.0
        %2108 = vmatpush.xpose.msra.mxu0 0.0
        %2109 = vmatpush.xpose.msra.mxu0 0.0
        %2110 = vmatpush.xpose.msra.mxu0 %v2094
        %2111 = vmatpush.xpose.msra.mxu0 %v2092
        %2112 = vmatmul.f32.gmra.mxu0 %v2090
        %v2113 = vpop.f32.mrf.mxu0
        %v2114 = vadd.f32 0.0, %v2113
        %2115 = vdwg.mxu0
        %2116 = vrot.lane.b32.xlu0 %v1730, 112
        %v2117 = vpop.permute.xlu0 %2116
        %2118 = vrot.lane.b32.xlu0 %v1727, 112
        %v2119 = vpop.permute.xlu0 %2118
        %2120 = vrot.lane.b32.xlu0 %v1736, 112
        %v2121 = vpop.permute.xlu0 %2120
        %v2122 = vsel %vm670, %v2117, 0
        %v2124 = vsel %vm670, %v2119, 0
        %v2126 = vsel %vm670, %v2121, 0
        %2128 = vmatpush.xpose.msra.mxu0 0.0
        %2129 = vmatpush.xpose.msra.mxu0 0.0
        %2130 = vmatpush.xpose.msra.mxu0 0.0
        %2131 = vmatpush.xpose.msra.mxu0 0.0
        %2132 = vmatpush.xpose.msra.mxu0 0.0
        %2133 = vmatpush.xpose.msra.mxu0 0.0
        %2134 = vmatpush.xpose.msra.mxu0 0.0
        %2135 = vmatpush.xpose.msra.mxu0 0.0
        %2136 = vmatpush.xpose.msra.mxu0 0.0
        %2137 = vmatpush.xpose.msra.mxu0 0.0
        %2138 = vmatpush.xpose.msra.mxu0 0.0
        %2139 = vmatpush.xpose.msra.mxu0 0.0
        %2140 = vmatpush.xpose.msra.mxu0 0.0
        %2141 = vmatpush.xpose.msra.mxu0 0.0
        %2142 = vmatpush.xpose.msra.mxu0 %v2126
        %2143 = vmatpush.xpose.msra.mxu0 %v2124
        %2144 = vmatmul.f32.gmra.mxu0 %v2122
        %v2145 = vpop.f32.mrf.mxu0
        %v2146 = vadd.f32 0.0, %v2145
        %2147 = vdwg.mxu0
        %v2148 = vsel %vm727, %v2114, -inf
        %2149 = vmax.xlane.f32.xlu0 %v2148
        %v2150 = vpop.xlane.xlu0 %2149
        %v2151 = vsel %vm727, %v2146, -inf
        %2152 = vmax.xlane.f32.xlu0 %v2151
        %v2153 = vpop.xlane.xlu0 %2152
        %v2154 = vsub.f32 %v2114, %v2150
        %v2155 = vsub.f32 %v2146, %v2153
        %v2156 = vmul.f32 %v2154, 1.442695
        %v2157 = vpow.pop %v2156
        %v2158 = vmul.f32 %v2155, 1.442695
        %v2159 = vpow.pop %v2158
        %v2160 = vsel %vm727, %v2157, 0.0
        %2161 = vadd.xlane.f32.xlu0 %v2160
        %v2162 = vpop.xlane.xlu0 %2161
        %v2163 = vsel %vm727, %v2159, 0.0
        %2164 = vadd.xlane.f32.xlu0 %v2163
        %v2165 = vpop.xlane.xlu0 %2164
        %v2166 = vrcp.pop %v2162
        %v2167 = vrcp.pop %v2165
        %v2168 = vmul.f32 %v2157, %v2166
        %v2169 = vmul.f32 %v2159, %v2167
        %2170 = vrot.lane.b32.xlu0 %v1724, 80
        %v2171 = vpop.permute.xlu0 %2170
        %2172 = vrot.lane.b32.xlu0 %v1734, 80
        %v2173 = vpop.permute.xlu0 %2172
        %v2177 = vsel %vm727, %v2168, 0
        %2179 = vmatpush.msra.mxu0 0.0
        %2180 = vmatpush.msra.mxu0 0.0
        %2181 = vmatpush.msra.mxu0 0.0
        %2182 = vmatpush.msra.mxu0 0.0
        %2183 = vmatpush.msra.mxu0 0.0
        %2184 = vmatpush.msra.mxu0 0.0
        %2185 = vmatpush.msra.mxu0 0.0
        %2186 = vmatpush.msra.mxu0 0.0
        %2187 = vmatpush.msra.mxu0 0.0
        %2188 = vmatpush.msra.mxu0 0.0
        %2189 = vmatpush.msra.mxu0 0.0
        %2190 = vmatpush.msra.mxu0 0.0
        %2191 = vmatpush.msra.mxu0 0.0
        %2192 = vmatpush.msra.mxu0 0.0
        %2193 = vmatpush.msra.mxu0 %v2173
        %2194 = vmatpush.msra.mxu0 %v2171
        %2195 = vmatmul.f32.gmra.mxu0 %v2177
        %v2196 = vpop.f32.mrf.mxu0
        %v2197 = vadd.f32 0.0, %v2196
        %2198 = vdwg.mxu0
        %2199 = vrot.lane.b32.xlu0 %v1727, 80
        %v2200 = vpop.permute.xlu0 %2199
        %2201 = vrot.lane.b32.xlu0 %v1736, 80
        %v2202 = vpop.permute.xlu0 %2201
        %v2206 = vsel %vm727, %v2169, 0
        %2208 = vmatpush.msra.mxu0 0.0
        %2209 = vmatpush.msra.mxu0 0.0
        %2210 = vmatpush.msra.mxu0 0.0
        %2211 = vmatpush.msra.mxu0 0.0
        %2212 = vmatpush.msra.mxu0 0.0
        %2213 = vmatpush.msra.mxu0 0.0
        %2214 = vmatpush.msra.mxu0 0.0
        %2215 = vmatpush.msra.mxu0 0.0
        %2216 = vmatpush.msra.mxu0 0.0
        %2217 = vmatpush.msra.mxu0 0.0
        %2218 = vmatpush.msra.mxu0 0.0
        %2219 = vmatpush.msra.mxu0 0.0
        %2220 = vmatpush.msra.mxu0 0.0
        %2221 = vmatpush.msra.mxu0 0.0
        %2222 = vmatpush.msra.mxu0 %v2202
        %2223 = vmatpush.msra.mxu0 %v2200
        %2224 = vmatmul.f32.gmra.mxu0 %v2206
        %v2225 = vpop.f32.mrf.mxu0
        %v2226 = vadd.f32 0.0, %v2225
        %2227 = vdwg.mxu0
        %v2229 = vsel %vm670, %v2197, 0
        %v2232 = vsel %vm670, %v2226, 0
        %2234 = vmatpush.msra.mxu0 0.0
        %2235 = vmatpush.msra.mxu0 0.0
        %2236 = vmatpush.msra.mxu0 0.0
        %2237 = vmatpush.msra.mxu0 0.0
        %2238 = vmatpush.msra.mxu0 0.0
        %2239 = vmatpush.msra.mxu0 0.0
        %2240 = vmatpush.msra.mxu0 0.0
        %2241 = vmatpush.msra.mxu0 0.0
        %2242 = vmatpush.msra.mxu0 0.0
        %2243 = vmatpush.msra.mxu0 0.0
        %2244 = vmatpush.msra.mxu0 0.0
        %2245 = vmatpush.msra.mxu0 0.0
        %2246 = vmatpush.msra.mxu0 0.0
        %2247 = vmatpush.msra.mxu0 0.0
        %2248 = vmatpush.msra.mxu0 0.0
        %2249 = vmatpush.msra.mxu0 %v1740
        %2250 = vmatmul.f32.gmra.mxu0 %v2229
        %v2251 = vpop.f32.mrf.mxu0
        %v2252 = vadd.f32 0.0, %v2251
        %2253 = vmatmul.f32.gmra.mxu0 %v2232
        %v2254 = vpop.f32.mrf.mxu0
        %v2255 = vadd.f32 0.0, %v2254
        %2256 = vdwg.mxu0
        %v2257 = vadd.f32 %v2082, %v2252
        %v2258 = vadd.f32 %v2083, %v2255
        %2259 = vrot.lane.b32.xlu0 %v1729, 104
        %v2260 = vpop.permute.xlu0 %2259
        %2261 = vrot.lane.b32.xlu0 %v1724, 104
        %v2262 = vpop.permute.xlu0 %2261
        %2263 = vrot.lane.b32.xlu0 %v1734, 104
        %v2264 = vpop.permute.xlu0 %2263
        %v2265 = vsel %vm670, %v2260, 0
        %v2267 = vsel %vm670, %v2262, 0
        %v2269 = vsel %vm670, %v2264, 0
        %2271 = vmatpush.xpose.msra.mxu0 0.0
        %2272 = vmatpush.xpose.msra.mxu0 0.0
        %2273 = vmatpush.xpose.msra.mxu0 0.0
        %2274 = vmatpush.xpose.msra.mxu0 0.0
        %2275 = vmatpush.xpose.msra.mxu0 0.0
        %2276 = vmatpush.xpose.msra.mxu0 0.0
        %2277 = vmatpush.xpose.msra.mxu0 0.0
        %2278 = vmatpush.xpose.msra.mxu0 0.0
        %2279 = vmatpush.xpose.msra.mxu0 0.0
        %2280 = vmatpush.xpose.msra.mxu0 0.0
        %2281 = vmatpush.xpose.msra.mxu0 0.0
        %2282 = vmatpush.xpose.msra.mxu0 0.0
        %2283 = vmatpush.xpose.msra.mxu0 0.0
        %2284 = vmatpush.xpose.msra.mxu0 0.0
        %2285 = vmatpush.xpose.msra.mxu0 %v2269
        %2286 = vmatpush.xpose.msra.mxu0 %v2267
        %2287 = vmatmul.f32.gmra.mxu0 %v2265
        %v2288 = vpop.f32.mrf.mxu0
        %v2289 = vadd.f32 0.0, %v2288
        %2290 = vdwg.mxu0
        %2291 = vrot.lane.b32.xlu0 %v1730, 104
        %v2292 = vpop.permute.xlu0 %2291
        %2293 = vrot.lane.b32.xlu0 %v1727, 104
        %v2294 = vpop.permute.xlu0 %2293
        %2295 = vrot.lane.b32.xlu0 %v1736, 104
        %v2296 = vpop.permute.xlu0 %2295
        %v2297 = vsel %vm670, %v2292, 0
        %v2299 = vsel %vm670, %v2294, 0
        %v2301 = vsel %vm670, %v2296, 0
        %2303 = vmatpush.xpose.msra.mxu0 0.0
        %2304 = vmatpush.xpose.msra.mxu0 0.0
        %2305 = vmatpush.xpose.msra.mxu0 0.0
        %2306 = vmatpush.xpose.msra.mxu0 0.0
        %2307 = vmatpush.xpose.msra.mxu0 0.0
        %2308 = vmatpush.xpose.msra.mxu0 0.0
        %2309 = vmatpush.xpose.msra.mxu0 0.0
        %2310 = vmatpush.xpose.msra.mxu0 0.0
        %2311 = vmatpush.xpose.msra.mxu0 0.0
        %2312 = vmatpush.xpose.msra.mxu0 0.0
        %2313 = vmatpush.xpose.msra.mxu0 0.0
        %2314 = vmatpush.xpose.msra.mxu0 0.0
        %2315 = vmatpush.xpose.msra.mxu0 0.0
        %2316 = vmatpush.xpose.msra.mxu0 0.0
        %2317 = vmatpush.xpose.msra.mxu0 %v2301
        %2318 = vmatpush.xpose.msra.mxu0 %v2299
        %2319 = vmatmul.f32.gmra.mxu0 %v2297
        %v2320 = vpop.f32.mrf.mxu0
        %v2321 = vadd.f32 0.0, %v2320
        %2322 = vdwg.mxu0
        %v2323 = vsel %vm727, %v2289, -inf
        %2324 = vmax.xlane.f32.xlu0 %v2323
        %v2325 = vpop.xlane.xlu0 %2324
        %v2326 = vsel %vm727, %v2321, -inf
        %2327 = vmax.xlane.f32.xlu0 %v2326
        %v2328 = vpop.xlane.xlu0 %2327
        %v2329 = vsub.f32 %v2289, %v2325
        %v2330 = vsub.f32 %v2321, %v2328
        %v2331 = vmul.f32 %v2329, 1.442695
        %v2332 = vpow.pop %v2331
        %v2333 = vmul.f32 %v2330, 1.442695
        %v2334 = vpow.pop %v2333
        %v2335 = vsel %vm727, %v2332, 0.0
        %2336 = vadd.xlane.f32.xlu0 %v2335
        %v2337 = vpop.xlane.xlu0 %2336
        %v2338 = vsel %vm727, %v2334, 0.0
        %2339 = vadd.xlane.f32.xlu0 %v2338
        %v2340 = vpop.xlane.xlu0 %2339
        %v2341 = vrcp.pop %v2337
        %v2342 = vrcp.pop %v2340
        %v2343 = vmul.f32 %v2332, %v2341
        %v2344 = vmul.f32 %v2334, %v2342
        %2345 = vrot.lane.b32.xlu0 %v1724, 72
        %v2346 = vpop.permute.xlu0 %2345
        %2347 = vrot.lane.b32.xlu0 %v1734, 72
        %v2348 = vpop.permute.xlu0 %2347
        %v2352 = vsel %vm727, %v2343, 0
        %2354 = vmatpush.msra.mxu0 0.0
        %2355 = vmatpush.msra.mxu0 0.0
        %2356 = vmatpush.msra.mxu0 0.0
        %2357 = vmatpush.msra.mxu0 0.0
        %2358 = vmatpush.msra.mxu0 0.0
        %2359 = vmatpush.msra.mxu0 0.0
        %2360 = vmatpush.msra.mxu0 0.0
        %2361 = vmatpush.msra.mxu0 0.0
        %2362 = vmatpush.msra.mxu0 0.0
        %2363 = vmatpush.msra.mxu0 0.0
        %2364 = vmatpush.msra.mxu0 0.0
        %2365 = vmatpush.msra.mxu0 0.0
        %2366 = vmatpush.msra.mxu0 0.0
        %2367 = vmatpush.msra.mxu0 0.0
        %2368 = vmatpush.msra.mxu0 %v2348
        %2369 = vmatpush.msra.mxu0 %v2346
        %2370 = vmatmul.f32.gmra.mxu0 %v2352
        %v2371 = vpop.f32.mrf.mxu0
        %v2372 = vadd.f32 0.0, %v2371
        %2373 = vdwg.mxu0
        %2374 = vrot.lane.b32.xlu0 %v1727, 72
        %v2375 = vpop.permute.xlu0 %2374
        %2376 = vrot.lane.b32.xlu0 %v1736, 72
        %v2377 = vpop.permute.xlu0 %2376
        %v2381 = vsel %vm727, %v2344, 0
        %2383 = vmatpush.msra.mxu0 0.0
        %2384 = vmatpush.msra.mxu0 0.0
        %2385 = vmatpush.msra.mxu0 0.0
        %2386 = vmatpush.msra.mxu0 0.0
        %2387 = vmatpush.msra.mxu0 0.0
        %2388 = vmatpush.msra.mxu0 0.0
        %2389 = vmatpush.msra.mxu0 0.0
        %2390 = vmatpush.msra.mxu0 0.0
        %2391 = vmatpush.msra.mxu0 0.0
        %2392 = vmatpush.msra.mxu0 0.0
        %2393 = vmatpush.msra.mxu0 0.0
        %2394 = vmatpush.msra.mxu0 0.0
        %2395 = vmatpush.msra.mxu0 0.0
        %2396 = vmatpush.msra.mxu0 0.0
        %2397 = vmatpush.msra.mxu0 %v2377
        %2398 = vmatpush.msra.mxu0 %v2375
        %2399 = vmatmul.f32.gmra.mxu0 %v2381
        %v2400 = vpop.f32.mrf.mxu0
        %v2401 = vadd.f32 0.0, %v2400
        %2402 = vdwg.mxu0
        %v2404 = vsel %vm670, %v2372, 0
        %v2407 = vsel %vm670, %v2401, 0
        %2409 = vmatpush.msra.mxu0 0.0
        %2410 = vmatpush.msra.mxu0 0.0
        %2411 = vmatpush.msra.mxu0 0.0
        %2412 = vmatpush.msra.mxu0 0.0
        %2413 = vmatpush.msra.mxu0 0.0
        %2414 = vmatpush.msra.mxu0 0.0
        %2415 = vmatpush.msra.mxu0 0.0
        %2416 = vmatpush.msra.mxu0 0.0
        %2417 = vmatpush.msra.mxu0 0.0
        %2418 = vmatpush.msra.mxu0 0.0
        %2419 = vmatpush.msra.mxu0 0.0
        %2420 = vmatpush.msra.mxu0 0.0
        %2421 = vmatpush.msra.mxu0 0.0
        %2422 = vmatpush.msra.mxu0 0.0
        %2423 = vmatpush.msra.mxu0 0.0
        %2424 = vmatpush.msra.mxu0 %v1741
        %2425 = vmatmul.f32.gmra.mxu0 %v2404
        %v2426 = vpop.f32.mrf.mxu0
        %v2427 = vadd.f32 0.0, %v2426
        %2428 = vmatmul.f32.gmra.mxu0 %v2407
        %v2429 = vpop.f32.mrf.mxu0
        %v2430 = vadd.f32 0.0, %v2429
        %2431 = vdwg.mxu0
        %v2432 = vadd.f32 %v2257, %v2427
        %v2433 = vadd.f32 %v2258, %v2430
        %s2434 = scalar_lea.vmem %s9, 1
        %v2435 = vld [vmem:[%s2434] sm:$0x1]
        %s2436 = scalar_lea.vmem %s10, 1
        %v2437 = vld [vmem:[%s2436] sm:$0x1]
        %v2438 = vsel %vm501, %v2432, 0.0
        %2439 = vadd.xlane.f32.xlu0 %v2438
        %v2440 = vpop.xlane.xlu0 %2439
        %v2441 = vsel %vm501, %v2433, 0.0
        %2442 = vadd.xlane.f32.xlu0 %v2441
        %v2443 = vpop.xlane.xlu0 %2442
        %v2444 = vmul.f32 %v2440, %v514
        %v2445 = vmul.f32 %v2443, %v514
        %v2446 = vsub.f32 %v2432, %v2444
        %v2447 = vsub.f32 %v2433, %v2445
        %v2448 = vmul.f32 %v2446, %v2446
        %v2449 = vmul.f32 %v2447, %v2447
        %v2450 = vsel %vm501, %v2448, 0.0
        %2451 = vadd.xlane.f32.xlu0 %v2450
        %v2452 = vpop.xlane.xlu0 %2451
        %v2453 = vsel %vm501, %v2449, 0.0
        %2454 = vadd.xlane.f32.xlu0 %v2453
        %v2455 = vpop.xlane.xlu0 %2454
        %v2456 = vmul.f32 %v2452, %v514
        %v2457 = vmul.f32 %v2455, %v514
        %v2458 = vadd.f32 %v2456, 1e-05
        %v2459 = vadd.f32 %v2457, 1e-05
        %v2460 = vrsqrt.pop %v2458
        %v2461 = vmul.f32 %v2460, %v2458
        %v2462 = vmul.f32 %v2461, %v2460
        %v2463 = vmul.f32 0.5, %v2462
        %v2464 = vsub.f32 1.5, %v2463
        %v2465 = vmul.f32 %v2460, %v2464
        %vm2466 = vweird.f32 %v2458
        %vm2467 = vweird.f32 %v2460
        %vm2468 = vmor %vm2466, %vm2467
        %v2469 = vsel %vm2468, %v2460, %v2465
        %v2470 = vrsqrt.pop %v2459
        %v2471 = vmul.f32 %v2470, %v2459
        %v2472 = vmul.f32 %v2471, %v2470
        %v2473 = vmul.f32 0.5, %v2472
        %v2474 = vsub.f32 1.5, %v2473
        %v2475 = vmul.f32 %v2470, %v2474
        %vm2476 = vweird.f32 %v2459
        %vm2477 = vweird.f32 %v2470
        %vm2478 = vmor %vm2476, %vm2477
        %v2479 = vsel %vm2478, %v2470, %v2475
        %v2480 = vmul.f32 %v2446, %v2469
        %v2481 = vmul.f32 %v2447, %v2479
        %v2483 = vperm.slane %v2435, 0
        %v2485 = vmul.f32 %v2480, %v2483
        %v2486 = vmul.f32 %v2481, %v2483
        %v2488 = vperm.slane %v2437, 0
        %v2490 = vadd.f32 %v2485, %v2488
        %v2491 = vadd.f32 %v2486, %v2488
        %s2492 = scalar_lea.vmem %s11, 32
        %v2493 = vld [vmem:[%s2492] sm:$0xff]
        %v2494 = vld [vmem:[%s2492 + $0x8] sm:$0xff]
        %v2495 = vld [vmem:[%s2492 + $0x10] sm:$0xff]
        %v2496 = vld [vmem:[%s2492 + $0x18] sm:$0xff]
        %v2498 = vsel %vm501, %v2490, 0
        %v2501 = vsel %vm501, %v2491, 0
        %2503 = vmatpush.msra.mxu0 0.0
        %2504 = vmatpush.msra.mxu0 0.0
        %2505 = vmatpush.msra.mxu0 0.0
        %2506 = vmatpush.msra.mxu0 0.0
        %2507 = vmatpush.msra.mxu0 0.0
        %2508 = vmatpush.msra.mxu0 0.0
        %2509 = vmatpush.msra.mxu0 0.0
        %2510 = vmatpush.msra.mxu0 0.0
        %2511 = vmatpush.msra.mxu0 0.0
        %2512 = vmatpush.msra.mxu0 0.0
        %2513 = vmatpush.msra.mxu0 0.0
        %2514 = vmatpush.msra.mxu0 0.0
        %2515 = vmatpush.msra.mxu0 %v2496
        %2516 = vmatpush.msra.mxu0 %v2495
        %2517 = vmatpush.msra.mxu0 %v2494
        %2518 = vmatpush.msra.mxu0 %v2493
        %2519 = vmatmul.f32.gmra.mxu0 %v2498
        %v2520 = vpop.f32.mrf.mxu0
        %v2521 = vadd.f32 0.0, %v2520
        %2522 = vmatmul.f32.gmra.mxu0 %v2501
        %v2523 = vpop.f32.mrf.mxu0
        %v2524 = vadd.f32 0.0, %v2523
        %2525 = vdwg.mxu0
        %v2526 = vmul.f32 %v2521, 0.5
        %v2527 = vmul.f32 %v2524, 0.5
        %v2528 = vmul.f32 %v2521, %v1461
        %v2529 = vmul.f32 %v2524, %v1461
        %v2530 = vmul.f32 %v2528, %v2528
        %v2531 = vmin.f32 16.0, %v2530
        %v2532 = vmul.f32 %v2531, 2.1237322e-06
        %v2533 = vadd.f32 %v2532, 0.00028619796
        %v2534 = vmul.f32 %v2531, %v2533
        %v2535 = vadd.f32 %v2534, 0.0036580483
        %v2536 = vmul.f32 %v2531, %v2535
        %v2537 = vadd.f32 %v2536, 0.05243302
        %v2538 = vmul.f32 %v2531, %v2537
        %v2539 = vadd.f32 %v2538, 0.18741608
        %v2540 = vmul.f32 %v2531, %v2539
        %v2541 = vadd.f32 %v2540, 1.1283791
        %v2542 = vmul.f32 %v2528, %v2541
        %v2543 = vmul.f32 %v2531, 3.8918573e-05
        %v2544 = vadd.f32 %v2543, 0.001143296
        %v2545 = vmul.f32 %v2531, %v2544
        %v2546 = vadd.f32 %v2545, 0.014752088
        %v2547 = vmul.f32 %v2531, %v2546
        %v2548 = vadd.f32 %v2547, 0.112945676
        %v2549 = vmul.f32 %v2531, %v2548
        %v2550 = vadd.f32 %v2549, 0.4994258
        %v2551 = vmul.f32 %v2531, %v2550
        %v2552 = vadd.f32 %v2551, 1.0
        %v2553 = vrcp.pop %v2552
        %v2554 = vmul.f32 %v2552, %v2553
        %v2555 = vsub.f32 1.0, %v2554
        %v2556 = vmul.f32 %v2553, %v2555
        %v2557 = vadd.f32 %v2553, %v2556
        %vm2558 = vweird.f32 %v2552
        %vm2559 = vweird.f32 %v2553
        %vm2560 = vmor %vm2558, %vm2559
        %v2561 = vsel %vm2560, %v2553, %v2557
        %v2562 = vand.u32 2147483647, %v2552
        %vm2563 = vcmp.eq.f32.partialorder %v2562, 8.507059e+37
        %v2564 = vand.u32 %v2552, 2147483648
        %v2565 = vor.u32 1.1754944e-38, %v2564
        %v2566 = vsel %vm2563, %v2565, %v2561
        %v2567 = vmul.f32 %v2542, %v2566
        %v2568 = vmin.f32 %v2567, 1.0
        %v2569 = vmax.f32 %v2568, -1.0
        %v2570 = vmul.f32 %v2529, %v2529
        %v2571 = vmin.f32 16.0, %v2570
        %v2572 = vmul.f32 %v2571, 2.1237322e-06
        %v2573 = vadd.f32 %v2572, 0.00028619796
        %v2574 = vmul.f32 %v2571, %v2573
        %v2575 = vadd.f32 %v2574, 0.0036580483
        %v2576 = vmul.f32 %v2571, %v2575
        %v2577 = vadd.f32 %v2576, 0.05243302
        %v2578 = vmul.f32 %v2571, %v2577
        %v2579 = vadd.f32 %v2578, 0.18741608
        %v2580 = vmul.f32 %v2571, %v2579
        %v2581 = vadd.f32 %v2580, 1.1283791
        %v2582 = vmul.f32 %v2529, %v2581
        %v2583 = vmul.f32 %v2571, 3.8918573e-05
        %v2584 = vadd.f32 %v2583, 0.001143296
        %v2585 = vmul.f32 %v2571, %v2584
        %v2586 = vadd.f32 %v2585, 0.014752088
        %v2587 = vmul.f32 %v2571, %v2586
        %v2588 = vadd.f32 %v2587, 0.112945676
        %v2589 = vmul.f32 %v2571, %v2588
        %v2590 = vadd.f32 %v2589, 0.4994258
        %v2591 = vmul.f32 %v2571, %v2590
        %v2592 = vadd.f32 %v2591, 1.0
        %v2593 = vrcp.pop %v2592
        %v2594 = vmul.f32 %v2592, %v2593
        %v2595 = vsub.f32 1.0, %v2594
        %v2596 = vmul.f32 %v2593, %v2595
        %v2597 = vadd.f32 %v2593, %v2596
        %vm2598 = vweird.f32 %v2592
        %vm2599 = vweird.f32 %v2593
        %vm2600 = vmor %vm2598, %vm2599
        %v2601 = vsel %vm2600, %v2593, %v2597
        %v2602 = vand.u32 2147483647, %v2592
        %vm2603 = vcmp.eq.f32.partialorder %v2602, 8.507059e+37
        %v2604 = vand.u32 %v2592, 2147483648
        %v2605 = vor.u32 1.1754944e-38, %v2604
        %v2606 = vsel %vm2603, %v2605, %v2601
        %v2607 = vmul.f32 %v2582, %v2606
        %v2608 = vmin.f32 %v2607, 1.0
        %v2609 = vmax.f32 %v2608, -1.0
        %v2610 = vadd.f32 %v2569, 1.0
        %v2611 = vadd.f32 %v2609, 1.0
        %v2612 = vmul.f32 %v2526, %v2610
        %v2613 = vmul.f32 %v2527, %v2611
        %s2614 = scalar_lea.vmem %s12, 128
        %v2615 = vld [vmem:[%s2614] sm:$0xff]
        %v2616 = vld [vmem:[%s2614 + $0x8] sm:$0xff]
        %v2617 = vld [vmem:[%s2614 + $0x10] sm:$0xff]
        %v2618 = vld [vmem:[%s2614 + $0x18] sm:$0xff]
        %v2619 = vld [vmem:[%s2614 + $0x20] sm:$0xff]
        %v2620 = vld [vmem:[%s2614 + $0x28] sm:$0xff]
        %v2621 = vld [vmem:[%s2614 + $0x30] sm:$0xff]
        %v2622 = vld [vmem:[%s2614 + $0x38] sm:$0xff]
        %v2623 = vld [vmem:[%s2614 + $0x40] sm:$0xff]
        %v2624 = vld [vmem:[%s2614 + $0x48] sm:$0xff]
        %v2625 = vld [vmem:[%s2614 + $0x50] sm:$0xff]
        %v2626 = vld [vmem:[%s2614 + $0x58] sm:$0xff]
        %v2627 = vld [vmem:[%s2614 + $0x60] sm:$0xff]
        %v2628 = vld [vmem:[%s2614 + $0x68] sm:$0xff]
        %v2629 = vld [vmem:[%s2614 + $0x70] sm:$0xff]
        %v2630 = vld [vmem:[%s2614 + $0x78] sm:$0xff]
        %2631 = vmatpush.msra.mxu0 %v2630
        %2632 = vmatpush.msra.mxu0 %v2629
        %2633 = vmatpush.msra.mxu0 %v2628
        %2634 = vmatpush.msra.mxu0 %v2627
        %2635 = vmatpush.msra.mxu0 %v2626
        %2636 = vmatpush.msra.mxu0 %v2625
        %2637 = vmatpush.msra.mxu0 %v2624
        %2638 = vmatpush.msra.mxu0 %v2623
        %2639 = vmatpush.msra.mxu0 %v2622
        %2640 = vmatpush.msra.mxu0 %v2621
        %2641 = vmatpush.msra.mxu0 %v2620
        %2642 = vmatpush.msra.mxu0 %v2619
        %2643 = vmatpush.msra.mxu0 %v2618
        %2644 = vmatpush.msra.mxu0 %v2617
        %2645 = vmatpush.msra.mxu0 %v2616
        %2646 = vmatpush.msra.mxu0 %v2615
        %2647 = vmatmul.f32.gmra.mxu0 %v2612
        %v2648 = vpop.f32.mrf.mxu0
        %v2649 = vadd.f32 0.0, %v2648
        %2650 = vmatmul.f32.gmra.mxu0 %v2613
        %v2651 = vpop.f32.mrf.mxu0
        %v2652 = vadd.f32 0.0, %v2651
        %2653 = vdwg.mxu0
        %v2654 = vadd.f32 %v2432, %v2649
        %v2655 = vadd.f32 %v2433, %v2652
        %v2656 = vld [vmem:[%s13] sm:$0x1]
        %v2657 = vld [vmem:[%s14] sm:$0x1]
        %v2658 = vsel %vm501, %v2654, 0.0
        %2659 = vadd.xlane.f32.xlu0 %v2658
        %v2660 = vpop.xlane.xlu0 %2659
        %v2661 = vsel %vm501, %v2655, 0.0
        %2662 = vadd.xlane.f32.xlu0 %v2661
        %v2663 = vpop.xlane.xlu0 %2662
        %v2664 = vmul.f32 %v2660, %v514
        %v2665 = vmul.f32 %v2663, %v514
        %v2666 = vsub.f32 %v2654, %v2664
        %v2667 = vsub.f32 %v2655, %v2665
        %v2668 = vmul.f32 %v2666, %v2666
        %v2669 = vmul.f32 %v2667, %v2667
        %v2670 = vsel %vm501, %v2668, 0.0
        %2671 = vadd.xlane.f32.xlu0 %v2670
        %v2672 = vpop.xlane.xlu0 %2671
        %v2673 = vsel %vm501, %v2669, 0.0
        %2674 = vadd.xlane.f32.xlu0 %v2673
        %v2675 = vpop.xlane.xlu0 %2674
        %v2676 = vmul.f32 %v2672, %v514
        %v2677 = vmul.f32 %v2675, %v514
        %v2678 = vadd.f32 %v2676, 1e-05
        %v2679 = vadd.f32 %v2677, 1e-05
        %v2680 = vrsqrt.pop %v2678
        %v2681 = vmul.f32 %v2680, %v2678
        %v2682 = vmul.f32 %v2681, %v2680
        %v2683 = vmul.f32 0.5, %v2682
        %v2684 = vsub.f32 1.5, %v2683
        %v2685 = vmul.f32 %v2680, %v2684
        %vm2686 = vweird.f32 %v2678
        %vm2687 = vweird.f32 %v2680
        %vm2688 = vmor %vm2686, %vm2687
        %v2689 = vsel %vm2688, %v2680, %v2685
        %v2690 = vrsqrt.pop %v2679
        %v2691 = vmul.f32 %v2690, %v2679
        %v2692 = vmul.f32 %v2691, %v2690
        %v2693 = vmul.f32 0.5, %v2692
        %v2694 = vsub.f32 1.5, %v2693
        %v2695 = vmul.f32 %v2690, %v2694
        %vm2696 = vweird.f32 %v2679
        %vm2697 = vweird.f32 %v2690
        %vm2698 = vmor %vm2696, %vm2697
        %v2699 = vsel %vm2698, %v2690, %v2695
        %v2700 = vmul.f32 %v2666, %v2689
        %v2701 = vmul.f32 %v2667, %v2699
        %v2703 = vperm.slane %v2656, 0
        %v2705 = vmul.f32 %v2700, %v2703
        %v2706 = vmul.f32 %v2701, %v2703
        %v2708 = vperm.slane %v2657, 0
        %v2710 = vadd.f32 %v2705, %v2708
        %v2711 = vadd.f32 %v2706, %v2708
        %2712 = vst.msk [vmem:[%s488] sm:$0xff] %vm501, %v2710
        %2713 = vst.msk [vmem:[%s488 + $0x8] sm:$0xff] %vm501, %v2711
        %s2714 = sand.u32 %s357, 1
        %s2715 = scalar_lea.sflag [#allocation3], %s2714
        %s2716 = sand.u32 %s357, 1
        %s2717 = smul.addr %s2716, 16
        %s2718 = scalar_lea.vmem [#allocation2], %s2717
        // Predicated region
        $region81: #{tpu_custom_call.1} parent=79 // pred_check
          %p2719 = pneg %p367
        $region82: #{tpu_custom_call.1} parent=79 // pred_check_branch
          %2721 = sbr.rel (%p2719) target = $region84
        $region83: #{tpu_custom_call.1} parent=79 // pred_region
          %s2722 = smul.u32 2, %s29
          %2724 = vsyncadd %s2715, 0
          %s2725 = smul.addr %s2722, 8
          %s2726 = scalar_lea.hbm %s15, %s2725
          %s2727 = sshll.u32 %s2718, 4
          %s2728 = int_to_ptr.vmem [resolvable:$true] %s2727
          %s2729 = sshll.u32 %s2726, 4
          %s2730 = int_to_ptr.hbm [resolvable:$true] %s2729
          %2735 = dma.vmem_to_hbm [thread:$0]  %s2728, 256, %s2730, %s2715, 128, 128, 8
        $region84: #{tpu_custom_call.1} parent=79 // pred_fallthru
          _
      $region80: #{tpu_custom_call.1} parent=5 // pred_fallthru
        _
      %p2736 = scmp.le.s32.totalorder 2, %s24
      // Predicated region
      $region85: #{tpu_custom_call.1} parent=5 // pred_check
        %p2737 = pneg %p2736
      $region86: #{tpu_custom_call.1} parent=5 // pred_check_branch
        %2739 = sbr.rel (%p2737) target = $region88
      $region87: #{tpu_custom_call.1} parent=5 // pred_region
        %s2740 = ssub.s32 %s24, 2
        // Predicated region
        $region89: #{tpu_custom_call.1} parent=87 // pred_check
          %p2741 = pneg %p373
        $region90: #{tpu_custom_call.1} parent=87 // pred_check_branch
          %2743 = sbr.rel (%p2741) target = $region92
        $region91: #{tpu_custom_call.1} parent=87 // pred_region
          %s2744 = sand.u32 %s358, 1
          %s2745 = scalar_lea.sflag [#allocation3], %s2744
          %s2746 = sand.u32 %s358, 1
          %s2747 = smul.addr %s2746, 16
          %s2748 = scalar_lea.vmem [#allocation2], %s2747
          %2750 = dma.done %s2745, 256
        $region92: #{tpu_custom_call.1} parent=87 // pred_fallthru
          _
      $region88: #{tpu_custom_call.1} parent=5 // pred_fallthru
        _
    $region6: #{tpu_custom_call.1} parent=1 // loop_footer
      %s28 = sadd.s32 1, %s24
    $region7: #{tpu_custom_call.1} parent=1 // loop_footer_branch
      %23 = sbr.rel target = $region3
    $region8: #{tpu_custom_call.1} parent=1 // loop_exit
      _
    %2751 = vsyncpa [#allocation3], 1
    %s2752 = scalar_lea.sflag [#allocation3], 1
    %2753 = vsyncpa %s2752, 1

</llo_original>
